<compile_context>
chip_gen: v7x
topology: tpu7x:2x2x1
jax: 0.10.0
libtpu: 0.0.40
codegen_flags: <defaults>
</compile_context>

<pallas_src>
import functools

import jax
import jax.numpy as jnp
from jax.experimental import pallas as pl
from jax.experimental.pallas import tpu as pltpu


def _round_up(x, m):
    return ((x + m - 1) // m) * m


def _patch_embed_kernel(x_ref, w_ref, b_ref, o_ref, *, compute_dtype):
    """One (tm, tn) output tile; whole K (D_in) is resident in the blocks.

    x_ref: (tm, D_in)   w_ref: (D_in, tn)   b_ref: (1, tn) f32
    o_ref: (tm, tn)
    """
    x = x_ref[...]
    if compute_dtype is not None:
        # In-kernel cast (e.g. f32 -> bf16): avoids an extra HBM pass that a
        # wrapper-side astype would cost on the activation.
        x = x.astype(compute_dtype)
    acc = jnp.dot(x, w_ref[...], preferred_element_type=jnp.float32)
    # Bias folded directly into the single lane-dense store.
    o_ref[...] = (acc + b_ref[...]).astype(o_ref.dtype)


def slide_patch_embed(
    x,
    weight,
    bias,
    *,
    tm=512,                 # row tile; multiple of 16; sweep 256..1024
    tn=None,                # output-feature tile; default = whole D_out (<=1024)
    compute_dtype=None,     # jnp.bfloat16 recommended on v6e/v7x; accum stays f32
    use_pallas=None,        # None -> auto heuristic; True/False to force
    vmem_cap_bytes=48 * 1024 * 1024,   # safe for v7x's 64 MiB VMEM per TC
):
    """x: (B, N, D_in); weight: (D_in, D_out); bias: (D_out,) -> (B, N, D_out)."""
    B, N, D_in = x.shape
    D_out = weight.shape[1]
    M = B * N
    out_dtype = x.dtype

    cd = jnp.dtype(compute_dtype) if compute_dtype is not None else jnp.dtype(x.dtype)

    def xla_fallback():
        acc = jnp.dot(x.astype(cd), weight.astype(cd),
                      preferred_element_type=jnp.float32)
        return (acc + bias.astype(jnp.float32)).astype(out_dtype)

    if use_pallas is None:
        # Tiny problems: per-grid-step (~0.35us) + launch overhead dwarfs the matmul.
        use_pallas = (M >= 64 and D_in >= 128 and D_out >= 128)
    if not use_pallas:
        return xla_fallback()

    sub = 16  # row-tile granularity valid for both f32 (8) and bf16 (16) packing

    # ---- N (D_out) tiling: lane-dense, weight/bias padded only if needed. ----
    N_pad = _round_up(D_out, 128)
    w = weight.astype(cd)
    b2d = bias.reshape(1, D_out).astype(jnp.float32)
    if N_pad != D_out:
        w = jnp.pad(w, ((0, 0), (0, N_pad - D_out)))
        b2d = jnp.pad(b2d, ((0, 0), (0, N_pad - D_out)))

    if tn is None:
        tn = min(N_pad, 1024)
    tn = _round_up(min(max(tn, 128), N_pad), 128)
    while N_pad % tn != 0:      # pick a 128-multiple divisor of N_pad
        tn -= 128
    n_tiles = N_pad // tn

    # ---- M tiling: no padding; edge tile is clipped on writeback. ----
    tm = max(sub, _round_up(min(tm, _round_up(M, sub)), sub))
    # v7x megacore: guarantee >= 2 parallel grid steps when there is enough work.
    if n_tiles * pl.cdiv(M, tm) < 2 and M > sub:
        tm = max(sub, _round_up(pl.cdiv(M, 2), sub))

    # ---- VMEM budget (double-buffered tiles + resident weight). ----
    x_isz = jnp.dtype(x.dtype).itemsize
    w_isz = cd.itemsize
    o_isz = jnp.dtype(out_dtype).itemsize

    def working_set(tm_):
        return (2 * tm_ * D_in * x_isz          # x tiles (double-buffered)
                + 2 * D_in * tn * w_isz         # weight (buffers allocated 2x)
                + 2 * tn * 4                    # bias
                + 2 * tm_ * tn * o_isz)         # output tiles

    headroom = 8 * 1024 * 1024
    while working_set(tm) > vmem_cap_bytes - headroom and tm > sub:
        tm = max(sub, _round_up(tm // 2, sub))
    if working_set(tm) > vmem_cap_bytes - headroom:
        # TODO(synk): very large D_in/D_out would need a K-tiled accumulator
        # path; route to XLA instead of over-committing VMEM.
        return xla_fallback()

    m_tiles = pl.cdiv(M, tm)
    grid = (m_tiles, n_tiles)
    vmem_limit = int(min(vmem_cap_bytes,
                         max(32 * 1024 * 1024, working_set(tm) + (4 << 20))))

    x2d = x.reshape(M, D_in)   # free metadata reshape; no pad, no cast

    kernel = functools.partial(
        _patch_embed_kernel,
        compute_dtype=(cd if cd != x2d.dtype else None),
    )

    out2d = pl.pallas_call(
        kernel,
        out_shape=jax.ShapeDtypeStruct((M, N_pad), out_dtype),
        grid_spec=pltpu.PrefetchScalarGridSpec(
            num_scalar_prefetch=0,
            grid=grid,
            in_specs=[
                # x row tile, whole K resident (block == full D_in dim).
                pl.BlockSpec((tm, D_in), lambda i, j: (i, 0)),
                # weight: constant block across the M sweep -> fetched once
                # per j (once total when n_tiles == 1); Pallas skips the
                # re-DMA for an unchanged block index.
                pl.BlockSpec((D_in, tn), lambda i, j: (0, j)),
                pl.BlockSpec((1, tn), lambda i, j: (0, j)),
            ],
            out_specs=pl.BlockSpec((tm, tn), lambda i, j: (i, j)),
        ),
        compiler_params=pltpu.CompilerParams(
            dimension_semantics=("parallel", "parallel"),
            vmem_limit_bytes=vmem_limit,
        ),
    )(x2d, w, b2d)

    if N_pad != D_out:
        out2d = out2d[:, :D_out]
    return out2d.reshape(B, N, D_out)


if __name__ == "__main__":
    key = jax.random.PRNGKey(0)
    keys = jax.random.split(key, 9)

    # --- Case 1: toy shapes -> auto-routed to plain XLA (kernel not worth it). ---
    B1, N1, Din1, Dout1 = 2, 8, 64, 32
    x1 = jax.random.normal(keys[0], (B1, N1, Din1), dtype=jnp.float32)
    w1 = jax.random.normal(keys[1], (Din1, Dout1), dtype=jnp.float32) * 0.02
    b1 = jax.random.normal(keys[2], (Dout1,), dtype=jnp.float32) * 0.02
    out1 = jax.block_until_ready(slide_patch_embed(x1, w1, b1))
    ref1 = x1 @ w1 + b1
    assert out1.shape == (B1, N1, Dout1)
    assert jnp.allclose(out1, ref1, atol=1e-5, rtol=1e-5), "tiny-shape XLA path mismatch"

    # --- Case 2: realistic patch-embed shapes -> Pallas kernel path (f32). ---
    # M = 400 is not a tile multiple -> exercises the clipped edge row tile and
    # the >=2-parallel-step split (tm shrinks 512 -> 208, grid = (2, 1)).
    # Whole 768x768 weight is VMEM-resident; no K grid axis / accumulator.
    B2, N2, Din2, Dout2 = 2, 200, 768, 768
    x2 = jax.random.normal(keys[3], (B2, N2, Din2), dtype=jnp.float32)
    w2 = jax.random.normal(keys[4], (Din2, Dout2), dtype=jnp.float32) * 0.02
    b2 = jax.random.normal(keys[5], (Dout2,), dtype=jnp.float32) * 0.02
    out2 = jax.block_until_ready(slide_patch_embed(x2, w2, b2, use_pallas=True))
    ref2 = jnp.dot(x2, w2, precision=jax.lax.Precision.HIGHEST) + b2
    assert out2.shape == (B2, N2, Dout2)
    assert jnp.allclose(out2, ref2, atol=5e-2, rtol=5e-2), "Pallas f32 path mismatch"
    rel_f32 = jnp.linalg.norm(out2 - ref2) / jnp.linalg.norm(ref2)
    assert float(rel_f32) < 1e-2, f"Pallas f32 path rel_err={float(rel_f32)}"

    # --- Case 3: bf16 compute (v6e/v7x-friendly): x cast in-kernel, f32 accum. ---
    out3 = jax.block_until_ready(
        slide_patch_embed(x2, w2, b2, compute_dtype=jnp.bfloat16, use_pallas=True)
    )
    rel_bf16 = jnp.linalg.norm(out3.astype(jnp.float32) - ref2) / jnp.linalg.norm(ref2)
    assert float(rel_bf16) < 3e-2, f"Pallas bf16 path rel_err={float(rel_bf16)}"

    # --- Case 4: module-default in_chans=1536 -> embed_dim=768 projection. ---
    B4, N4, Din4, Dout4 = 2, 160, 1536, 768
    x4 = jax.random.normal(keys[6], (B4, N4, Din4), dtype=jnp.float32)
    w4 = jax.random.normal(keys[7], (Din4, Dout4), dtype=jnp.float32) * 0.02
    b4 = jax.random.normal(keys[8], (Dout4,), dtype=jnp.float32) * 0.02
    out4 = jax.block_until_ready(slide_patch_embed(x4, w4, b4, use_pallas=True))
    ref4 = jnp.dot(x4, w4, precision=jax.lax.Precision.HIGHEST) + b4
    assert out4.shape == (B4, N4, Dout4)
    rel4 = jnp.linalg.norm(out4 - ref4) / jnp.linalg.norm(ref4)
    assert float(rel4) < 1e-2, f"Pallas f32 (Din=1536) rel_err={float(rel4)}"

    print("KERNEL_OK")
</pallas_src>

<mosaic_0001>
module attributes {stable_mosaic.version = 11 : i64} {
  func.func @_patch_embed_kernel(%arg0: i32, %arg1: i32, %arg2: memref<208x768xf32, #tpu.memory_space<vmem>>, %arg3: memref<768x768xf32, #tpu.memory_space<vmem>>, %arg4: memref<1x768xf32, #tpu.memory_space<vmem>>, %arg5: memref<208x768xf32, #tpu.memory_space<vmem>>) attributes {dimension_semantics = [#tpu.dimension_semantics<parallel>, #tpu.dimension_semantics<parallel>], iteration_bounds = array<i64: 2, 1>, scalar_prefetch = 0 : i64, scratch_operands = 0 : i64, tpu.core_type = #tpu.core_type<tc>, window_params = [{transform_indices = @transform_0, window_bounds = array<i64: 208, 768>}, {transform_indices = @transform_1, window_bounds = array<i64: 768, 768>}, {transform_indices = @transform_2, window_bounds = array<i64: 1, 768>}, {transform_indices = @transform_3, window_bounds = array<i64: 208, 768>}]} {
    %c0 = arith.constant 0 : index
    %c0_0 = arith.constant 0 : index
    %0 = vector.load %arg2[%c0, %c0_0] : memref<208x768xf32, #tpu.memory_space<vmem>>, vector<208x768xf32>
    %c0_1 = arith.constant 0 : index
    %c0_2 = arith.constant 0 : index
    %1 = vector.load %arg3[%c0_1, %c0_2] : memref<768x768xf32, #tpu.memory_space<vmem>>, vector<768x768xf32>
    %cst = arith.constant dense<0.000000e+00> : vector<208x768xf32>
    %2 = tpu.matmul %0, %1, %cst {dimension_numbers = #tpu.dot_dimension_numbers<[1], [0], [0], [1], [0, 0, 1, 1], [], []>} : vector<208x768xf32>, vector<768x768xf32>, vector<208x768xf32> -> vector<208x768xf32>
    %c0_3 = arith.constant 0 : index
    %c0_4 = arith.constant 0 : index
    %3 = vector.load %arg4[%c0_3, %c0_4] : memref<1x768xf32, #tpu.memory_space<vmem>>, vector<1x768xf32>
    %4 = vector.broadcast %3 : vector<1x768xf32> to vector<208x768xf32>
    %5 = arith.addf %2, %4 : vector<208x768xf32>
    %c0_5 = arith.constant 0 : index
    %c0_6 = arith.constant 0 : index
    %6 = vector.load %arg5[%c0_5, %c0_6] : memref<208x768xf32, #tpu.memory_space<vmem>>, vector<208x768xf32>
    tpu.vector_store %arg5[%c0_5, %c0_6], %5 {strides = array<i32>} : memref<208x768xf32, #tpu.memory_space<vmem>>, vector<208x768xf32>,
    return
  }
  func.func @transform_0(%arg0: i32, %arg1: i32) -> (i32, i32) {
    %c0_i32 = arith.constant 0 : i32
    %c0_i32_0 = arith.constant 0 : i32
    return %arg0, %c0_i32 : i32, i32
  }
  func.func @transform_1(%arg0: i32, %arg1: i32) -> (i32, i32) {
    %c0_i32 = arith.constant 0 : i32
    %c0_i32_0 = arith.constant 0 : i32
    return %c0_i32, %arg1 : i32, i32
  }
  func.func @transform_2(%arg0: i32, %arg1: i32) -> (i32, i32) {
    %c0_i32 = arith.constant 0 : i32
    %c0_i32_0 = arith.constant 0 : i32
    return %c0_i32, %arg1 : i32, i32
  }
  func.func @transform_3(%arg0: i32, %arg1: i32) -> (i32, i32) {
    %c0_i32 = arith.constant 0 : i32
    return %arg0, %arg1 : i32, i32
  }
}

</mosaic_0001>

<llo_original>
// kernel: tpu_custom_call.1
$region0: #{tpu_custom_call.1}
  #allocation0 [shape = 'u32[]', space=smem, size = 0x4, offset = 0x4, fixed_abs, tag = 'smem constant byte address 0x4 - core index']
  #allocation1 [shape = 'u32[144,128]{1,0:T(1,128)}', space=vmem, size = 0x12000, scoped, tag = 'internal scratch']
  %s0 = inlined_call_operand.hbm [shape: f32[400,768], index: 0, kind: input, shape index: {}]
  %s1 = inlined_call_operand.hbm [shape: f32[768,768], index: 1, kind: input, shape index: {}]
  %s2 = inlined_call_operand.hbm [shape: f32[1,768], index: 2, kind: input, shape index: {}]
  %s3 = inlined_call_operand.hbm [shape: f32[400,768], index: 3, kind: output, shape index: {}]
  %s4 = sld [smem:[#allocation0]]
  $region57: #{tpu_custom_call.1} parent=0
    _
  %s6 = ssub.s32 1, %s4
  %s7 = scalar_select 0, %s6, %s4
  $region1: #{tpu_custom_call.1} parent=0
    #allocation2 [shape = 'u8[1277952]{0}', space=vmem, size = 0x138000, scoped, tag = 'input window, operand 0']
    #allocation3 [shape = 's32[2]{0}', space=sflag, size = 0x8, scoped, tag = 'scoped memory for tpu_custom_call.1']
    #allocation4 [shape = 's32[2]{0}', space=sflag, size = 0x8, scoped, tag = 'scoped memory for tpu_custom_call.1']
    #allocation5 [shape = 'u8[2359296]{0}', space=vmem, size = 0x240000, scoped, tag = 'input window, operand 1, single buffered']
    #allocation6 [shape = 's32[1]{0}', space=sflag, size = 0x4, scoped, tag = 'scoped memory for tpu_custom_call.1']
    #allocation7 [shape = 'u8[3072]{0}', space=vmem, size = 0xc00, scoped, tag = 'input window, operand 2, single buffered']
    #allocation8 [shape = 'u8[1277952]{0}', space=vmem, size = 0x138000, scoped, tag = 'output window, operand 0']
    %8 = vsyncpa [#allocation3], 0
    %s9 = scalar_lea.sflag [#allocation3], 1
    %10 = vsyncpa %s9, 0
    %11 = vsyncpa [#allocation6], 0
    %12 = vsyncpa [#allocation4], 0
    %s13 = scalar_lea.sflag [#allocation4], 1
    %14 = vsyncpa %s13, 0
    loop: start=0, step=1, limit=4
    $region2: #{tpu_custom_call.1} parent=1 // loop_pre_header
      _
    $region3: #{tpu_custom_call.1} parent=1 // loop_header
      %s16 = sphi 0, %s20
      %p17 = scmp.ge.s32.totalorder %s16, 4
      %s23 = sphi 0, %s35
      %s24 = sphi 0, %s31
      %s25 = sphi 0, %s23
      %s26 = sphi 0, %s24
      %s27 = sphi 0, %s25
      %s28 = sphi 0, %s26
      %s38 = sphi 0, %s40
      %s41 = sphi 0, %s38
      %s42 = sphi 0, %s41
      %s58 = sphi 0, %s42
      %s64 = sphi 0, %s66
      %s67 = sphi 0, %s64
      %s68 = sphi 0, %s67
      %s84 = sphi 0, %s68
      %s90 = sphi 0, %s92
      %s93 = sphi 0, %s90
      %s94 = sphi 0, %s93
      %s110 = sphi 0, %s94
      %s118 = sphi 0, %s120
      %s121 = sphi 0, %s118
      %s122 = sphi 0, %s121
      %s138 = sphi 0, %s122
    $region4: #{tpu_custom_call.1} parent=1 // loop_header_branch
      %19 = sbr.rel (%p17) target = $region8
    $region5: #{tpu_custom_call.1} parent=1 // loop_body
      %s21 = ssub.s32 %s16, 1
      %s22 = ssub.s32 %s16, 2
      %s29 = sadd.s32 1, %s24
      %p30 = scmp.ge.s32.totalorder %s29, 1
      %s31 = scalar_select %p30, 0, %s29
      %s32 = sadd.s32 1, %s23
      %s33 = scalar_select %p30, %s32, %s23
      %p34 = scmp.ge.s32.totalorder %s33, 2
      %s35 = scalar_select %p34, 0, %s33
      %s36 = ssub.s32 %s23, %s35
      %p37 = scmp.eq.s32.totalorder %s36, 0
      %s39 = sadd.s32 %s38, 1
      %s40 = scalar_select %p37, %s38, %s39
      %p43 = pneg %p37
      %p44 = scmp.eq.s32.totalorder %s16, 1
      %p45 = por %p43, %p44
      %p46 = scmp.ne.s32.totalorder %s38, %s41
      %p47 = scmp.eq.s32.totalorder %s16, 0
      %p48 = por %p46, %p47
      %p49 = scmp.ne.s32.totalorder %s38, %s41
      %p50 = scmp.eq.s32.totalorder %s21, 1
      %p51 = por %p49, %p50
      %p52 = scmp.ne.s32.totalorder %s41, %s42
      %p53 = scmp.eq.s32.totalorder %s21, 0
      %p54 = por %p52, %p53
      %p55 = scmp.ne.s32.totalorder %s41, %s42
      %p56 = scmp.eq.s32.totalorder %s22, 1
      %p57 = por %p55, %p56
      %p59 = scmp.ne.s32.totalorder %s42, %s58
      %p60 = scmp.eq.s32.totalorder %s22, 0
      %p61 = por %p59, %p60
      %s62 = ssub.s32 %s24, %s31
      %p63 = scmp.eq.s32.totalorder %s62, 0
      %s65 = sadd.s32 %s64, 1
      %s66 = scalar_select %p63, %s64, %s65
      %p69 = pneg %p63
      %p70 = scmp.eq.s32.totalorder %s16, 1
      %p71 = por %p69, %p70
      %p72 = scmp.ne.s32.totalorder %s64, %s67
      %p73 = scmp.eq.s32.totalorder %s16, 0
      %p74 = por %p72, %p73
      %p75 = scmp.ne.s32.totalorder %s64, %s67
      %p76 = scmp.eq.s32.totalorder %s21, 1
      %p77 = por %p75, %p76
      %p78 = scmp.ne.s32.totalorder %s67, %s68
      %p79 = scmp.eq.s32.totalorder %s21, 0
      %p80 = por %p78, %p79
      %p81 = scmp.ne.s32.totalorder %s67, %s68
      %p82 = scmp.eq.s32.totalorder %s22, 1
      %p83 = por %p81, %p82
      %p85 = scmp.ne.s32.totalorder %s68, %s84
      %p86 = scmp.eq.s32.totalorder %s22, 0
      %p87 = por %p85, %p86
      %s88 = ssub.s32 %s24, %s31
      %p89 = scmp.eq.s32.totalorder %s88, 0
      %s91 = sadd.s32 %s90, 1
      %s92 = scalar_select %p89, %s90, %s91
      %p95 = pneg %p89
      %p96 = scmp.eq.s32.totalorder %s16, 1
      %p97 = por %p95, %p96
      %p98 = scmp.ne.s32.totalorder %s90, %s93
      %p99 = scmp.eq.s32.totalorder %s16, 0
      %p100 = por %p98, %p99
      %p101 = scmp.ne.s32.totalorder %s90, %s93
      %p102 = scmp.eq.s32.totalorder %s21, 1
      %p103 = por %p101, %p102
      %p104 = scmp.ne.s32.totalorder %s93, %s94
      %p105 = scmp.eq.s32.totalorder %s21, 0
      %p106 = por %p104, %p105
      %p107 = scmp.ne.s32.totalorder %s93, %s94
      %p108 = scmp.eq.s32.totalorder %s22, 1
      %p109 = por %p107, %p108
      %p111 = scmp.ne.s32.totalorder %s94, %s110
      %p112 = scmp.eq.s32.totalorder %s22, 0
      %p113 = por %p111, %p112
      %s114 = ssub.s32 %s23, %s35
      %s115 = ssub.s32 %s24, %s31
      %s116 = sor.u32 %s114, %s115
      %p117 = scmp.eq.s32.totalorder %s116, 0
      %s119 = sadd.s32 %s118, 1
      %s120 = scalar_select %p117, %s118, %s119
      %p123 = pneg %p117
      %p124 = scmp.eq.s32.totalorder %s16, 1
      %p125 = por %p123, %p124
      %p126 = scmp.ne.s32.totalorder %s118, %s121
      %p127 = scmp.eq.s32.totalorder %s16, 0
      %p128 = por %p126, %p127
      %p129 = scmp.ne.s32.totalorder %s118, %s121
      %p130 = scmp.eq.s32.totalorder %s21, 1
      %p131 = por %p129, %p130
      %p132 = scmp.ne.s32.totalorder %s121, %s122
      %p133 = scmp.eq.s32.totalorder %s21, 0
      %p134 = por %p132, %p133
      %p135 = scmp.ne.s32.totalorder %s121, %s122
      %p136 = scmp.eq.s32.totalorder %s22, 1
      %p137 = por %p135, %p136
      %p139 = scmp.ne.s32.totalorder %s122, %s138
      %p140 = scmp.eq.s32.totalorder %s22, 0
      %p141 = por %p139, %p140
      %p142 = scmp.le.s32.totalorder 1, %s16
      %p143 = scmp.lt.s32.totalorder %s16, 3
      %p144 = pnand %p142, %p143
      %p145 = pneg %p144
      // Predicated region
      $region9: #{tpu_custom_call.1} parent=5 // pred_check
        _
      $region10: #{tpu_custom_call.1} parent=5 // pred_check_branch
        %147 = sbr.rel (%p144) target = $region12
      $region11: #{tpu_custom_call.1} parent=5 // pred_region
        %s148 = ssub.s32 %s16, 1
        // Predicated region
        $region13: #{tpu_custom_call.1} parent=11 // pred_check
          %p149 = pneg %p80
        $region14: #{tpu_custom_call.1} parent=11 // pred_check_branch
          %151 = sbr.rel (%p149) target = $region16
        $region15: #{tpu_custom_call.1} parent=11 // pred_region
          %s152 = smul.u32 6, %s26
          %s154 = ssub.s32 73728, 73728
          %155 = vsyncadd [#allocation6], %s154
          %s156 = smul.addr %s152, 128
          %s157 = scalar_lea.hbm %s1, %s156
          %s158 = sshll.u32 [#allocation5], 4
          %s159 = int_to_ptr.vmem [resolvable:$true] %s158
          %164 = dma.hbm_to_vmem [thread:$0]  %s157, 73728, %s159, [#allocation6], 768, 768, 48
        $region16: #{tpu_custom_call.1} parent=11 // pred_fallthru
          _
        // Predicated region
        $region17: #{tpu_custom_call.1} parent=11 // pred_check
          %p165 = pneg %p106
        $region18: #{tpu_custom_call.1} parent=11 // pred_check_branch
          %167 = sbr.rel (%p165) target = $region20
        $region19: #{tpu_custom_call.1} parent=11 // pred_region
          %s168 = smul.u32 6, %s26
          %s170 = ssub.s32 96, 96
          %171 = vsyncadd [#allocation6], %s170
          %s172 = smul.addr %s168, 16
          %s173 = scalar_lea.hbm %s2, %s172
          %s175 = sshll.u32 [#allocation7], 4
          %s176 = int_to_ptr.vmem [resolvable:$true] %s175
          %178 = dma.hbm_to_vmem [thread:$0]  %s173, 96, %s176, [#allocation6]
        $region20: #{tpu_custom_call.1} parent=11 // pred_fallthru
          _
      $region12: #{tpu_custom_call.1} parent=5 // pred_fallthru
        _
      %p179 = scmp.lt.s32.totalorder %s16, 2
      // Predicated region
      $region21: #{tpu_custom_call.1} parent=5 // pred_check
        %p180 = pneg %p179
      $region22: #{tpu_custom_call.1} parent=5 // pred_check_branch
        %182 = sbr.rel (%p180) target = $region24
      $region23: #{tpu_custom_call.1} parent=5 // pred_region
        // Predicated region
        $region25: #{tpu_custom_call.1} parent=23 // pred_check
          %p183 = pneg %p48
        $region26: #{tpu_custom_call.1} parent=23 // pred_check_branch
          %185 = sbr.rel (%p183) target = $region28
        $region27: #{tpu_custom_call.1} parent=23 // pred_region
          %s186 = sand.u32 %s38, 1
          %s187 = scalar_lea.sflag [#allocation3], %s186
          %s188 = sand.u32 %s38, 1
          %s189 = smul.addr %s188, 1248
          %s190 = scalar_lea.vmem [#allocation2], %s189
          %s191 = smul.u32 26, %s23
          %s192 = ssub.s32 50, %s191
          %p193 = scmp.lt.s32.totalorder %s192, 26
          %s194 = scalar_select %p193, %s192, 26
          %s195 = smul.u32 128, %s194
          %s196 = smul.u32 %s195, 6
          %s198 = ssub.s32 19968, %s196
          %199 = vsyncadd %s187, %s198
          %p200 = scmp.ne.s32.totalorder 0, %s196
          %s201 = smul.addr %s191, 6
          %s202 = smul.addr %s201, 128
          %s203 = scalar_lea.hbm %s0, %s202
          %s204 = smul.u32 48, %s194
          %s205 = sshll.u32 %s190, 4
          %s206 = int_to_ptr.vmem [resolvable:$true] %s205
          %s207 = sshll.u32 %s204, 4
          %211 = dma.hbm_to_vmem [thread:$0]  (%p200), %s203, %s207, %s206, %s187, 768, 768, 48
        $region28: #{tpu_custom_call.1} parent=23 // pred_fallthru
          _
      $region24: #{tpu_custom_call.1} parent=5 // pred_fallthru
        _
      %p212 = scmp.le.s32.totalorder 1, %s16
      %p213 = scmp.lt.s32.totalorder %s16, 3
      %p214 = pnand %p212, %p213
      %p215 = pneg %p214
      // Predicated region
      $region29: #{tpu_custom_call.1} parent=5 // pred_check
        _
      $region30: #{tpu_custom_call.1} parent=5 // pred_check_branch
        %217 = sbr.rel (%p214) target = $region32
      $region31: #{tpu_custom_call.1} parent=5 // pred_region
        %s218 = ssub.s32 %s16, 1
        %s219 = sand.u32 %s41, 1
        %s220 = scalar_lea.sflag [#allocation3], %s219
        %s221 = sand.u32 %s41, 1
        %s222 = smul.addr %s221, 1248
        %s223 = scalar_lea.vmem [#allocation2], %s222
        // Predicated region
        $region33: #{tpu_custom_call.1} parent=31 // pred_check
          %p224 = pneg %p54
        $region34: #{tpu_custom_call.1} parent=31 // pred_check_branch
          %226 = sbr.rel (%p224) target = $region36
        $region35: #{tpu_custom_call.1} parent=31 // pred_region
          %227 = dma.done %s220, 19968
        $region36: #{tpu_custom_call.1} parent=31 // pred_fallthru
          _
        // Predicated region
        $region37: #{tpu_custom_call.1} parent=31 // pred_check
          %p228 = pneg %p80
        $region38: #{tpu_custom_call.1} parent=31 // pred_check_branch
          %230 = sbr.rel (%p228) target = $region40
        $region39: #{tpu_custom_call.1} parent=31 // pred_region
          %231 = dma.done [#allocation6], 73728
        $region40: #{tpu_custom_call.1} parent=31 // pred_fallthru
          _
        // Predicated region
        $region41: #{tpu_custom_call.1} parent=31 // pred_check
          %p232 = pneg %p106
        $region42: #{tpu_custom_call.1} parent=31 // pred_check_branch
          %234 = sbr.rel (%p232) target = $region44
        $region43: #{tpu_custom_call.1} parent=31 // pred_region
          %235 = dma.done [#allocation6], 96
        $region44: #{tpu_custom_call.1} parent=31 // pred_fallthru
          _
        %s236 = sand.u32 %s41, 1
        %s237 = scalar_lea.sflag [#allocation3], %s236
        %s238 = sand.u32 %s41, 1
        %s239 = smul.addr %s238, 1248
        %s240 = scalar_lea.vmem [#allocation2], %s239
        %p241 = pneg %p54
        %p242 = pneg %p51
        %p243 = pneg %p80
        %p244 = pneg %p77
        %p245 = pneg %p106
        %p246 = pneg %p103
        %p247 = pneg %p134
        %p248 = pneg %p131
        %s249 = sand.u32 %s121, 1
        %s250 = scalar_lea.sflag [#allocation4], %s249
        %s251 = sand.u32 %s121, 1
        %s252 = smul.addr %s251, 1248
        %s253 = scalar_lea.vmem [#allocation8], %s252
        %s254 = smul.u32 26, %s25
        %s255 = ssub.s32 50, %s254
        %p256 = scmp.lt.s32.totalorder %s255, 26
        %s257 = scalar_select %p256, %s255, 26
        %s258 = smul.u32 128, %s257
        %s259 = smul.u32 %s258, 6
        %s260 = smul.u32 6, %s26
        %s261 = smul.u32 6, %s26
        %s262 = smul.u32 26, %s25
        %s263 = smul.u32 6, %s26
        %s264 = ssub.s32 50, %s262
        %p265 = scmp.lt.s32.totalorder %s264, 26
        %s266 = scalar_select %p265, %s264, 26
        %s267 = smul.u32 128, %s266
        %s268 = smul.u32 %s267, 6
        %v269 = vld [vmem:[%s223] sm:$0xff]
        %v270 = vld [vmem:[%s223 + $0x8] sm:$0xff]
        %v271 = vld [vmem:[%s223 + $0x10] sm:$0xff]
        %v272 = vld [vmem:[%s223 + $0x18] sm:$0xff]
        %v273 = vld [vmem:[%s223 + $0x20] sm:$0xff]
        %v274 = vld [vmem:[%s223 + $0x28] sm:$0xff]
        %v275 = vld [vmem:[%s223 + $0x30] sm:$0xff]
        %v276 = vld [vmem:[%s223 + $0x38] sm:$0xff]
        %v277 = vld [vmem:[%s223 + $0x40] sm:$0xff]
        %v278 = vld [vmem:[%s223 + $0x48] sm:$0xff]
        %v279 = vld [vmem:[%s223 + $0x50] sm:$0xff]
        %v280 = vld [vmem:[%s223 + $0x58] sm:$0xff]
        %v281 = vld [vmem:[%s223 + $0x60] sm:$0xff]
        %v282 = vld [vmem:[%s223 + $0x68] sm:$0xff]
        %v283 = vld [vmem:[%s223 + $0x70] sm:$0xff]
        %v284 = vld [vmem:[%s223 + $0x78] sm:$0xff]
        %v285 = vld [vmem:[%s223 + $0x80] sm:$0xff]
        %v286 = vld [vmem:[%s223 + $0x88] sm:$0xff]
        %v287 = vld [vmem:[%s223 + $0x90] sm:$0xff]
        %v288 = vld [vmem:[%s223 + $0x98] sm:$0xff]
        %v289 = vld [vmem:[%s223 + $0xa0] sm:$0xff]
        %v290 = vld [vmem:[%s223 + $0xa8] sm:$0xff]
        %v291 = vld [vmem:[%s223 + $0xb0] sm:$0xff]
        %v292 = vld [vmem:[%s223 + $0xb8] sm:$0xff]
        %v293 = vld [vmem:[%s223 + $0xc0] sm:$0xff]
        %v294 = vld [vmem:[%s223 + $0xc8] sm:$0xff]
        %v295 = vld [vmem:[%s223 + $0xd0] sm:$0xff]
        %v296 = vld [vmem:[%s223 + $0xd8] sm:$0xff]
        %v297 = vld [vmem:[%s223 + $0xe0] sm:$0xff]
        %v298 = vld [vmem:[%s223 + $0xe8] sm:$0xff]
        %v299 = vld [vmem:[%s223 + $0xf0] sm:$0xff]
        %v300 = vld [vmem:[%s223 + $0xf8] sm:$0xff]
        %v301 = vld [vmem:[%s223 + $0x100] sm:$0xff]
        %v302 = vld [vmem:[%s223 + $0x108] sm:$0xff]
        %v303 = vld [vmem:[%s223 + $0x110] sm:$0xff]
        %v304 = vld [vmem:[%s223 + $0x118] sm:$0xff]
        %v305 = vld [vmem:[%s223 + $0x120] sm:$0xff]
        %v306 = vld [vmem:[%s223 + $0x128] sm:$0xff]
        %v307 = vld [vmem:[%s223 + $0x130] sm:$0xff]
        %v308 = vld [vmem:[%s223 + $0x138] sm:$0xff]
        %v309 = vld [vmem:[%s223 + $0x140] sm:$0xff]
        %v310 = vld [vmem:[%s223 + $0x148] sm:$0xff]
        %v311 = vld [vmem:[%s223 + $0x150] sm:$0xff]
        %v312 = vld [vmem:[%s223 + $0x158] sm:$0xff]
        %v313 = vld [vmem:[%s223 + $0x160] sm:$0xff]
        %v314 = vld [vmem:[%s223 + $0x168] sm:$0xff]
        %v315 = vld [vmem:[%s223 + $0x170] sm:$0xff]
        %v316 = vld [vmem:[%s223 + $0x178] sm:$0xff]
        %v317 = vld [vmem:[%s223 + $0x180] sm:$0xff]
        %v318 = vld [vmem:[%s223 + $0x188] sm:$0xff]
        %v319 = vld [vmem:[%s223 + $0x190] sm:$0xff]
        %v320 = vld [vmem:[%s223 + $0x198] sm:$0xff]
        %v321 = vld [vmem:[%s223 + $0x1a0] sm:$0xff]
        %v322 = vld [vmem:[%s223 + $0x1a8] sm:$0xff]
        %v323 = vld [vmem:[%s223 + $0x1b0] sm:$0xff]
        %v324 = vld [vmem:[%s223 + $0x1b8] sm:$0xff]
        %v325 = vld [vmem:[%s223 + $0x1c0] sm:$0xff]
        %v326 = vld [vmem:[%s223 + $0x1c8] sm:$0xff]
        %v327 = vld [vmem:[%s223 + $0x1d0] sm:$0xff]
        %v328 = vld [vmem:[%s223 + $0x1d8] sm:$0xff]
        %v329 = vld [vmem:[%s223 + $0x1e0] sm:$0xff]
        %v330 = vld [vmem:[%s223 + $0x1e8] sm:$0xff]
        %v331 = vld [vmem:[%s223 + $0x1f0] sm:$0xff]
        %v332 = vld [vmem:[%s223 + $0x1f8] sm:$0xff]
        %v333 = vld [vmem:[%s223 + $0x200] sm:$0xff]
        %v334 = vld [vmem:[%s223 + $0x208] sm:$0xff]
        %v335 = vld [vmem:[%s223 + $0x210] sm:$0xff]
        %v336 = vld [vmem:[%s223 + $0x218] sm:$0xff]
        %v337 = vld [vmem:[%s223 + $0x220] sm:$0xff]
        %v338 = vld [vmem:[%s223 + $0x228] sm:$0xff]
        %v339 = vld [vmem:[%s223 + $0x230] sm:$0xff]
        %v340 = vld [vmem:[%s223 + $0x238] sm:$0xff]
        %v341 = vld [vmem:[%s223 + $0x240] sm:$0xff]
        %v342 = vld [vmem:[%s223 + $0x248] sm:$0xff]
        %v343 = vld [vmem:[%s223 + $0x250] sm:$0xff]
        %v344 = vld [vmem:[%s223 + $0x258] sm:$0xff]
        %v345 = vld [vmem:[%s223 + $0x260] sm:$0xff]
        %v346 = vld [vmem:[%s223 + $0x268] sm:$0xff]
        %v347 = vld [vmem:[%s223 + $0x270] sm:$0xff]
        %v348 = vld [vmem:[%s223 + $0x278] sm:$0xff]
        %v349 = vld [vmem:[%s223 + $0x280] sm:$0xff]
        %v350 = vld [vmem:[%s223 + $0x288] sm:$0xff]
        %v351 = vld [vmem:[%s223 + $0x290] sm:$0xff]
        %v352 = vld [vmem:[%s223 + $0x298] sm:$0xff]
        %v353 = vld [vmem:[%s223 + $0x2a0] sm:$0xff]
        %v354 = vld [vmem:[%s223 + $0x2a8] sm:$0xff]
        %v355 = vld [vmem:[%s223 + $0x2b0] sm:$0xff]
        %v356 = vld [vmem:[%s223 + $0x2b8] sm:$0xff]
        %v357 = vld [vmem:[%s223 + $0x2c0] sm:$0xff]
        %v358 = vld [vmem:[%s223 + $0x2c8] sm:$0xff]
        %v359 = vld [vmem:[%s223 + $0x2d0] sm:$0xff]
        %v360 = vld [vmem:[%s223 + $0x2d8] sm:$0xff]
        %v361 = vld [vmem:[%s223 + $0x2e0] sm:$0xff]
        %v362 = vld [vmem:[%s223 + $0x2e8] sm:$0xff]
        %v363 = vld [vmem:[%s223 + $0x2f0] sm:$0xff]
        %v364 = vld [vmem:[%s223 + $0x2f8] sm:$0xff]
        %v365 = vld [vmem:[%s223 + $0x300] sm:$0xff]
        %v366 = vld [vmem:[%s223 + $0x308] sm:$0xff]
        %v367 = vld [vmem:[%s223 + $0x310] sm:$0xff]
        %v368 = vld [vmem:[%s223 + $0x318] sm:$0xff]
        %v369 = vld [vmem:[%s223 + $0x320] sm:$0xff]
        %v370 = vld [vmem:[%s223 + $0x328] sm:$0xff]
        %v371 = vld [vmem:[%s223 + $0x330] sm:$0xff]
        %v372 = vld [vmem:[%s223 + $0x338] sm:$0xff]
        %v373 = vld [vmem:[%s223 + $0x340] sm:$0xff]
        %v374 = vld [vmem:[%s223 + $0x348] sm:$0xff]
        %v375 = vld [vmem:[%s223 + $0x350] sm:$0xff]
        %v376 = vld [vmem:[%s223 + $0x358] sm:$0xff]
        %v377 = vld [vmem:[%s223 + $0x360] sm:$0xff]
        %v378 = vld [vmem:[%s223 + $0x368] sm:$0xff]
        %v379 = vld [vmem:[%s223 + $0x370] sm:$0xff]
        %v380 = vld [vmem:[%s223 + $0x378] sm:$0xff]
        %v381 = vld [vmem:[%s223 + $0x380] sm:$0xff]
        %v382 = vld [vmem:[%s223 + $0x388] sm:$0xff]
        %v383 = vld [vmem:[%s223 + $0x390] sm:$0xff]
        %v384 = vld [vmem:[%s223 + $0x398] sm:$0xff]
        %v385 = vld [vmem:[%s223 + $0x3a0] sm:$0xff]
        %v386 = vld [vmem:[%s223 + $0x3a8] sm:$0xff]
        %v387 = vld [vmem:[%s223 + $0x3b0] sm:$0xff]
        %v388 = vld [vmem:[%s223 + $0x3b8] sm:$0xff]
        %v389 = vld [vmem:[%s223 + $0x3c0] sm:$0xff]
        %v390 = vld [vmem:[%s223 + $0x3c8] sm:$0xff]
        %v391 = vld [vmem:[%s223 + $0x3d0] sm:$0xff]
        %v392 = vld [vmem:[%s223 + $0x3d8] sm:$0xff]
        %v393 = vld [vmem:[%s223 + $0x3e0] sm:$0xff]
        %v394 = vld [vmem:[%s223 + $0x3e8] sm:$0xff]
        %v395 = vld [vmem:[%s223 + $0x3f0] sm:$0xff]
        %v396 = vld [vmem:[%s223 + $0x3f8] sm:$0xff]
        %v397 = vld [vmem:[%s223 + $0x400] sm:$0xff]
        %v398 = vld [vmem:[%s223 + $0x408] sm:$0xff]
        %v399 = vld [vmem:[%s223 + $0x410] sm:$0xff]
        %v400 = vld [vmem:[%s223 + $0x418] sm:$0xff]
        %v401 = vld [vmem:[%s223 + $0x420] sm:$0xff]
        %v402 = vld [vmem:[%s223 + $0x428] sm:$0xff]
        %v403 = vld [vmem:[%s223 + $0x430] sm:$0xff]
        %v404 = vld [vmem:[%s223 + $0x438] sm:$0xff]
        %v405 = vld [vmem:[%s223 + $0x440] sm:$0xff]
        %v406 = vld [vmem:[%s223 + $0x448] sm:$0xff]
        %v407 = vld [vmem:[%s223 + $0x450] sm:$0xff]
        %v408 = vld [vmem:[%s223 + $0x458] sm:$0xff]
        %v409 = vld [vmem:[%s223 + $0x460] sm:$0xff]
        %v410 = vld [vmem:[%s223 + $0x468] sm:$0xff]
        %v411 = vld [vmem:[%s223 + $0x470] sm:$0xff]
        %v412 = vld [vmem:[%s223 + $0x478] sm:$0xff]
        %v413 = vld [vmem:[%s223 + $0x480] sm:$0xff]
        %v414 = vld [vmem:[%s223 + $0x488] sm:$0xff]
        %v415 = vld [vmem:[%s223 + $0x490] sm:$0xff]
        %v416 = vld [vmem:[%s223 + $0x498] sm:$0xff]
        %v417 = vld [vmem:[%s223 + $0x4a0] sm:$0xff]
        %v418 = vld [vmem:[%s223 + $0x4a8] sm:$0xff]
        %v419 = vld [vmem:[%s223 + $0x4b0] sm:$0xff]
        %v420 = vld [vmem:[%s223 + $0x4b8] sm:$0xff]
        %v421 = vld [vmem:[%s223 + $0x4c0] sm:$0xff]
        %v422 = vld [vmem:[%s223 + $0x4c8] sm:$0xff]
        %v423 = vld [vmem:[%s223 + $0x4d0] sm:$0xff]
        %v424 = vld [vmem:[%s223 + $0x4d8] sm:$0xff]
        %v425 = vld [vmem:[#allocation5] sm:$0xff]
        %v426 = vld [vmem:[#allocation5 + $0x8] sm:$0xff]
        %v427 = vld [vmem:[#allocation5 + $0x10] sm:$0xff]
        %v428 = vld [vmem:[#allocation5 + $0x18] sm:$0xff]
        %v429 = vld [vmem:[#allocation5 + $0x20] sm:$0xff]
        %v430 = vld [vmem:[#allocation5 + $0x28] sm:$0xff]
        %v431 = vld [vmem:[#allocation5 + $0x30] sm:$0xff]
        %v432 = vld [vmem:[#allocation5 + $0x38] sm:$0xff]
        %v433 = vld [vmem:[#allocation5 + $0x40] sm:$0xff]
        %v434 = vld [vmem:[#allocation5 + $0x48] sm:$0xff]
        %v435 = vld [vmem:[#allocation5 + $0x50] sm:$0xff]
        %v436 = vld [vmem:[#allocation5 + $0x58] sm:$0xff]
        %v437 = vld [vmem:[#allocation5 + $0x60] sm:$0xff]
        %v438 = vld [vmem:[#allocation5 + $0x68] sm:$0xff]
        %v439 = vld [vmem:[#allocation5 + $0x70] sm:$0xff]
        %v440 = vld [vmem:[#allocation5 + $0x78] sm:$0xff]
        %v441 = vld [vmem:[#allocation5 + $0x80] sm:$0xff]
        %v442 = vld [vmem:[#allocation5 + $0x88] sm:$0xff]
        %v443 = vld [vmem:[#allocation5 + $0x90] sm:$0xff]
        %v444 = vld [vmem:[#allocation5 + $0x98] sm:$0xff]
        %v445 = vld [vmem:[#allocation5 + $0xa0] sm:$0xff]
        %v446 = vld [vmem:[#allocation5 + $0xa8] sm:$0xff]
        %v447 = vld [vmem:[#allocation5 + $0xb0] sm:$0xff]
        %v448 = vld [vmem:[#allocation5 + $0xb8] sm:$0xff]
        %v449 = vld [vmem:[#allocation5 + $0xc0] sm:$0xff]
        %v450 = vld [vmem:[#allocation5 + $0xc8] sm:$0xff]
        %v451 = vld [vmem:[#allocation5 + $0xd0] sm:$0xff]
        %v452 = vld [vmem:[#allocation5 + $0xd8] sm:$0xff]
        %v453 = vld [vmem:[#allocation5 + $0xe0] sm:$0xff]
        %v454 = vld [vmem:[#allocation5 + $0xe8] sm:$0xff]
        %v455 = vld [vmem:[#allocation5 + $0xf0] sm:$0xff]
        %v456 = vld [vmem:[#allocation5 + $0xf8] sm:$0xff]
        %v457 = vld [vmem:[#allocation5 + $0x100] sm:$0xff]
        %v458 = vld [vmem:[#allocation5 + $0x108] sm:$0xff]
        %v459 = vld [vmem:[#allocation5 + $0x110] sm:$0xff]
        %v460 = vld [vmem:[#allocation5 + $0x118] sm:$0xff]
        %v461 = vld [vmem:[#allocation5 + $0x120] sm:$0xff]
        %v462 = vld [vmem:[#allocation5 + $0x128] sm:$0xff]
        %v463 = vld [vmem:[#allocation5 + $0x130] sm:$0xff]
        %v464 = vld [vmem:[#allocation5 + $0x138] sm:$0xff]
        %v465 = vld [vmem:[#allocation5 + $0x140] sm:$0xff]
        %v466 = vld [vmem:[#allocation5 + $0x148] sm:$0xff]
        %v467 = vld [vmem:[#allocation5 + $0x150] sm:$0xff]
        %v468 = vld [vmem:[#allocation5 + $0x158] sm:$0xff]
        %v469 = vld [vmem:[#allocation5 + $0x160] sm:$0xff]
        %v470 = vld [vmem:[#allocation5 + $0x168] sm:$0xff]
        %v471 = vld [vmem:[#allocation5 + $0x170] sm:$0xff]
        %v472 = vld [vmem:[#allocation5 + $0x178] sm:$0xff]
        %v473 = vld [vmem:[#allocation5 + $0x180] sm:$0xff]
        %v474 = vld [vmem:[#allocation5 + $0x188] sm:$0xff]
        %v475 = vld [vmem:[#allocation5 + $0x190] sm:$0xff]
        %v476 = vld [vmem:[#allocation5 + $0x198] sm:$0xff]
        %v477 = vld [vmem:[#allocation5 + $0x1a0] sm:$0xff]
        %v478 = vld [vmem:[#allocation5 + $0x1a8] sm:$0xff]
        %v479 = vld [vmem:[#allocation5 + $0x1b0] sm:$0xff]
        %v480 = vld [vmem:[#allocation5 + $0x1b8] sm:$0xff]
        %v481 = vld [vmem:[#allocation5 + $0x1c0] sm:$0xff]
        %v482 = vld [vmem:[#allocation5 + $0x1c8] sm:$0xff]
        %v483 = vld [vmem:[#allocation5 + $0x1d0] sm:$0xff]
        %v484 = vld [vmem:[#allocation5 + $0x1d8] sm:$0xff]
        %v485 = vld [vmem:[#allocation5 + $0x1e0] sm:$0xff]
        %v486 = vld [vmem:[#allocation5 + $0x1e8] sm:$0xff]
        %v487 = vld [vmem:[#allocation5 + $0x1f0] sm:$0xff]
        %v488 = vld [vmem:[#allocation5 + $0x1f8] sm:$0xff]
        %v489 = vld [vmem:[#allocation5 + $0x200] sm:$0xff]
        %v490 = vld [vmem:[#allocation5 + $0x208] sm:$0xff]
        %v491 = vld [vmem:[#allocation5 + $0x210] sm:$0xff]
        %v492 = vld [vmem:[#allocation5 + $0x218] sm:$0xff]
        %v493 = vld [vmem:[#allocation5 + $0x220] sm:$0xff]
        %v494 = vld [vmem:[#allocation5 + $0x228] sm:$0xff]
        %v495 = vld [vmem:[#allocation5 + $0x230] sm:$0xff]
        %v496 = vld [vmem:[#allocation5 + $0x238] sm:$0xff]
        %v497 = vld [vmem:[#allocation5 + $0x240] sm:$0xff]
        %v498 = vld [vmem:[#allocation5 + $0x248] sm:$0xff]
        %v499 = vld [vmem:[#allocation5 + $0x250] sm:$0xff]
        %v500 = vld [vmem:[#allocation5 + $0x258] sm:$0xff]
        %v501 = vld [vmem:[#allocation5 + $0x260] sm:$0xff]
        %v502 = vld [vmem:[#allocation5 + $0x268] sm:$0xff]
        %v503 = vld [vmem:[#allocation5 + $0x270] sm:$0xff]
        %v504 = vld [vmem:[#allocation5 + $0x278] sm:$0xff]
        %v505 = vld [vmem:[#allocation5 + $0x280] sm:$0xff]
        %v506 = vld [vmem:[#allocation5 + $0x288] sm:$0xff]
        %v507 = vld [vmem:[#allocation5 + $0x290] sm:$0xff]
        %v508 = vld [vmem:[#allocation5 + $0x298] sm:$0xff]
        %v509 = vld [vmem:[#allocation5 + $0x2a0] sm:$0xff]
        %v510 = vld [vmem:[#allocation5 + $0x2a8] sm:$0xff]
        %v511 = vld [vmem:[#allocation5 + $0x2b0] sm:$0xff]
        %v512 = vld [vmem:[#allocation5 + $0x2b8] sm:$0xff]
        %v513 = vld [vmem:[#allocation5 + $0x2c0] sm:$0xff]
        %v514 = vld [vmem:[#allocation5 + $0x2c8] sm:$0xff]
        %v515 = vld [vmem:[#allocation5 + $0x2d0] sm:$0xff]
        %v516 = vld [vmem:[#allocation5 + $0x2d8] sm:$0xff]
        %v517 = vld [vmem:[#allocation5 + $0x2e0] sm:$0xff]
        %v518 = vld [vmem:[#allocation5 + $0x2e8] sm:$0xff]
        %v519 = vld [vmem:[#allocation5 + $0x2f0] sm:$0xff]
        %v520 = vld [vmem:[#allocation5 + $0x2f8] sm:$0xff]
        %v521 = vld [vmem:[#allocation5 + $0x300] sm:$0xff]
        %v522 = vld [vmem:[#allocation5 + $0x308] sm:$0xff]
        %v523 = vld [vmem:[#allocation5 + $0x310] sm:$0xff]
        %v524 = vld [vmem:[#allocation5 + $0x318] sm:$0xff]
        %v525 = vld [vmem:[#allocation5 + $0x320] sm:$0xff]
        %v526 = vld [vmem:[#allocation5 + $0x328] sm:$0xff]
        %v527 = vld [vmem:[#allocation5 + $0x330] sm:$0xff]
        %v528 = vld [vmem:[#allocation5 + $0x338] sm:$0xff]
        %v529 = vld [vmem:[#allocation5 + $0x340] sm:$0xff]
        %v530 = vld [vmem:[#allocation5 + $0x348] sm:$0xff]
        %v531 = vld [vmem:[#allocation5 + $0x350] sm:$0xff]
        %v532 = vld [vmem:[#allocation5 + $0x358] sm:$0xff]
        %v533 = vld [vmem:[#allocation5 + $0x360] sm:$0xff]
        %v534 = vld [vmem:[#allocation5 + $0x368] sm:$0xff]
        %v535 = vld [vmem:[#allocation5 + $0x370] sm:$0xff]
        %v536 = vld [vmem:[#allocation5 + $0x378] sm:$0xff]
        %v537 = vld [vmem:[#allocation5 + $0x380] sm:$0xff]
        %v538 = vld [vmem:[#allocation5 + $0x388] sm:$0xff]
        %v539 = vld [vmem:[#allocation5 + $0x390] sm:$0xff]
        %v540 = vld [vmem:[#allocation5 + $0x398] sm:$0xff]
        %v541 = vld [vmem:[#allocation5 + $0x3a0] sm:$0xff]
        %v542 = vld [vmem:[#allocation5 + $0x3a8] sm:$0xff]
        %v543 = vld [vmem:[#allocation5 + $0x3b0] sm:$0xff]
        %v544 = vld [vmem:[#allocation5 + $0x3b8] sm:$0xff]
        %v545 = vld [vmem:[#allocation5 + $0x3c0] sm:$0xff]
        %v546 = vld [vmem:[#allocation5 + $0x3c8] sm:$0xff]
        %v547 = vld [vmem:[#allocation5 + $0x3d0] sm:$0xff]
        %v548 = vld [vmem:[#allocation5 + $0x3d8] sm:$0xff]
        %v549 = vld [vmem:[#allocation5 + $0x3e0] sm:$0xff]
        %v550 = vld [vmem:[#allocation5 + $0x3e8] sm:$0xff]
        %v551 = vld [vmem:[#allocation5 + $0x3f0] sm:$0xff]
        %v552 = vld [vmem:[#allocation5 + $0x3f8] sm:$0xff]
        %v553 = vld [vmem:[#allocation5 + $0x400] sm:$0xff]
        %v554 = vld [vmem:[#allocation5 + $0x408] sm:$0xff]
        %v555 = vld [vmem:[#allocation5 + $0x410] sm:$0xff]
        %v556 = vld [vmem:[#allocation5 + $0x418] sm:$0xff]
        %v557 = vld [vmem:[#allocation5 + $0x420] sm:$0xff]
        %v558 = vld [vmem:[#allocation5 + $0x428] sm:$0xff]
        %v559 = vld [vmem:[#allocation5 + $0x430] sm:$0xff]
        %v560 = vld [vmem:[#allocation5 + $0x438] sm:$0xff]
        %v561 = vld [vmem:[#allocation5 + $0x440] sm:$0xff]
        %v562 = vld [vmem:[#allocation5 + $0x448] sm:$0xff]
        %v563 = vld [vmem:[#allocation5 + $0x450] sm:$0xff]
        %v564 = vld [vmem:[#allocation5 + $0x458] sm:$0xff]
        %v565 = vld [vmem:[#allocation5 + $0x460] sm:$0xff]
        %v566 = vld [vmem:[#allocation5 + $0x468] sm:$0xff]
        %v567 = vld [vmem:[#allocation5 + $0x470] sm:$0xff]
        %v568 = vld [vmem:[#allocation5 + $0x478] sm:$0xff]
        %v569 = vld [vmem:[#allocation5 + $0x480] sm:$0xff]
        %v570 = vld [vmem:[#allocation5 + $0x488] sm:$0xff]
        %v571 = vld [vmem:[#allocation5 + $0x490] sm:$0xff]
        %v572 = vld [vmem:[#allocation5 + $0x498] sm:$0xff]
        %v573 = vld [vmem:[#allocation5 + $0x4a0] sm:$0xff]
        %v574 = vld [vmem:[#allocation5 + $0x4a8] sm:$0xff]
        %v575 = vld [vmem:[#allocation5 + $0x4b0] sm:$0xff]
        %v576 = vld [vmem:[#allocation5 + $0x4b8] sm:$0xff]
        %v577 = vld [vmem:[#allocation5 + $0x4c0] sm:$0xff]
        %v578 = vld [vmem:[#allocation5 + $0x4c8] sm:$0xff]
        %v579 = vld [vmem:[#allocation5 + $0x4d0] sm:$0xff]
        %v580 = vld [vmem:[#allocation5 + $0x4d8] sm:$0xff]
        %v581 = vld [vmem:[#allocation5 + $0x4e0] sm:$0xff]
        %v582 = vld [vmem:[#allocation5 + $0x4e8] sm:$0xff]
        %v583 = vld [vmem:[#allocation5 + $0x4f0] sm:$0xff]
        %v584 = vld [vmem:[#allocation5 + $0x4f8] sm:$0xff]
        %v585 = vld [vmem:[#allocation5 + $0x500] sm:$0xff]
        %v586 = vld [vmem:[#allocation5 + $0x508] sm:$0xff]
        %v587 = vld [vmem:[#allocation5 + $0x510] sm:$0xff]
        %v588 = vld [vmem:[#allocation5 + $0x518] sm:$0xff]
        %v589 = vld [vmem:[#allocation5 + $0x520] sm:$0xff]
        %v590 = vld [vmem:[#allocation5 + $0x528] sm:$0xff]
        %v591 = vld [vmem:[#allocation5 + $0x530] sm:$0xff]
        %v592 = vld [vmem:[#allocation5 + $0x538] sm:$0xff]
        %v593 = vld [vmem:[#allocation5 + $0x540] sm:$0xff]
        %v594 = vld [vmem:[#allocation5 + $0x548] sm:$0xff]
        %v595 = vld [vmem:[#allocation5 + $0x550] sm:$0xff]
        %v596 = vld [vmem:[#allocation5 + $0x558] sm:$0xff]
        %v597 = vld [vmem:[#allocation5 + $0x560] sm:$0xff]
        %v598 = vld [vmem:[#allocation5 + $0x568] sm:$0xff]
        %v599 = vld [vmem:[#allocation5 + $0x570] sm:$0xff]
        %v600 = vld [vmem:[#allocation5 + $0x578] sm:$0xff]
        %v601 = vld [vmem:[#allocation5 + $0x580] sm:$0xff]
        %v602 = vld [vmem:[#allocation5 + $0x588] sm:$0xff]
        %v603 = vld [vmem:[#allocation5 + $0x590] sm:$0xff]
        %v604 = vld [vmem:[#allocation5 + $0x598] sm:$0xff]
        %v605 = vld [vmem:[#allocation5 + $0x5a0] sm:$0xff]
        %v606 = vld [vmem:[#allocation5 + $0x5a8] sm:$0xff]
        %v607 = vld [vmem:[#allocation5 + $0x5b0] sm:$0xff]
        %v608 = vld [vmem:[#allocation5 + $0x5b8] sm:$0xff]
        %v609 = vld [vmem:[#allocation5 + $0x5c0] sm:$0xff]
        %v610 = vld [vmem:[#allocation5 + $0x5c8] sm:$0xff]
        %v611 = vld [vmem:[#allocation5 + $0x5d0] sm:$0xff]
        %v612 = vld [vmem:[#allocation5 + $0x5d8] sm:$0xff]
        %v613 = vld [vmem:[#allocation5 + $0x5e0] sm:$0xff]
        %v614 = vld [vmem:[#allocation5 + $0x5e8] sm:$0xff]
        %v615 = vld [vmem:[#allocation5 + $0x5f0] sm:$0xff]
        %v616 = vld [vmem:[#allocation5 + $0x5f8] sm:$0xff]
        %v617 = vld [vmem:[#allocation5 + $0x600] sm:$0xff]
        %v618 = vld [vmem:[#allocation5 + $0x608] sm:$0xff]
        %v619 = vld [vmem:[#allocation5 + $0x610] sm:$0xff]
        %v620 = vld [vmem:[#allocation5 + $0x618] sm:$0xff]
        %v621 = vld [vmem:[#allocation5 + $0x620] sm:$0xff]
        %v622 = vld [vmem:[#allocation5 + $0x628] sm:$0xff]
        %v623 = vld [vmem:[#allocation5 + $0x630] sm:$0xff]
        %v624 = vld [vmem:[#allocation5 + $0x638] sm:$0xff]
        %v625 = vld [vmem:[#allocation5 + $0x640] sm:$0xff]
        %v626 = vld [vmem:[#allocation5 + $0x648] sm:$0xff]
        %v627 = vld [vmem:[#allocation5 + $0x650] sm:$0xff]
        %v628 = vld [vmem:[#allocation5 + $0x658] sm:$0xff]
        %v629 = vld [vmem:[#allocation5 + $0x660] sm:$0xff]
        %v630 = vld [vmem:[#allocation5 + $0x668] sm:$0xff]
        %v631 = vld [vmem:[#allocation5 + $0x670] sm:$0xff]
        %v632 = vld [vmem:[#allocation5 + $0x678] sm:$0xff]
        %v633 = vld [vmem:[#allocation5 + $0x680] sm:$0xff]
        %v634 = vld [vmem:[#allocation5 + $0x688] sm:$0xff]
        %v635 = vld [vmem:[#allocation5 + $0x690] sm:$0xff]
        %v636 = vld [vmem:[#allocation5 + $0x698] sm:$0xff]
        %v637 = vld [vmem:[#allocation5 + $0x6a0] sm:$0xff]
        %v638 = vld [vmem:[#allocation5 + $0x6a8] sm:$0xff]
        %v639 = vld [vmem:[#allocation5 + $0x6b0] sm:$0xff]
        %v640 = vld [vmem:[#allocation5 + $0x6b8] sm:$0xff]
        %v641 = vld [vmem:[#allocation5 + $0x6c0] sm:$0xff]
        %v642 = vld [vmem:[#allocation5 + $0x6c8] sm:$0xff]
        %v643 = vld [vmem:[#allocation5 + $0x6d0] sm:$0xff]
        %v644 = vld [vmem:[#allocation5 + $0x6d8] sm:$0xff]
        %v645 = vld [vmem:[#allocation5 + $0x6e0] sm:$0xff]
        %v646 = vld [vmem:[#allocation5 + $0x6e8] sm:$0xff]
        %v647 = vld [vmem:[#allocation5 + $0x6f0] sm:$0xff]
        %v648 = vld [vmem:[#allocation5 + $0x6f8] sm:$0xff]
        %v649 = vld [vmem:[#allocation5 + $0x700] sm:$0xff]
        %v650 = vld [vmem:[#allocation5 + $0x708] sm:$0xff]
        %v651 = vld [vmem:[#allocation5 + $0x710] sm:$0xff]
        %v652 = vld [vmem:[#allocation5 + $0x718] sm:$0xff]
        %v653 = vld [vmem:[#allocation5 + $0x720] sm:$0xff]
        %v654 = vld [vmem:[#allocation5 + $0x728] sm:$0xff]
        %v655 = vld [vmem:[#allocation5 + $0x730] sm:$0xff]
        %v656 = vld [vmem:[#allocation5 + $0x738] sm:$0xff]
        %v657 = vld [vmem:[#allocation5 + $0x740] sm:$0xff]
        %v658 = vld [vmem:[#allocation5 + $0x748] sm:$0xff]
        %v659 = vld [vmem:[#allocation5 + $0x750] sm:$0xff]
        %v660 = vld [vmem:[#allocation5 + $0x758] sm:$0xff]
        %v661 = vld [vmem:[#allocation5 + $0x760] sm:$0xff]
        %v662 = vld [vmem:[#allocation5 + $0x768] sm:$0xff]
        %v663 = vld [vmem:[#allocation5 + $0x770] sm:$0xff]
        %v664 = vld [vmem:[#allocation5 + $0x778] sm:$0xff]
        %v665 = vld [vmem:[#allocation5 + $0x780] sm:$0xff]
        %v666 = vld [vmem:[#allocation5 + $0x788] sm:$0xff]
        %v667 = vld [vmem:[#allocation5 + $0x790] sm:$0xff]
        %v668 = vld [vmem:[#allocation5 + $0x798] sm:$0xff]
        %v669 = vld [vmem:[#allocation5 + $0x7a0] sm:$0xff]
        %v670 = vld [vmem:[#allocation5 + $0x7a8] sm:$0xff]
        %v671 = vld [vmem:[#allocation5 + $0x7b0] sm:$0xff]
        %v672 = vld [vmem:[#allocation5 + $0x7b8] sm:$0xff]
        %v673 = vld [vmem:[#allocation5 + $0x7c0] sm:$0xff]
        %v674 = vld [vmem:[#allocation5 + $0x7c8] sm:$0xff]
        %v675 = vld [vmem:[#allocation5 + $0x7d0] sm:$0xff]
        %v676 = vld [vmem:[#allocation5 + $0x7d8] sm:$0xff]
        %v677 = vld [vmem:[#allocation5 + $0x7e0] sm:$0xff]
        %v678 = vld [vmem:[#allocation5 + $0x7e8] sm:$0xff]
        %v679 = vld [vmem:[#allocation5 + $0x7f0] sm:$0xff]
        %v680 = vld [vmem:[#allocation5 + $0x7f8] sm:$0xff]
        %v681 = vld [vmem:[#allocation5 + $0x800] sm:$0xff]
        %v682 = vld [vmem:[#allocation5 + $0x808] sm:$0xff]
        %v683 = vld [vmem:[#allocation5 + $0x810] sm:$0xff]
        %v684 = vld [vmem:[#allocation5 + $0x818] sm:$0xff]
        %v685 = vld [vmem:[#allocation5 + $0x820] sm:$0xff]
        %v686 = vld [vmem:[#allocation5 + $0x828] sm:$0xff]
        %v687 = vld [vmem:[#allocation5 + $0x830] sm:$0xff]
        %v688 = vld [vmem:[#allocation5 + $0x838] sm:$0xff]
        %v689 = vld [vmem:[#allocation5 + $0x840] sm:$0xff]
        %v690 = vld [vmem:[#allocation5 + $0x848] sm:$0xff]
        %v691 = vld [vmem:[#allocation5 + $0x850] sm:$0xff]
        %v692 = vld [vmem:[#allocation5 + $0x858] sm:$0xff]
        %v693 = vld [vmem:[#allocation5 + $0x860] sm:$0xff]
        %v694 = vld [vmem:[#allocation5 + $0x868] sm:$0xff]
        %v695 = vld [vmem:[#allocation5 + $0x870] sm:$0xff]
        %v696 = vld [vmem:[#allocation5 + $0x878] sm:$0xff]
        %v697 = vld [vmem:[#allocation5 + $0x880] sm:$0xff]
        %v698 = vld [vmem:[#allocation5 + $0x888] sm:$0xff]
        %v699 = vld [vmem:[#allocation5 + $0x890] sm:$0xff]
        %v700 = vld [vmem:[#allocation5 + $0x898] sm:$0xff]
        %v701 = vld [vmem:[#allocation5 + $0x8a0] sm:$0xff]
        %v702 = vld [vmem:[#allocation5 + $0x8a8] sm:$0xff]
        %v703 = vld [vmem:[#allocation5 + $0x8b0] sm:$0xff]
        %v704 = vld [vmem:[#allocation5 + $0x8b8] sm:$0xff]
        %v705 = vld [vmem:[#allocation5 + $0x8c0] sm:$0xff]
        %v706 = vld [vmem:[#allocation5 + $0x8c8] sm:$0xff]
        %v707 = vld [vmem:[#allocation5 + $0x8d0] sm:$0xff]
        %v708 = vld [vmem:[#allocation5 + $0x8d8] sm:$0xff]
        %v709 = vld [vmem:[#allocation5 + $0x8e0] sm:$0xff]
        %v710 = vld [vmem:[#allocation5 + $0x8e8] sm:$0xff]
        %v711 = vld [vmem:[#allocation5 + $0x8f0] sm:$0xff]
        %v712 = vld [vmem:[#allocation5 + $0x8f8] sm:$0xff]
        %v713 = vld [vmem:[#allocation5 + $0x900] sm:$0xff]
        %v714 = vld [vmem:[#allocation5 + $0x908] sm:$0xff]
        %v715 = vld [vmem:[#allocation5 + $0x910] sm:$0xff]
        %v716 = vld [vmem:[#allocation5 + $0x918] sm:$0xff]
        %v717 = vld [vmem:[#allocation5 + $0x920] sm:$0xff]
        %v718 = vld [vmem:[#allocation5 + $0x928] sm:$0xff]
        %v719 = vld [vmem:[#allocation5 + $0x930] sm:$0xff]
        %v720 = vld [vmem:[#allocation5 + $0x938] sm:$0xff]
        %v721 = vld [vmem:[#allocation5 + $0x940] sm:$0xff]
        %v722 = vld [vmem:[#allocation5 + $0x948] sm:$0xff]
        %v723 = vld [vmem:[#allocation5 + $0x950] sm:$0xff]
        %v724 = vld [vmem:[#allocation5 + $0x958] sm:$0xff]
        %v725 = vld [vmem:[#allocation5 + $0x960] sm:$0xff]
        %v726 = vld [vmem:[#allocation5 + $0x968] sm:$0xff]
        %v727 = vld [vmem:[#allocation5 + $0x970] sm:$0xff]
        %v728 = vld [vmem:[#allocation5 + $0x978] sm:$0xff]
        %v729 = vld [vmem:[#allocation5 + $0x980] sm:$0xff]
        %v730 = vld [vmem:[#allocation5 + $0x988] sm:$0xff]
        %v731 = vld [vmem:[#allocation5 + $0x990] sm:$0xff]
        %v732 = vld [vmem:[#allocation5 + $0x998] sm:$0xff]
        %v733 = vld [vmem:[#allocation5 + $0x9a0] sm:$0xff]
        %v734 = vld [vmem:[#allocation5 + $0x9a8] sm:$0xff]
        %v735 = vld [vmem:[#allocation5 + $0x9b0] sm:$0xff]
        %v736 = vld [vmem:[#allocation5 + $0x9b8] sm:$0xff]
        %v737 = vld [vmem:[#allocation5 + $0x9c0] sm:$0xff]
        %v738 = vld [vmem:[#allocation5 + $0x9c8] sm:$0xff]
        %v739 = vld [vmem:[#allocation5 + $0x9d0] sm:$0xff]
        %v740 = vld [vmem:[#allocation5 + $0x9d8] sm:$0xff]
        %v741 = vld [vmem:[#allocation5 + $0x9e0] sm:$0xff]
        %v742 = vld [vmem:[#allocation5 + $0x9e8] sm:$0xff]
        %v743 = vld [vmem:[#allocation5 + $0x9f0] sm:$0xff]
        %v744 = vld [vmem:[#allocation5 + $0x9f8] sm:$0xff]
        %v745 = vld [vmem:[#allocation5 + $0xa00] sm:$0xff]
        %v746 = vld [vmem:[#allocation5 + $0xa08] sm:$0xff]
        %v747 = vld [vmem:[#allocation5 + $0xa10] sm:$0xff]
        %v748 = vld [vmem:[#allocation5 + $0xa18] sm:$0xff]
        %v749 = vld [vmem:[#allocation5 + $0xa20] sm:$0xff]
        %v750 = vld [vmem:[#allocation5 + $0xa28] sm:$0xff]
        %v751 = vld [vmem:[#allocation5 + $0xa30] sm:$0xff]
        %v752 = vld [vmem:[#allocation5 + $0xa38] sm:$0xff]
        %v753 = vld [vmem:[#allocation5 + $0xa40] sm:$0xff]
        %v754 = vld [vmem:[#allocation5 + $0xa48] sm:$0xff]
        %v755 = vld [vmem:[#allocation5 + $0xa50] sm:$0xff]
        %v756 = vld [vmem:[#allocation5 + $0xa58] sm:$0xff]
        %v757 = vld [vmem:[#allocation5 + $0xa60] sm:$0xff]
        %v758 = vld [vmem:[#allocation5 + $0xa68] sm:$0xff]
        %v759 = vld [vmem:[#allocation5 + $0xa70] sm:$0xff]
        %v760 = vld [vmem:[#allocation5 + $0xa78] sm:$0xff]
        %v761 = vld [vmem:[#allocation5 + $0xa80] sm:$0xff]
        %v762 = vld [vmem:[#allocation5 + $0xa88] sm:$0xff]
        %v763 = vld [vmem:[#allocation5 + $0xa90] sm:$0xff]
        %v764 = vld [vmem:[#allocation5 + $0xa98] sm:$0xff]
        %v765 = vld [vmem:[#allocation5 + $0xaa0] sm:$0xff]
        %v766 = vld [vmem:[#allocation5 + $0xaa8] sm:$0xff]
        %v767 = vld [vmem:[#allocation5 + $0xab0] sm:$0xff]
        %v768 = vld [vmem:[#allocation5 + $0xab8] sm:$0xff]
        %v769 = vld [vmem:[#allocation5 + $0xac0] sm:$0xff]
        %v770 = vld [vmem:[#allocation5 + $0xac8] sm:$0xff]
        %v771 = vld [vmem:[#allocation5 + $0xad0] sm:$0xff]
        %v772 = vld [vmem:[#allocation5 + $0xad8] sm:$0xff]
        %v773 = vld [vmem:[#allocation5 + $0xae0] sm:$0xff]
        %v774 = vld [vmem:[#allocation5 + $0xae8] sm:$0xff]
        %v775 = vld [vmem:[#allocation5 + $0xaf0] sm:$0xff]
        %v776 = vld [vmem:[#allocation5 + $0xaf8] sm:$0xff]
        %v777 = vld [vmem:[#allocation5 + $0xb00] sm:$0xff]
        %v778 = vld [vmem:[#allocation5 + $0xb08] sm:$0xff]
        %v779 = vld [vmem:[#allocation5 + $0xb10] sm:$0xff]
        %v780 = vld [vmem:[#allocation5 + $0xb18] sm:$0xff]
        %v781 = vld [vmem:[#allocation5 + $0xb20] sm:$0xff]
        %v782 = vld [vmem:[#allocation5 + $0xb28] sm:$0xff]
        %v783 = vld [vmem:[#allocation5 + $0xb30] sm:$0xff]
        %v784 = vld [vmem:[#allocation5 + $0xb38] sm:$0xff]
        %v785 = vld [vmem:[#allocation5 + $0xb40] sm:$0xff]
        %v786 = vld [vmem:[#allocation5 + $0xb48] sm:$0xff]
        %v787 = vld [vmem:[#allocation5 + $0xb50] sm:$0xff]
        %v788 = vld [vmem:[#allocation5 + $0xb58] sm:$0xff]
        %v789 = vld [vmem:[#allocation5 + $0xb60] sm:$0xff]
        %v790 = vld [vmem:[#allocation5 + $0xb68] sm:$0xff]
        %v791 = vld [vmem:[#allocation5 + $0xb70] sm:$0xff]
        %v792 = vld [vmem:[#allocation5 + $0xb78] sm:$0xff]
        %v793 = vld [vmem:[#allocation5 + $0xb80] sm:$0xff]
        %v794 = vld [vmem:[#allocation5 + $0xb88] sm:$0xff]
        %v795 = vld [vmem:[#allocation5 + $0xb90] sm:$0xff]
        %v796 = vld [vmem:[#allocation5 + $0xb98] sm:$0xff]
        %v797 = vld [vmem:[#allocation5 + $0xba0] sm:$0xff]
        %v798 = vld [vmem:[#allocation5 + $0xba8] sm:$0xff]
        %v799 = vld [vmem:[#allocation5 + $0xbb0] sm:$0xff]
        %v800 = vld [vmem:[#allocation5 + $0xbb8] sm:$0xff]
        %v801 = vld [vmem:[#allocation5 + $0xbc0] sm:$0xff]
        %v802 = vld [vmem:[#allocation5 + $0xbc8] sm:$0xff]
        %v803 = vld [vmem:[#allocation5 + $0xbd0] sm:$0xff]
        %v804 = vld [vmem:[#allocation5 + $0xbd8] sm:$0xff]
        %v805 = vld [vmem:[#allocation5 + $0xbe0] sm:$0xff]
        %v806 = vld [vmem:[#allocation5 + $0xbe8] sm:$0xff]
        %v807 = vld [vmem:[#allocation5 + $0xbf0] sm:$0xff]
        %v808 = vld [vmem:[#allocation5 + $0xbf8] sm:$0xff]
        %v809 = vld [vmem:[#allocation5 + $0xc00] sm:$0xff]
        %v810 = vld [vmem:[#allocation5 + $0xc08] sm:$0xff]
        %v811 = vld [vmem:[#allocation5 + $0xc10] sm:$0xff]
        %v812 = vld [vmem:[#allocation5 + $0xc18] sm:$0xff]
        %v813 = vld [vmem:[#allocation5 + $0xc20] sm:$0xff]
        %v814 = vld [vmem:[#allocation5 + $0xc28] sm:$0xff]
        %v815 = vld [vmem:[#allocation5 + $0xc30] sm:$0xff]
        %v816 = vld [vmem:[#allocation5 + $0xc38] sm:$0xff]
        %v817 = vld [vmem:[#allocation5 + $0xc40] sm:$0xff]
        %v818 = vld [vmem:[#allocation5 + $0xc48] sm:$0xff]
        %v819 = vld [vmem:[#allocation5 + $0xc50] sm:$0xff]
        %v820 = vld [vmem:[#allocation5 + $0xc58] sm:$0xff]
        %v821 = vld [vmem:[#allocation5 + $0xc60] sm:$0xff]
        %v822 = vld [vmem:[#allocation5 + $0xc68] sm:$0xff]
        %v823 = vld [vmem:[#allocation5 + $0xc70] sm:$0xff]
        %v824 = vld [vmem:[#allocation5 + $0xc78] sm:$0xff]
        %v825 = vld [vmem:[#allocation5 + $0xc80] sm:$0xff]
        %v826 = vld [vmem:[#allocation5 + $0xc88] sm:$0xff]
        %v827 = vld [vmem:[#allocation5 + $0xc90] sm:$0xff]
        %v828 = vld [vmem:[#allocation5 + $0xc98] sm:$0xff]
        %v829 = vld [vmem:[#allocation5 + $0xca0] sm:$0xff]
        %v830 = vld [vmem:[#allocation5 + $0xca8] sm:$0xff]
        %v831 = vld [vmem:[#allocation5 + $0xcb0] sm:$0xff]
        %v832 = vld [vmem:[#allocation5 + $0xcb8] sm:$0xff]
        %v833 = vld [vmem:[#allocation5 + $0xcc0] sm:$0xff]
        %v834 = vld [vmem:[#allocation5 + $0xcc8] sm:$0xff]
        %v835 = vld [vmem:[#allocation5 + $0xcd0] sm:$0xff]
        %v836 = vld [vmem:[#allocation5 + $0xcd8] sm:$0xff]
        %v837 = vld [vmem:[#allocation5 + $0xce0] sm:$0xff]
        %v838 = vld [vmem:[#allocation5 + $0xce8] sm:$0xff]
        %v839 = vld [vmem:[#allocation5 + $0xcf0] sm:$0xff]
        %v840 = vld [vmem:[#allocation5 + $0xcf8] sm:$0xff]
        %v841 = vld [vmem:[#allocation5 + $0xd00] sm:$0xff]
        %v842 = vld [vmem:[#allocation5 + $0xd08] sm:$0xff]
        %v843 = vld [vmem:[#allocation5 + $0xd10] sm:$0xff]
        %v844 = vld [vmem:[#allocation5 + $0xd18] sm:$0xff]
        %v845 = vld [vmem:[#allocation5 + $0xd20] sm:$0xff]
        %v846 = vld [vmem:[#allocation5 + $0xd28] sm:$0xff]
        %v847 = vld [vmem:[#allocation5 + $0xd30] sm:$0xff]
        %v848 = vld [vmem:[#allocation5 + $0xd38] sm:$0xff]
        %v849 = vld [vmem:[#allocation5 + $0xd40] sm:$0xff]
        %v850 = vld [vmem:[#allocation5 + $0xd48] sm:$0xff]
        %v851 = vld [vmem:[#allocation5 + $0xd50] sm:$0xff]
        %v852 = vld [vmem:[#allocation5 + $0xd58] sm:$0xff]
        %v853 = vld [vmem:[#allocation5 + $0xd60] sm:$0xff]
        %v854 = vld [vmem:[#allocation5 + $0xd68] sm:$0xff]
        %v855 = vld [vmem:[#allocation5 + $0xd70] sm:$0xff]
        %v856 = vld [vmem:[#allocation5 + $0xd78] sm:$0xff]
        %v857 = vld [vmem:[#allocation5 + $0xd80] sm:$0xff]
        %v858 = vld [vmem:[#allocation5 + $0xd88] sm:$0xff]
        %v859 = vld [vmem:[#allocation5 + $0xd90] sm:$0xff]
        %v860 = vld [vmem:[#allocation5 + $0xd98] sm:$0xff]
        %v861 = vld [vmem:[#allocation5 + $0xda0] sm:$0xff]
        %v862 = vld [vmem:[#allocation5 + $0xda8] sm:$0xff]
        %v863 = vld [vmem:[#allocation5 + $0xdb0] sm:$0xff]
        %v864 = vld [vmem:[#allocation5 + $0xdb8] sm:$0xff]
        %v865 = vld [vmem:[#allocation5 + $0xdc0] sm:$0xff]
        %v866 = vld [vmem:[#allocation5 + $0xdc8] sm:$0xff]
        %v867 = vld [vmem:[#allocation5 + $0xdd0] sm:$0xff]
        %v868 = vld [vmem:[#allocation5 + $0xdd8] sm:$0xff]
        %v869 = vld [vmem:[#allocation5 + $0xde0] sm:$0xff]
        %v870 = vld [vmem:[#allocation5 + $0xde8] sm:$0xff]
        %v871 = vld [vmem:[#allocation5 + $0xdf0] sm:$0xff]
        %v872 = vld [vmem:[#allocation5 + $0xdf8] sm:$0xff]
        %v873 = vld [vmem:[#allocation5 + $0xe00] sm:$0xff]
        %v874 = vld [vmem:[#allocation5 + $0xe08] sm:$0xff]
        %v875 = vld [vmem:[#allocation5 + $0xe10] sm:$0xff]
        %v876 = vld [vmem:[#allocation5 + $0xe18] sm:$0xff]
        %v877 = vld [vmem:[#allocation5 + $0xe20] sm:$0xff]
        %v878 = vld [vmem:[#allocation5 + $0xe28] sm:$0xff]
        %v879 = vld [vmem:[#allocation5 + $0xe30] sm:$0xff]
        %v880 = vld [vmem:[#allocation5 + $0xe38] sm:$0xff]
        %v881 = vld [vmem:[#allocation5 + $0xe40] sm:$0xff]
        %v882 = vld [vmem:[#allocation5 + $0xe48] sm:$0xff]
        %v883 = vld [vmem:[#allocation5 + $0xe50] sm:$0xff]
        %v884 = vld [vmem:[#allocation5 + $0xe58] sm:$0xff]
        %v885 = vld [vmem:[#allocation5 + $0xe60] sm:$0xff]
        %v886 = vld [vmem:[#allocation5 + $0xe68] sm:$0xff]
        %v887 = vld [vmem:[#allocation5 + $0xe70] sm:$0xff]
        %v888 = vld [vmem:[#allocation5 + $0xe78] sm:$0xff]
        %v889 = vld [vmem:[#allocation5 + $0xe80] sm:$0xff]
        %v890 = vld [vmem:[#allocation5 + $0xe88] sm:$0xff]
        %v891 = vld [vmem:[#allocation5 + $0xe90] sm:$0xff]
        %v892 = vld [vmem:[#allocation5 + $0xe98] sm:$0xff]
        %v893 = vld [vmem:[#allocation5 + $0xea0] sm:$0xff]
        %v894 = vld [vmem:[#allocation5 + $0xea8] sm:$0xff]
        %v895 = vld [vmem:[#allocation5 + $0xeb0] sm:$0xff]
        %v896 = vld [vmem:[#allocation5 + $0xeb8] sm:$0xff]
        %v897 = vld [vmem:[#allocation5 + $0xec0] sm:$0xff]
        %v898 = vld [vmem:[#allocation5 + $0xec8] sm:$0xff]
        %v899 = vld [vmem:[#allocation5 + $0xed0] sm:$0xff]
        %v900 = vld [vmem:[#allocation5 + $0xed8] sm:$0xff]
        %v901 = vld [vmem:[#allocation5 + $0xee0] sm:$0xff]
        %v902 = vld [vmem:[#allocation5 + $0xee8] sm:$0xff]
        %v903 = vld [vmem:[#allocation5 + $0xef0] sm:$0xff]
        %v904 = vld [vmem:[#allocation5 + $0xef8] sm:$0xff]
        %v905 = vld [vmem:[#allocation5 + $0xf00] sm:$0xff]
        %v906 = vld [vmem:[#allocation5 + $0xf08] sm:$0xff]
        %v907 = vld [vmem:[#allocation5 + $0xf10] sm:$0xff]
        %v908 = vld [vmem:[#allocation5 + $0xf18] sm:$0xff]
        %v909 = vld [vmem:[#allocation5 + $0xf20] sm:$0xff]
        %v910 = vld [vmem:[#allocation5 + $0xf28] sm:$0xff]
        %v911 = vld [vmem:[#allocation5 + $0xf30] sm:$0xff]
        %v912 = vld [vmem:[#allocation5 + $0xf38] sm:$0xff]
        %v913 = vld [vmem:[#allocation5 + $0xf40] sm:$0xff]
        %v914 = vld [vmem:[#allocation5 + $0xf48] sm:$0xff]
        %v915 = vld [vmem:[#allocation5 + $0xf50] sm:$0xff]
        %v916 = vld [vmem:[#allocation5 + $0xf58] sm:$0xff]
        %v917 = vld [vmem:[#allocation5 + $0xf60] sm:$0xff]
        %v918 = vld [vmem:[#allocation5 + $0xf68] sm:$0xff]
        %v919 = vld [vmem:[#allocation5 + $0xf70] sm:$0xff]
        %v920 = vld [vmem:[#allocation5 + $0xf78] sm:$0xff]
        %v921 = vld [vmem:[#allocation5 + $0xf80] sm:$0xff]
        %v922 = vld [vmem:[#allocation5 + $0xf88] sm:$0xff]
        %v923 = vld [vmem:[#allocation5 + $0xf90] sm:$0xff]
        %v924 = vld [vmem:[#allocation5 + $0xf98] sm:$0xff]
        %v925 = vld [vmem:[#allocation5 + $0xfa0] sm:$0xff]
        %v926 = vld [vmem:[#allocation5 + $0xfa8] sm:$0xff]
        %v927 = vld [vmem:[#allocation5 + $0xfb0] sm:$0xff]
        %v928 = vld [vmem:[#allocation5 + $0xfb8] sm:$0xff]
        %v929 = vld [vmem:[#allocation5 + $0xfc0] sm:$0xff]
        %v930 = vld [vmem:[#allocation5 + $0xfc8] sm:$0xff]
        %v931 = vld [vmem:[#allocation5 + $0xfd0] sm:$0xff]
        %v932 = vld [vmem:[#allocation5 + $0xfd8] sm:$0xff]
        %v933 = vld [vmem:[#allocation5 + $0xfe0] sm:$0xff]
        %v934 = vld [vmem:[#allocation5 + $0xfe8] sm:$0xff]
        %v935 = vld [vmem:[#allocation5 + $0xff0] sm:$0xff]
        %v936 = vld [vmem:[#allocation5 + $0xff8] sm:$0xff]
        %v937 = vld [vmem:[#allocation5 + $0x1000] sm:$0xff]
        %v938 = vld [vmem:[#allocation5 + $0x1008] sm:$0xff]
        %v939 = vld [vmem:[#allocation5 + $0x1010] sm:$0xff]
        %v940 = vld [vmem:[#allocation5 + $0x1018] sm:$0xff]
        %v941 = vld [vmem:[#allocation5 + $0x1020] sm:$0xff]
        %v942 = vld [vmem:[#allocation5 + $0x1028] sm:$0xff]
        %v943 = vld [vmem:[#allocation5 + $0x1030] sm:$0xff]
        %v944 = vld [vmem:[#allocation5 + $0x1038] sm:$0xff]
        %v945 = vld [vmem:[#allocation5 + $0x1040] sm:$0xff]
        %v946 = vld [vmem:[#allocation5 + $0x1048] sm:$0xff]
        %v947 = vld [vmem:[#allocation5 + $0x1050] sm:$0xff]
        %v948 = vld [vmem:[#allocation5 + $0x1058] sm:$0xff]
        %v949 = vld [vmem:[#allocation5 + $0x1060] sm:$0xff]
        %v950 = vld [vmem:[#allocation5 + $0x1068] sm:$0xff]
        %v951 = vld [vmem:[#allocation5 + $0x1070] sm:$0xff]
        %v952 = vld [vmem:[#allocation5 + $0x1078] sm:$0xff]
        %v953 = vld [vmem:[#allocation5 + $0x1080] sm:$0xff]
        %v954 = vld [vmem:[#allocation5 + $0x1088] sm:$0xff]
        %v955 = vld [vmem:[#allocation5 + $0x1090] sm:$0xff]
        %v956 = vld [vmem:[#allocation5 + $0x1098] sm:$0xff]
        %v957 = vld [vmem:[#allocation5 + $0x10a0] sm:$0xff]
        %v958 = vld [vmem:[#allocation5 + $0x10a8] sm:$0xff]
        %v959 = vld [vmem:[#allocation5 + $0x10b0] sm:$0xff]
        %v960 = vld [vmem:[#allocation5 + $0x10b8] sm:$0xff]
        %v961 = vld [vmem:[#allocation5 + $0x10c0] sm:$0xff]
        %v962 = vld [vmem:[#allocation5 + $0x10c8] sm:$0xff]
        %v963 = vld [vmem:[#allocation5 + $0x10d0] sm:$0xff]
        %v964 = vld [vmem:[#allocation5 + $0x10d8] sm:$0xff]
        %v965 = vld [vmem:[#allocation5 + $0x10e0] sm:$0xff]
        %v966 = vld [vmem:[#allocation5 + $0x10e8] sm:$0xff]
        %v967 = vld [vmem:[#allocation5 + $0x10f0] sm:$0xff]
        %v968 = vld [vmem:[#allocation5 + $0x10f8] sm:$0xff]
        %v969 = vld [vmem:[#allocation5 + $0x1100] sm:$0xff]
        %v970 = vld [vmem:[#allocation5 + $0x1108] sm:$0xff]
        %v971 = vld [vmem:[#allocation5 + $0x1110] sm:$0xff]
        %v972 = vld [vmem:[#allocation5 + $0x1118] sm:$0xff]
        %v973 = vld [vmem:[#allocation5 + $0x1120] sm:$0xff]
        %v974 = vld [vmem:[#allocation5 + $0x1128] sm:$0xff]
        %v975 = vld [vmem:[#allocation5 + $0x1130] sm:$0xff]
        %v976 = vld [vmem:[#allocation5 + $0x1138] sm:$0xff]
        %v977 = vld [vmem:[#allocation5 + $0x1140] sm:$0xff]
        %v978 = vld [vmem:[#allocation5 + $0x1148] sm:$0xff]
        %v979 = vld [vmem:[#allocation5 + $0x1150] sm:$0xff]
        %v980 = vld [vmem:[#allocation5 + $0x1158] sm:$0xff]
        %v981 = vld [vmem:[#allocation5 + $0x1160] sm:$0xff]
        %v982 = vld [vmem:[#allocation5 + $0x1168] sm:$0xff]
        %v983 = vld [vmem:[#allocation5 + $0x1170] sm:$0xff]
        %v984 = vld [vmem:[#allocation5 + $0x1178] sm:$0xff]
        %v985 = vld [vmem:[#allocation5 + $0x1180] sm:$0xff]
        %v986 = vld [vmem:[#allocation5 + $0x1188] sm:$0xff]
        %v987 = vld [vmem:[#allocation5 + $0x1190] sm:$0xff]
        %v988 = vld [vmem:[#allocation5 + $0x1198] sm:$0xff]
        %v989 = vld [vmem:[#allocation5 + $0x11a0] sm:$0xff]
        %v990 = vld [vmem:[#allocation5 + $0x11a8] sm:$0xff]
        %v991 = vld [vmem:[#allocation5 + $0x11b0] sm:$0xff]
        %v992 = vld [vmem:[#allocation5 + $0x11b8] sm:$0xff]
        %v993 = vld [vmem:[#allocation5 + $0x11c0] sm:$0xff]
        %v994 = vld [vmem:[#allocation5 + $0x11c8] sm:$0xff]
        %v995 = vld [vmem:[#allocation5 + $0x11d0] sm:$0xff]
        %v996 = vld [vmem:[#allocation5 + $0x11d8] sm:$0xff]
        %v997 = vld [vmem:[#allocation5 + $0x11e0] sm:$0xff]
        %v998 = vld [vmem:[#allocation5 + $0x11e8] sm:$0xff]
        %v999 = vld [vmem:[#allocation5 + $0x11f0] sm:$0xff]
        %v1000 = vld [vmem:[#allocation5 + $0x11f8] sm:$0xff]
        %v1001 = vld [vmem:[#allocation7] sm:$0x3f]
        %v1003 = vlaneseq
        %v1004 = vshrl.u32 %v1003, 7
        %v1005 = vsub.s32 0, %v1004
        %v1006 = vrot.slane %v1001, %v1005
        %v1007 = vlaneseq
        %v1008 = vshrl.u32 %v1007, 7
        %v1009 = vsub.s32 1, %v1008
        %v1010 = vrot.slane %v1001, %v1009
        %v1011 = vlaneseq
        %v1012 = vshrl.u32 %v1011, 7
        %v1013 = vsub.s32 2, %v1012
        %v1014 = vrot.slane %v1001, %v1013
        %v1015 = vlaneseq
        %v1016 = vshrl.u32 %v1015, 7
        %v1017 = vsub.s32 3, %v1016
        %v1018 = vrot.slane %v1001, %v1017
        %v1019 = vlaneseq
        %v1020 = vshrl.u32 %v1019, 7
        %v1021 = vsub.s32 4, %v1020
        %v1022 = vrot.slane %v1001, %v1021
        %v1023 = vlaneseq
        %v1024 = vshrl.u32 %v1023, 7
        %v1025 = vsub.s32 5, %v1024
        %v1026 = vrot.slane %v1001, %v1025
        %1033 = vmatprep.subr.mxu0 %v426
        %1034 = vmatpush1.msra.mxu0 %v425
        %1035 = vmatprep.subr.mxu0 %v432
        %1036 = vmatpush1.msra.mxu0 %v431
        %1037 = vmatprep.subr.mxu0 %v438
        %1038 = vmatpush1.msra.mxu0 %v437
        %1039 = vmatprep.subr.mxu0 %v444
        %1040 = vmatpush1.msra.mxu0 %v443
        %1041 = vmatprep.subr.mxu0 %v450
        %1042 = vmatpush1.msra.mxu0 %v449
        %1043 = vmatprep.subr.mxu0 %v456
        %1044 = vmatpush1.msra.mxu0 %v455
        %1045 = vmatprep.subr.mxu0 %v462
        %1046 = vmatpush1.msra.mxu0 %v461
        %1047 = vmatprep.subr.mxu0 %v468
        %1048 = vmatpush1.msra.mxu0 %v467
        %1049 = vmatprep.subr.mxu0 %v474
        %1050 = vmatpush1.msra.mxu0 %v473
        %1051 = vmatprep.subr.mxu0 %v480
        %1052 = vmatpush1.msra.mxu0 %v479
        %1053 = vmatprep.subr.mxu0 %v486
        %1054 = vmatpush1.msra.mxu0 %v485
        %1055 = vmatprep.subr.mxu0 %v492
        %1056 = vmatpush1.msra.mxu0 %v491
        %1057 = vmatprep.subr.mxu0 %v498
        %1058 = vmatpush1.msra.mxu0 %v497
        %1059 = vmatprep.subr.mxu0 %v504
        %1060 = vmatpush1.msra.mxu0 %v503
        %1061 = vmatprep.subr.mxu0 %v510
        %1062 = vmatpush1.msra.mxu0 %v509
        %1063 = vmatprep.subr.mxu0 %v516
        %1064 = vmatpush1.msra.mxu0 %v515
        %1065 = vmatprep.subr.mxu0 %v522
        %1066 = vmatpush1.msra.mxu0 %v521
        %1067 = vmatprep.subr.mxu0 %v528
        %1068 = vmatpush1.msra.mxu0 %v527
        %1069 = vmatprep.subr.mxu0 %v534
        %1070 = vmatpush1.msra.mxu0 %v533
        %1071 = vmatprep.subr.mxu0 %v540
        %1072 = vmatpush1.msra.mxu0 %v539
        %1073 = vmatprep.subr.mxu0 %v546
        %1074 = vmatpush1.msra.mxu0 %v545
        %1075 = vmatprep.subr.mxu0 %v552
        %1076 = vmatpush1.msra.mxu0 %v551
        %1077 = vmatprep.subr.mxu0 %v558
        %1078 = vmatpush1.msra.mxu0 %v557
        %1079 = vmatprep.subr.mxu0 %v564
        %1080 = vmatpush1.msra.mxu0 %v563
        %1081 = vmatprep.subr.mxu0 %v570
        %1082 = vmatpush1.msra.mxu0 %v569
        %1083 = vmatprep.subr.mxu0 %v576
        %1084 = vmatpush1.msra.mxu0 %v575
        %1085 = vmatprep.subr.mxu0 %v582
        %1086 = vmatpush1.msra.mxu0 %v581
        %1087 = vmatprep.subr.mxu0 %v588
        %1088 = vmatpush1.msra.mxu0 %v587
        %1089 = vmatprep.subr.mxu0 %v594
        %1090 = vmatpush1.msra.mxu0 %v593
        %1091 = vmatprep.subr.mxu0 %v600
        %1092 = vmatpush1.msra.mxu0 %v599
        %1093 = vmatprep.subr.mxu0 %v606
        %1094 = vmatpush1.msra.mxu0 %v605
        %1095 = vmatprep.subr.mxu0 %v612
        %1096 = vmatpush1.msra.mxu0 %v611
        %1097 = vmatprep.mubr.f32.mxu0 %v270
        %1098 = vmatmul.mubr.f32.gmra.mrb[0].mxu0 %v269
        %v1099 = vpop.f32.mrb[0].mxu0
        %v1100 = vadd.f32 %v1006, %v1099
        %v1101 = vpop.f32.mrb[0].mxu0
        %v1102 = vadd.f32 %v1010, %v1101
        %1103 = vmatprep.mubr.f32.mxu0 %v276
        %1104 = vmatmul.mubr.f32.gmra.mrb[0].mxu0 %v275
        %v1105 = vpop.f32.mrb[0].mxu0
        %v1106 = vadd.f32 %v1006, %v1105
        %v1107 = vpop.f32.mrb[0].mxu0
        %v1108 = vadd.f32 %v1010, %v1107
        %1109 = vmatprep.mubr.f32.mxu0 %v282
        %1110 = vmatmul.mubr.f32.gmra.mrb[0].mxu0 %v281
        %v1111 = vpop.f32.mrb[0].mxu0
        %v1112 = vadd.f32 %v1006, %v1111
        %v1113 = vpop.f32.mrb[0].mxu0
        %v1114 = vadd.f32 %v1010, %v1113
        %1115 = vmatprep.mubr.f32.mxu0 %v288
        %1116 = vmatmul.mubr.f32.gmra.mrb[0].mxu0 %v287
        %v1117 = vpop.f32.mrb[0].mxu0
        %v1118 = vadd.f32 %v1006, %v1117
        %v1119 = vpop.f32.mrb[0].mxu0
        %v1120 = vadd.f32 %v1010, %v1119
        %1121 = vmatprep.mubr.f32.mxu0 %v294
        %1122 = vmatmul.mubr.f32.gmra.mrb[0].mxu0 %v293
        %v1123 = vpop.f32.mrb[0].mxu0
        %v1124 = vadd.f32 %v1006, %v1123
        %v1125 = vpop.f32.mrb[0].mxu0
        %v1126 = vadd.f32 %v1010, %v1125
        %1127 = vmatprep.mubr.f32.mxu0 %v300
        %1128 = vmatmul.mubr.f32.gmra.mrb[0].mxu0 %v299
        %v1129 = vpop.f32.mrb[0].mxu0
        %v1130 = vadd.f32 %v1006, %v1129
        %v1131 = vpop.f32.mrb[0].mxu0
        %v1132 = vadd.f32 %v1010, %v1131
        %1133 = vmatprep.mubr.f32.mxu0 %v306
        %1134 = vmatmul.mubr.f32.gmra.mrb[0].mxu0 %v305
        %v1135 = vpop.f32.mrb[0].mxu0
        %v1136 = vadd.f32 %v1006, %v1135
        %v1137 = vpop.f32.mrb[0].mxu0
        %v1138 = vadd.f32 %v1010, %v1137
        %1139 = vmatprep.mubr.f32.mxu0 %v312
        %1140 = vmatmul.mubr.f32.gmra.mrb[0].mxu0 %v311
        %v1141 = vpop.f32.mrb[0].mxu0
        %v1142 = vadd.f32 %v1006, %v1141
        %v1143 = vpop.f32.mrb[0].mxu0
        %v1144 = vadd.f32 %v1010, %v1143
        %1145 = vmatprep.mubr.f32.mxu0 %v318
        %1146 = vmatmul.mubr.f32.gmra.mrb[0].mxu0 %v317
        %v1147 = vpop.f32.mrb[0].mxu0
        %v1148 = vadd.f32 %v1006, %v1147
        %v1149 = vpop.f32.mrb[0].mxu0
        %v1150 = vadd.f32 %v1010, %v1149
        %1151 = vmatprep.mubr.f32.mxu0 %v324
        %1152 = vmatmul.mubr.f32.gmra.mrb[0].mxu0 %v323
        %v1153 = vpop.f32.mrb[0].mxu0
        %v1154 = vadd.f32 %v1006, %v1153
        %v1155 = vpop.f32.mrb[0].mxu0
        %v1156 = vadd.f32 %v1010, %v1155
        %1157 = vmatprep.mubr.f32.mxu0 %v330
        %1158 = vmatmul.mubr.f32.gmra.mrb[0].mxu0 %v329
        %v1159 = vpop.f32.mrb[0].mxu0
        %v1160 = vadd.f32 %v1006, %v1159
        %v1161 = vpop.f32.mrb[0].mxu0
        %v1162 = vadd.f32 %v1010, %v1161
        %1163 = vmatprep.mubr.f32.mxu0 %v336
        %1164 = vmatmul.mubr.f32.gmra.mrb[0].mxu0 %v335
        %v1165 = vpop.f32.mrb[0].mxu0
        %v1166 = vadd.f32 %v1006, %v1165
        %v1167 = vpop.f32.mrb[0].mxu0
        %v1168 = vadd.f32 %v1010, %v1167
        %1169 = vmatprep.mubr.f32.mxu0 %v342
        %1170 = vmatmul.mubr.f32.gmra.mrb[0].mxu0 %v341
        %v1171 = vpop.f32.mrb[0].mxu0
        %v1172 = vadd.f32 %v1006, %v1171
        %v1173 = vpop.f32.mrb[0].mxu0
        %v1174 = vadd.f32 %v1010, %v1173
        %1175 = vmatprep.mubr.f32.mxu0 %v348
        %1176 = vmatmul.mubr.f32.gmra.mrb[0].mxu0 %v347
        %v1177 = vpop.f32.mrb[0].mxu0
        %v1178 = vadd.f32 %v1006, %v1177
        %v1179 = vpop.f32.mrb[0].mxu0
        %v1180 = vadd.f32 %v1010, %v1179
        %1181 = vmatprep.mubr.f32.mxu0 %v354
        %1182 = vmatmul.mubr.f32.gmra.mrb[0].mxu0 %v353
        %v1183 = vpop.f32.mrb[0].mxu0
        %v1184 = vadd.f32 %v1006, %v1183
        %v1185 = vpop.f32.mrb[0].mxu0
        %v1186 = vadd.f32 %v1010, %v1185
        %1187 = vmatprep.mubr.f32.mxu0 %v360
        %1188 = vmatmul.mubr.f32.gmra.mrb[0].mxu0 %v359
        %v1189 = vpop.f32.mrb[0].mxu0
        %v1190 = vadd.f32 %v1006, %v1189
        %v1191 = vpop.f32.mrb[0].mxu0
        %v1192 = vadd.f32 %v1010, %v1191
        %1193 = vmatprep.mubr.f32.mxu0 %v366
        %1194 = vmatmul.mubr.f32.gmra.mrb[0].mxu0 %v365
        %v1195 = vpop.f32.mrb[0].mxu0
        %v1196 = vadd.f32 %v1006, %v1195
        %v1197 = vpop.f32.mrb[0].mxu0
        %v1198 = vadd.f32 %v1010, %v1197
        %1199 = vmatprep.mubr.f32.mxu0 %v372
        %1200 = vmatmul.mubr.f32.gmra.mrb[0].mxu0 %v371
        %v1201 = vpop.f32.mrb[0].mxu0
        %v1202 = vadd.f32 %v1006, %v1201
        %v1203 = vpop.f32.mrb[0].mxu0
        %v1204 = vadd.f32 %v1010, %v1203
        %1205 = vmatprep.mubr.f32.mxu0 %v378
        %1206 = vmatmul.mubr.f32.gmra.mrb[0].mxu0 %v377
        %v1207 = vpop.f32.mrb[0].mxu0
        %v1208 = vadd.f32 %v1006, %v1207
        %v1209 = vpop.f32.mrb[0].mxu0
        %v1210 = vadd.f32 %v1010, %v1209
        %1211 = vmatprep.mubr.f32.mxu0 %v384
        %1212 = vmatmul.mubr.f32.gmra.mrb[0].mxu0 %v383
        %v1213 = vpop.f32.mrb[0].mxu0
        %v1214 = vadd.f32 %v1006, %v1213
        %v1215 = vpop.f32.mrb[0].mxu0
        %v1216 = vadd.f32 %v1010, %v1215
        %1217 = vmatprep.mubr.f32.mxu0 %v390
        %1218 = vmatmul.mubr.f32.gmra.mrb[0].mxu0 %v389
        %v1219 = vpop.f32.mrb[0].mxu0
        %v1220 = vadd.f32 %v1006, %v1219
        %v1221 = vpop.f32.mrb[0].mxu0
        %v1222 = vadd.f32 %v1010, %v1221
        %1223 = vmatprep.mubr.f32.mxu0 %v396
        %1224 = vmatmul.mubr.f32.gmra.mrb[0].mxu0 %v395
        %v1225 = vpop.f32.mrb[0].mxu0
        %v1226 = vadd.f32 %v1006, %v1225
        %v1227 = vpop.f32.mrb[0].mxu0
        %v1228 = vadd.f32 %v1010, %v1227
        %1229 = vmatprep.mubr.f32.mxu0 %v402
        %1230 = vmatmul.mubr.f32.gmra.mrb[0].mxu0 %v401
        %v1231 = vpop.f32.mrb[0].mxu0
        %v1232 = vadd.f32 %v1006, %v1231
        %v1233 = vpop.f32.mrb[0].mxu0
        %v1234 = vadd.f32 %v1010, %v1233
        %1235 = vmatprep.mubr.f32.mxu0 %v408
        %1236 = vmatmul.mubr.f32.gmra.mrb[0].mxu0 %v407
        %v1237 = vpop.f32.mrb[0].mxu0
        %v1238 = vadd.f32 %v1006, %v1237
        %v1239 = vpop.f32.mrb[0].mxu0
        %v1240 = vadd.f32 %v1010, %v1239
        %1241 = vmatprep.mubr.f32.mxu0 %v414
        %1242 = vmatmul.mubr.f32.gmra.mrb[0].mxu0 %v413
        %v1243 = vpop.f32.mrb[0].mxu0
        %v1244 = vadd.f32 %v1006, %v1243
        %v1245 = vpop.f32.mrb[0].mxu0
        %v1246 = vadd.f32 %v1010, %v1245
        %1247 = vmatprep.mubr.f32.mxu0 %v420
        %1248 = vmatmul.mubr.f32.gmra.mrb[0].mxu0 %v419
        %v1249 = vpop.f32.mrb[0].mxu0
        %v1250 = vadd.f32 %v1006, %v1249
        %v1251 = vpop.f32.mrb[0].mxu0
        %v1252 = vadd.f32 %v1010, %v1251
        %1253 = vdwg.mxu0
        %1254 = vmatprep.subr.mxu0 %v618
        %1255 = vmatpush1.msra.mxu0 %v617
        %1256 = vmatprep.subr.mxu0 %v624
        %1257 = vmatpush1.msra.mxu0 %v623
        %1258 = vmatprep.subr.mxu0 %v630
        %1259 = vmatpush1.msra.mxu0 %v629
        %1260 = vmatprep.subr.mxu0 %v636
        %1261 = vmatpush1.msra.mxu0 %v635
        %1262 = vmatprep.subr.mxu0 %v642
        %1263 = vmatpush1.msra.mxu0 %v641
        %1264 = vmatprep.subr.mxu0 %v648
        %1265 = vmatpush1.msra.mxu0 %v647
        %1266 = vmatprep.subr.mxu0 %v654
        %1267 = vmatpush1.msra.mxu0 %v653
        %1268 = vmatprep.subr.mxu0 %v660
        %1269 = vmatpush1.msra.mxu0 %v659
        %1270 = vmatprep.subr.mxu0 %v666
        %1271 = vmatpush1.msra.mxu0 %v665
        %1272 = vmatprep.subr.mxu0 %v672
        %1273 = vmatpush1.msra.mxu0 %v671
        %1274 = vmatprep.subr.mxu0 %v678
        %1275 = vmatpush1.msra.mxu0 %v677
        %1276 = vmatprep.subr.mxu0 %v684
        %1277 = vmatpush1.msra.mxu0 %v683
        %1278 = vmatprep.subr.mxu0 %v690
        %1279 = vmatpush1.msra.mxu0 %v689
        %1280 = vmatprep.subr.mxu0 %v696
        %1281 = vmatpush1.msra.mxu0 %v695
        %1282 = vmatprep.subr.mxu0 %v702
        %1283 = vmatpush1.msra.mxu0 %v701
        %1284 = vmatprep.subr.mxu0 %v708
        %1285 = vmatpush1.msra.mxu0 %v707
        %1286 = vmatprep.subr.mxu0 %v714
        %1287 = vmatpush1.msra.mxu0 %v713
        %1288 = vmatprep.subr.mxu0 %v720
        %1289 = vmatpush1.msra.mxu0 %v719
        %1290 = vmatprep.subr.mxu0 %v726
        %1291 = vmatpush1.msra.mxu0 %v725
        %1292 = vmatprep.subr.mxu0 %v732
        %1293 = vmatpush1.msra.mxu0 %v731
        %1294 = vmatprep.subr.mxu0 %v738
        %1295 = vmatpush1.msra.mxu0 %v737
        %1296 = vmatprep.subr.mxu0 %v744
        %1297 = vmatpush1.msra.mxu0 %v743
        %1298 = vmatprep.subr.mxu0 %v750
        %1299 = vmatpush1.msra.mxu0 %v749
        %1300 = vmatprep.subr.mxu0 %v756
        %1301 = vmatpush1.msra.mxu0 %v755
        %1302 = vmatprep.subr.mxu0 %v762
        %1303 = vmatpush1.msra.mxu0 %v761
        %1304 = vmatprep.subr.mxu0 %v768
        %1305 = vmatpush1.msra.mxu0 %v767
        %1306 = vmatprep.subr.mxu0 %v774
        %1307 = vmatpush1.msra.mxu0 %v773
        %1308 = vmatprep.subr.mxu0 %v780
        %1309 = vmatpush1.msra.mxu0 %v779
        %1310 = vmatprep.subr.mxu0 %v786
        %1311 = vmatpush1.msra.mxu0 %v785
        %1312 = vmatprep.subr.mxu0 %v792
        %1313 = vmatpush1.msra.mxu0 %v791
        %1314 = vmatprep.subr.mxu0 %v798
        %1315 = vmatpush1.msra.mxu0 %v797
        %1316 = vmatprep.subr.mxu0 %v804
        %1317 = vmatpush1.msra.mxu0 %v803
        %1318 = vmatprep.mubr.f32.mxu0 %v272
        %1319 = vmatmul.mubr.f32.gmra.mrb[0].mxu0 %v271
        %v1320 = vpop.f32.mrb[0].mxu0
        %v1321 = vadd.f32 %v1100, %v1320
        %v1322 = vpop.f32.mrb[0].mxu0
        %v1323 = vadd.f32 %v1102, %v1322
        %1324 = vmatprep.mubr.f32.mxu0 %v278
        %1325 = vmatmul.mubr.f32.gmra.mrb[0].mxu0 %v277
        %v1326 = vpop.f32.mrb[0].mxu0
        %v1327 = vadd.f32 %v1106, %v1326
        %v1328 = vpop.f32.mrb[0].mxu0
        %v1329 = vadd.f32 %v1108, %v1328
        %1330 = vmatprep.mubr.f32.mxu0 %v284
        %1331 = vmatmul.mubr.f32.gmra.mrb[0].mxu0 %v283
        %v1332 = vpop.f32.mrb[0].mxu0
        %v1333 = vadd.f32 %v1112, %v1332
        %v1334 = vpop.f32.mrb[0].mxu0
        %v1335 = vadd.f32 %v1114, %v1334
        %1336 = vmatprep.mubr.f32.mxu0 %v290
        %1337 = vmatmul.mubr.f32.gmra.mrb[0].mxu0 %v289
        %v1338 = vpop.f32.mrb[0].mxu0
        %v1339 = vadd.f32 %v1118, %v1338
        %v1340 = vpop.f32.mrb[0].mxu0
        %v1341 = vadd.f32 %v1120, %v1340
        %1342 = vmatprep.mubr.f32.mxu0 %v296
        %1343 = vmatmul.mubr.f32.gmra.mrb[0].mxu0 %v295
        %v1344 = vpop.f32.mrb[0].mxu0
        %v1345 = vadd.f32 %v1124, %v1344
        %v1346 = vpop.f32.mrb[0].mxu0
        %v1347 = vadd.f32 %v1126, %v1346
        %1348 = vmatprep.mubr.f32.mxu0 %v302
        %1349 = vmatmul.mubr.f32.gmra.mrb[0].mxu0 %v301
        %v1350 = vpop.f32.mrb[0].mxu0
        %v1351 = vadd.f32 %v1130, %v1350
        %v1352 = vpop.f32.mrb[0].mxu0
        %v1353 = vadd.f32 %v1132, %v1352
        %1354 = vmatprep.mubr.f32.mxu0 %v308
        %1355 = vmatmul.mubr.f32.gmra.mrb[0].mxu0 %v307
        %v1356 = vpop.f32.mrb[0].mxu0
        %v1357 = vadd.f32 %v1136, %v1356
        %v1358 = vpop.f32.mrb[0].mxu0
        %v1359 = vadd.f32 %v1138, %v1358
        %1360 = vmatprep.mubr.f32.mxu0 %v314
        %1361 = vmatmul.mubr.f32.gmra.mrb[0].mxu0 %v313
        %v1362 = vpop.f32.mrb[0].mxu0
        %v1363 = vadd.f32 %v1142, %v1362
        %v1364 = vpop.f32.mrb[0].mxu0
        %v1365 = vadd.f32 %v1144, %v1364
        %1366 = vmatprep.mubr.f32.mxu0 %v320
        %1367 = vmatmul.mubr.f32.gmra.mrb[0].mxu0 %v319
        %v1368 = vpop.f32.mrb[0].mxu0
        %v1369 = vadd.f32 %v1148, %v1368
        %v1370 = vpop.f32.mrb[0].mxu0
        %v1371 = vadd.f32 %v1150, %v1370
        %1372 = vmatprep.mubr.f32.mxu0 %v326
        %1373 = vmatmul.mubr.f32.gmra.mrb[0].mxu0 %v325
        %v1374 = vpop.f32.mrb[0].mxu0
        %v1375 = vadd.f32 %v1154, %v1374
        %v1376 = vpop.f32.mrb[0].mxu0
        %v1377 = vadd.f32 %v1156, %v1376
        %1378 = vmatprep.mubr.f32.mxu0 %v332
        %1379 = vmatmul.mubr.f32.gmra.mrb[0].mxu0 %v331
        %v1380 = vpop.f32.mrb[0].mxu0
        %v1381 = vadd.f32 %v1160, %v1380
        %v1382 = vpop.f32.mrb[0].mxu0
        %v1383 = vadd.f32 %v1162, %v1382
        %1384 = vmatprep.mubr.f32.mxu0 %v338
        %1385 = vmatmul.mubr.f32.gmra.mrb[0].mxu0 %v337
        %v1386 = vpop.f32.mrb[0].mxu0
        %v1387 = vadd.f32 %v1166, %v1386
        %v1388 = vpop.f32.mrb[0].mxu0
        %v1389 = vadd.f32 %v1168, %v1388
        %1390 = vmatprep.mubr.f32.mxu0 %v344
        %1391 = vmatmul.mubr.f32.gmra.mrb[0].mxu0 %v343
        %v1392 = vpop.f32.mrb[0].mxu0
        %v1393 = vadd.f32 %v1172, %v1392
        %v1394 = vpop.f32.mrb[0].mxu0
        %v1395 = vadd.f32 %v1174, %v1394
        %1396 = vmatprep.mubr.f32.mxu0 %v350
        %1397 = vmatmul.mubr.f32.gmra.mrb[0].mxu0 %v349
        %v1398 = vpop.f32.mrb[0].mxu0
        %v1399 = vadd.f32 %v1178, %v1398
        %v1400 = vpop.f32.mrb[0].mxu0
        %v1401 = vadd.f32 %v1180, %v1400
        %1402 = vmatprep.mubr.f32.mxu0 %v356
        %1403 = vmatmul.mubr.f32.gmra.mrb[0].mxu0 %v355
        %v1404 = vpop.f32.mrb[0].mxu0
        %v1405 = vadd.f32 %v1184, %v1404
        %v1406 = vpop.f32.mrb[0].mxu0
        %v1407 = vadd.f32 %v1186, %v1406
        %1408 = vmatprep.mubr.f32.mxu0 %v362
        %1409 = vmatmul.mubr.f32.gmra.mrb[0].mxu0 %v361
        %v1410 = vpop.f32.mrb[0].mxu0
        %v1411 = vadd.f32 %v1190, %v1410
        %v1412 = vpop.f32.mrb[0].mxu0
        %v1413 = vadd.f32 %v1192, %v1412
        %1414 = vmatprep.mubr.f32.mxu0 %v368
        %1415 = vmatmul.mubr.f32.gmra.mrb[0].mxu0 %v367
        %v1416 = vpop.f32.mrb[0].mxu0
        %v1417 = vadd.f32 %v1196, %v1416
        %v1418 = vpop.f32.mrb[0].mxu0
        %v1419 = vadd.f32 %v1198, %v1418
        %1420 = vmatprep.mubr.f32.mxu0 %v374
        %1421 = vmatmul.mubr.f32.gmra.mrb[0].mxu0 %v373
        %v1422 = vpop.f32.mrb[0].mxu0
        %v1423 = vadd.f32 %v1202, %v1422
        %v1424 = vpop.f32.mrb[0].mxu0
        %v1425 = vadd.f32 %v1204, %v1424
        %1426 = vmatprep.mubr.f32.mxu0 %v380
        %1427 = vmatmul.mubr.f32.gmra.mrb[0].mxu0 %v379
        %v1428 = vpop.f32.mrb[0].mxu0
        %v1429 = vadd.f32 %v1208, %v1428
        %v1430 = vpop.f32.mrb[0].mxu0
        %v1431 = vadd.f32 %v1210, %v1430
        %1432 = vmatprep.mubr.f32.mxu0 %v386
        %1433 = vmatmul.mubr.f32.gmra.mrb[0].mxu0 %v385
        %v1434 = vpop.f32.mrb[0].mxu0
        %v1435 = vadd.f32 %v1214, %v1434
        %v1436 = vpop.f32.mrb[0].mxu0
        %v1437 = vadd.f32 %v1216, %v1436
        %1438 = vmatprep.mubr.f32.mxu0 %v392
        %1439 = vmatmul.mubr.f32.gmra.mrb[0].mxu0 %v391
        %v1440 = vpop.f32.mrb[0].mxu0
        %v1441 = vadd.f32 %v1220, %v1440
        %v1442 = vpop.f32.mrb[0].mxu0
        %v1443 = vadd.f32 %v1222, %v1442
        %1444 = vmatprep.mubr.f32.mxu0 %v398
        %1445 = vmatmul.mubr.f32.gmra.mrb[0].mxu0 %v397
        %v1446 = vpop.f32.mrb[0].mxu0
        %v1447 = vadd.f32 %v1226, %v1446
        %v1448 = vpop.f32.mrb[0].mxu0
        %v1449 = vadd.f32 %v1228, %v1448
        %1450 = vmatprep.mubr.f32.mxu0 %v404
        %1451 = vmatmul.mubr.f32.gmra.mrb[0].mxu0 %v403
        %v1452 = vpop.f32.mrb[0].mxu0
        %v1453 = vadd.f32 %v1232, %v1452
        %v1454 = vpop.f32.mrb[0].mxu0
        %v1455 = vadd.f32 %v1234, %v1454
        %1456 = vmatprep.mubr.f32.mxu0 %v410
        %1457 = vmatmul.mubr.f32.gmra.mrb[0].mxu0 %v409
        %v1458 = vpop.f32.mrb[0].mxu0
        %v1459 = vadd.f32 %v1238, %v1458
        %v1460 = vpop.f32.mrb[0].mxu0
        %v1461 = vadd.f32 %v1240, %v1460
        %1462 = vmatprep.mubr.f32.mxu0 %v416
        %1463 = vmatmul.mubr.f32.gmra.mrb[0].mxu0 %v415
        %v1464 = vpop.f32.mrb[0].mxu0
        %v1465 = vadd.f32 %v1244, %v1464
        %v1466 = vpop.f32.mrb[0].mxu0
        %v1467 = vadd.f32 %v1246, %v1466
        %1468 = vmatprep.mubr.f32.mxu0 %v422
        %1469 = vmatmul.mubr.f32.gmra.mrb[0].mxu0 %v421
        %v1470 = vpop.f32.mrb[0].mxu0
        %v1471 = vadd.f32 %v1250, %v1470
        %v1472 = vpop.f32.mrb[0].mxu0
        %v1473 = vadd.f32 %v1252, %v1472
        %1474 = vdwg.mxu0
        %1475 = vmatprep.subr.mxu0 %v810
        %1476 = vmatpush1.msra.mxu0 %v809
        %1477 = vmatprep.subr.mxu0 %v816
        %1478 = vmatpush1.msra.mxu0 %v815
        %1479 = vmatprep.subr.mxu0 %v822
        %1480 = vmatpush1.msra.mxu0 %v821
        %1481 = vmatprep.subr.mxu0 %v828
        %1482 = vmatpush1.msra.mxu0 %v827
        %1483 = vmatprep.subr.mxu0 %v834
        %1484 = vmatpush1.msra.mxu0 %v833
        %1485 = vmatprep.subr.mxu0 %v840
        %1486 = vmatpush1.msra.mxu0 %v839
        %1487 = vmatprep.subr.mxu0 %v846
        %1488 = vmatpush1.msra.mxu0 %v845
        %1489 = vmatprep.subr.mxu0 %v852
        %1490 = vmatpush1.msra.mxu0 %v851
        %1491 = vmatprep.subr.mxu0 %v858
        %1492 = vmatpush1.msra.mxu0 %v857
        %1493 = vmatprep.subr.mxu0 %v864
        %1494 = vmatpush1.msra.mxu0 %v863
        %1495 = vmatprep.subr.mxu0 %v870
        %1496 = vmatpush1.msra.mxu0 %v869
        %1497 = vmatprep.subr.mxu0 %v876
        %1498 = vmatpush1.msra.mxu0 %v875
        %1499 = vmatprep.subr.mxu0 %v882
        %1500 = vmatpush1.msra.mxu0 %v881
        %1501 = vmatprep.subr.mxu0 %v888
        %1502 = vmatpush1.msra.mxu0 %v887
        %1503 = vmatprep.subr.mxu0 %v894
        %1504 = vmatpush1.msra.mxu0 %v893
        %1505 = vmatprep.subr.mxu0 %v900
        %1506 = vmatpush1.msra.mxu0 %v899
        %1507 = vmatprep.subr.mxu0 %v906
        %1508 = vmatpush1.msra.mxu0 %v905
        %1509 = vmatprep.subr.mxu0 %v912
        %1510 = vmatpush1.msra.mxu0 %v911
        %1511 = vmatprep.subr.mxu0 %v918
        %1512 = vmatpush1.msra.mxu0 %v917
        %1513 = vmatprep.subr.mxu0 %v924
        %1514 = vmatpush1.msra.mxu0 %v923
        %1515 = vmatprep.subr.mxu0 %v930
        %1516 = vmatpush1.msra.mxu0 %v929
        %1517 = vmatprep.subr.mxu0 %v936
        %1518 = vmatpush1.msra.mxu0 %v935
        %1519 = vmatprep.subr.mxu0 %v942
        %1520 = vmatpush1.msra.mxu0 %v941
        %1521 = vmatprep.subr.mxu0 %v948
        %1522 = vmatpush1.msra.mxu0 %v947
        %1523 = vmatprep.subr.mxu0 %v954
        %1524 = vmatpush1.msra.mxu0 %v953
        %1525 = vmatprep.subr.mxu0 %v960
        %1526 = vmatpush1.msra.mxu0 %v959
        %1527 = vmatprep.subr.mxu0 %v966
        %1528 = vmatpush1.msra.mxu0 %v965
        %1529 = vmatprep.subr.mxu0 %v972
        %1530 = vmatpush1.msra.mxu0 %v971
        %1531 = vmatprep.subr.mxu0 %v978
        %1532 = vmatpush1.msra.mxu0 %v977
        %1533 = vmatprep.subr.mxu0 %v984
        %1534 = vmatpush1.msra.mxu0 %v983
        %1535 = vmatprep.subr.mxu0 %v990
        %1536 = vmatpush1.msra.mxu0 %v989
        %1537 = vmatprep.subr.mxu0 %v996
        %1538 = vmatpush1.msra.mxu0 %v995
        %1539 = vmatprep.mubr.f32.mxu0 %v274
        %1540 = vmatmul.mubr.f32.gmra.mrb[0].mxu0 %v273
        %v1541 = vpop.f32.mrb[0].mxu0
        %v1542 = vadd.f32 %v1321, %v1541
        %v1543 = vpop.f32.mrb[0].mxu0
        %v1544 = vadd.f32 %v1323, %v1543
        %1545 = vmatprep.mubr.f32.mxu0 %v280
        %1546 = vmatmul.mubr.f32.gmra.mrb[0].mxu0 %v279
        %v1547 = vpop.f32.mrb[0].mxu0
        %v1548 = vadd.f32 %v1327, %v1547
        %v1549 = vpop.f32.mrb[0].mxu0
        %v1550 = vadd.f32 %v1329, %v1549
        %1551 = vmatprep.mubr.f32.mxu0 %v286
        %1552 = vmatmul.mubr.f32.gmra.mrb[0].mxu0 %v285
        %v1553 = vpop.f32.mrb[0].mxu0
        %v1554 = vadd.f32 %v1333, %v1553
        %v1555 = vpop.f32.mrb[0].mxu0
        %v1556 = vadd.f32 %v1335, %v1555
        %1557 = vmatprep.mubr.f32.mxu0 %v292
        %1558 = vmatmul.mubr.f32.gmra.mrb[0].mxu0 %v291
        %v1559 = vpop.f32.mrb[0].mxu0
        %v1560 = vadd.f32 %v1339, %v1559
        %v1561 = vpop.f32.mrb[0].mxu0
        %v1562 = vadd.f32 %v1341, %v1561
        %1563 = vmatprep.mubr.f32.mxu0 %v298
        %1564 = vmatmul.mubr.f32.gmra.mrb[0].mxu0 %v297
        %v1565 = vpop.f32.mrb[0].mxu0
        %v1566 = vadd.f32 %v1345, %v1565
        %v1567 = vpop.f32.mrb[0].mxu0
        %v1568 = vadd.f32 %v1347, %v1567
        %1569 = vmatprep.mubr.f32.mxu0 %v304
        %1570 = vmatmul.mubr.f32.gmra.mrb[0].mxu0 %v303
        %v1571 = vpop.f32.mrb[0].mxu0
        %v1572 = vadd.f32 %v1351, %v1571
        %v1573 = vpop.f32.mrb[0].mxu0
        %v1574 = vadd.f32 %v1353, %v1573
        %1575 = vmatprep.mubr.f32.mxu0 %v310
        %1576 = vmatmul.mubr.f32.gmra.mrb[0].mxu0 %v309
        %v1577 = vpop.f32.mrb[0].mxu0
        %v1578 = vadd.f32 %v1357, %v1577
        %v1579 = vpop.f32.mrb[0].mxu0
        %v1580 = vadd.f32 %v1359, %v1579
        %1581 = vmatprep.mubr.f32.mxu0 %v316
        %1582 = vmatmul.mubr.f32.gmra.mrb[0].mxu0 %v315
        %v1583 = vpop.f32.mrb[0].mxu0
        %v1584 = vadd.f32 %v1363, %v1583
        %v1585 = vpop.f32.mrb[0].mxu0
        %v1586 = vadd.f32 %v1365, %v1585
        %1587 = vmatprep.mubr.f32.mxu0 %v322
        %1588 = vmatmul.mubr.f32.gmra.mrb[0].mxu0 %v321
        %v1589 = vpop.f32.mrb[0].mxu0
        %v1590 = vadd.f32 %v1369, %v1589
        %v1591 = vpop.f32.mrb[0].mxu0
        %v1592 = vadd.f32 %v1371, %v1591
        %1593 = vmatprep.mubr.f32.mxu0 %v328
        %1594 = vmatmul.mubr.f32.gmra.mrb[0].mxu0 %v327
        %v1595 = vpop.f32.mrb[0].mxu0
        %v1596 = vadd.f32 %v1375, %v1595
        %v1597 = vpop.f32.mrb[0].mxu0
        %v1598 = vadd.f32 %v1377, %v1597
        %1599 = vmatprep.mubr.f32.mxu0 %v334
        %1600 = vmatmul.mubr.f32.gmra.mrb[0].mxu0 %v333
        %v1601 = vpop.f32.mrb[0].mxu0
        %v1602 = vadd.f32 %v1381, %v1601
        %v1603 = vpop.f32.mrb[0].mxu0
        %v1604 = vadd.f32 %v1383, %v1603
        %1605 = vmatprep.mubr.f32.mxu0 %v340
        %1606 = vmatmul.mubr.f32.gmra.mrb[0].mxu0 %v339
        %v1607 = vpop.f32.mrb[0].mxu0
        %v1608 = vadd.f32 %v1387, %v1607
        %v1609 = vpop.f32.mrb[0].mxu0
        %v1610 = vadd.f32 %v1389, %v1609
        %1611 = vmatprep.mubr.f32.mxu0 %v346
        %1612 = vmatmul.mubr.f32.gmra.mrb[0].mxu0 %v345
        %v1613 = vpop.f32.mrb[0].mxu0
        %v1614 = vadd.f32 %v1393, %v1613
        %v1615 = vpop.f32.mrb[0].mxu0
        %v1616 = vadd.f32 %v1395, %v1615
        %1617 = vmatprep.mubr.f32.mxu0 %v352
        %1618 = vmatmul.mubr.f32.gmra.mrb[0].mxu0 %v351
        %v1619 = vpop.f32.mrb[0].mxu0
        %v1620 = vadd.f32 %v1399, %v1619
        %v1621 = vpop.f32.mrb[0].mxu0
        %v1622 = vadd.f32 %v1401, %v1621
        %1623 = vmatprep.mubr.f32.mxu0 %v358
        %1624 = vmatmul.mubr.f32.gmra.mrb[0].mxu0 %v357
        %v1625 = vpop.f32.mrb[0].mxu0
        %v1626 = vadd.f32 %v1405, %v1625
        %v1627 = vpop.f32.mrb[0].mxu0
        %v1628 = vadd.f32 %v1407, %v1627
        %1629 = vmatprep.mubr.f32.mxu0 %v364
        %1630 = vmatmul.mubr.f32.gmra.mrb[0].mxu0 %v363
        %v1631 = vpop.f32.mrb[0].mxu0
        %v1632 = vadd.f32 %v1411, %v1631
        %v1633 = vpop.f32.mrb[0].mxu0
        %v1634 = vadd.f32 %v1413, %v1633
        %1635 = vmatprep.mubr.f32.mxu0 %v370
        %1636 = vmatmul.mubr.f32.gmra.mrb[0].mxu0 %v369
        %v1637 = vpop.f32.mrb[0].mxu0
        %v1638 = vadd.f32 %v1417, %v1637
        %v1639 = vpop.f32.mrb[0].mxu0
        %v1640 = vadd.f32 %v1419, %v1639
        %1641 = vmatprep.mubr.f32.mxu0 %v376
        %1642 = vmatmul.mubr.f32.gmra.mrb[0].mxu0 %v375
        %v1643 = vpop.f32.mrb[0].mxu0
        %v1644 = vadd.f32 %v1423, %v1643
        %v1645 = vpop.f32.mrb[0].mxu0
        %v1646 = vadd.f32 %v1425, %v1645
        %1647 = vmatprep.mubr.f32.mxu0 %v382
        %1648 = vmatmul.mubr.f32.gmra.mrb[0].mxu0 %v381
        %v1649 = vpop.f32.mrb[0].mxu0
        %v1650 = vadd.f32 %v1429, %v1649
        %v1651 = vpop.f32.mrb[0].mxu0
        %v1652 = vadd.f32 %v1431, %v1651
        %1653 = vmatprep.mubr.f32.mxu0 %v388
        %1654 = vmatmul.mubr.f32.gmra.mrb[0].mxu0 %v387
        %v1655 = vpop.f32.mrb[0].mxu0
        %v1656 = vadd.f32 %v1435, %v1655
        %v1657 = vpop.f32.mrb[0].mxu0
        %v1658 = vadd.f32 %v1437, %v1657
        %1659 = vmatprep.mubr.f32.mxu0 %v394
        %1660 = vmatmul.mubr.f32.gmra.mrb[0].mxu0 %v393
        %v1661 = vpop.f32.mrb[0].mxu0
        %v1662 = vadd.f32 %v1441, %v1661
        %v1663 = vpop.f32.mrb[0].mxu0
        %v1664 = vadd.f32 %v1443, %v1663
        %1665 = vmatprep.mubr.f32.mxu0 %v400
        %1666 = vmatmul.mubr.f32.gmra.mrb[0].mxu0 %v399
        %v1667 = vpop.f32.mrb[0].mxu0
        %v1668 = vadd.f32 %v1447, %v1667
        %v1669 = vpop.f32.mrb[0].mxu0
        %v1670 = vadd.f32 %v1449, %v1669
        %1671 = vmatprep.mubr.f32.mxu0 %v406
        %1672 = vmatmul.mubr.f32.gmra.mrb[0].mxu0 %v405
        %v1673 = vpop.f32.mrb[0].mxu0
        %v1674 = vadd.f32 %v1453, %v1673
        %v1675 = vpop.f32.mrb[0].mxu0
        %v1676 = vadd.f32 %v1455, %v1675
        %1677 = vmatprep.mubr.f32.mxu0 %v412
        %1678 = vmatmul.mubr.f32.gmra.mrb[0].mxu0 %v411
        %v1679 = vpop.f32.mrb[0].mxu0
        %v1680 = vadd.f32 %v1459, %v1679
        %v1681 = vpop.f32.mrb[0].mxu0
        %v1682 = vadd.f32 %v1461, %v1681
        %1683 = vmatprep.mubr.f32.mxu0 %v418
        %1684 = vmatmul.mubr.f32.gmra.mrb[0].mxu0 %v417
        %v1685 = vpop.f32.mrb[0].mxu0
        %v1686 = vadd.f32 %v1465, %v1685
        %v1687 = vpop.f32.mrb[0].mxu0
        %v1688 = vadd.f32 %v1467, %v1687
        %1689 = vmatprep.mubr.f32.mxu0 %v424
        %1690 = vmatmul.mubr.f32.gmra.mrb[0].mxu0 %v423
        %v1691 = vpop.f32.mrb[0].mxu0
        %v1692 = vadd.f32 %v1471, %v1691
        %v1693 = vpop.f32.mrb[0].mxu0
        %v1694 = vadd.f32 %v1473, %v1693
        %1695 = vdwg.mxu0
        %1696 = vmatprep.subr.mxu0 %v428
        %1697 = vmatpush1.msra.mxu0 %v427
        %1698 = vmatprep.subr.mxu0 %v434
        %1699 = vmatpush1.msra.mxu0 %v433
        %1700 = vmatprep.subr.mxu0 %v440
        %1701 = vmatpush1.msra.mxu0 %v439
        %1702 = vmatprep.subr.mxu0 %v446
        %1703 = vmatpush1.msra.mxu0 %v445
        %1704 = vmatprep.subr.mxu0 %v452
        %1705 = vmatpush1.msra.mxu0 %v451
        %1706 = vmatprep.subr.mxu0 %v458
        %1707 = vmatpush1.msra.mxu0 %v457
        %1708 = vmatprep.subr.mxu0 %v464
        %1709 = vmatpush1.msra.mxu0 %v463
        %1710 = vmatprep.subr.mxu0 %v470
        %1711 = vmatpush1.msra.mxu0 %v469
        %1712 = vmatprep.subr.mxu0 %v476
        %1713 = vmatpush1.msra.mxu0 %v475
        %1714 = vmatprep.subr.mxu0 %v482
        %1715 = vmatpush1.msra.mxu0 %v481
        %1716 = vmatprep.subr.mxu0 %v488
        %1717 = vmatpush1.msra.mxu0 %v487
        %1718 = vmatprep.subr.mxu0 %v494
        %1719 = vmatpush1.msra.mxu0 %v493
        %1720 = vmatprep.subr.mxu0 %v500
        %1721 = vmatpush1.msra.mxu0 %v499
        %1722 = vmatprep.subr.mxu0 %v506
        %1723 = vmatpush1.msra.mxu0 %v505
        %1724 = vmatprep.subr.mxu0 %v512
        %1725 = vmatpush1.msra.mxu0 %v511
        %1726 = vmatprep.subr.mxu0 %v518
        %1727 = vmatpush1.msra.mxu0 %v517
        %1728 = vmatprep.subr.mxu0 %v524
        %1729 = vmatpush1.msra.mxu0 %v523
        %1730 = vmatprep.subr.mxu0 %v530
        %1731 = vmatpush1.msra.mxu0 %v529
        %1732 = vmatprep.subr.mxu0 %v536
        %1733 = vmatpush1.msra.mxu0 %v535
        %1734 = vmatprep.subr.mxu0 %v542
        %1735 = vmatpush1.msra.mxu0 %v541
        %1736 = vmatprep.subr.mxu0 %v548
        %1737 = vmatpush1.msra.mxu0 %v547
        %1738 = vmatprep.subr.mxu0 %v554
        %1739 = vmatpush1.msra.mxu0 %v553
        %1740 = vmatprep.subr.mxu0 %v560
        %1741 = vmatpush1.msra.mxu0 %v559
        %1742 = vmatprep.subr.mxu0 %v566
        %1743 = vmatpush1.msra.mxu0 %v565
        %1744 = vmatprep.subr.mxu0 %v572
        %1745 = vmatpush1.msra.mxu0 %v571
        %1746 = vmatprep.subr.mxu0 %v578
        %1747 = vmatpush1.msra.mxu0 %v577
        %1748 = vmatprep.subr.mxu0 %v584
        %1749 = vmatpush1.msra.mxu0 %v583
        %1750 = vmatprep.subr.mxu0 %v590
        %1751 = vmatpush1.msra.mxu0 %v589
        %1752 = vmatprep.subr.mxu0 %v596
        %1753 = vmatpush1.msra.mxu0 %v595
        %1754 = vmatprep.subr.mxu0 %v602
        %1755 = vmatpush1.msra.mxu0 %v601
        %1756 = vmatprep.subr.mxu0 %v608
        %1757 = vmatpush1.msra.mxu0 %v607
        %1758 = vmatprep.subr.mxu0 %v614
        %1759 = vmatpush1.msra.mxu0 %v613
        %1760 = vmatprep.mubr.f32.mxu0 %v270
        %1761 = vmatmul.mubr.f32.gmra.mrb[0].mxu0 %v269
        %v1762 = vpop.f32.mrb[0].mxu0
        %v1763 = vadd.f32 %v1014, %v1762
        %v1764 = vpop.f32.mrb[0].mxu0
        %v1765 = vadd.f32 %v1018, %v1764
        %1766 = vmatprep.mubr.f32.mxu0 %v276
        %1767 = vmatmul.mubr.f32.gmra.mrb[0].mxu0 %v275
        %v1768 = vpop.f32.mrb[0].mxu0
        %v1769 = vadd.f32 %v1014, %v1768
        %v1770 = vpop.f32.mrb[0].mxu0
        %v1771 = vadd.f32 %v1018, %v1770
        %1772 = vmatprep.mubr.f32.mxu0 %v282
        %1773 = vmatmul.mubr.f32.gmra.mrb[0].mxu0 %v281
        %v1774 = vpop.f32.mrb[0].mxu0
        %v1775 = vadd.f32 %v1014, %v1774
        %v1776 = vpop.f32.mrb[0].mxu0
        %v1777 = vadd.f32 %v1018, %v1776
        %1778 = vmatprep.mubr.f32.mxu0 %v288
        %1779 = vmatmul.mubr.f32.gmra.mrb[0].mxu0 %v287
        %v1780 = vpop.f32.mrb[0].mxu0
        %v1781 = vadd.f32 %v1014, %v1780
        %v1782 = vpop.f32.mrb[0].mxu0
        %v1783 = vadd.f32 %v1018, %v1782
        %1784 = vmatprep.mubr.f32.mxu0 %v294
        %1785 = vmatmul.mubr.f32.gmra.mrb[0].mxu0 %v293
        %v1786 = vpop.f32.mrb[0].mxu0
        %v1787 = vadd.f32 %v1014, %v1786
        %v1788 = vpop.f32.mrb[0].mxu0
        %v1789 = vadd.f32 %v1018, %v1788
        %1790 = vmatprep.mubr.f32.mxu0 %v300
        %1791 = vmatmul.mubr.f32.gmra.mrb[0].mxu0 %v299
        %v1792 = vpop.f32.mrb[0].mxu0
        %v1793 = vadd.f32 %v1014, %v1792
        %v1794 = vpop.f32.mrb[0].mxu0
        %v1795 = vadd.f32 %v1018, %v1794
        %1796 = vmatprep.mubr.f32.mxu0 %v306
        %1797 = vmatmul.mubr.f32.gmra.mrb[0].mxu0 %v305
        %v1798 = vpop.f32.mrb[0].mxu0
        %v1799 = vadd.f32 %v1014, %v1798
        %v1800 = vpop.f32.mrb[0].mxu0
        %v1801 = vadd.f32 %v1018, %v1800
        %1802 = vmatprep.mubr.f32.mxu0 %v312
        %1803 = vmatmul.mubr.f32.gmra.mrb[0].mxu0 %v311
        %v1804 = vpop.f32.mrb[0].mxu0
        %v1805 = vadd.f32 %v1014, %v1804
        %v1806 = vpop.f32.mrb[0].mxu0
        %v1807 = vadd.f32 %v1018, %v1806
        %1808 = vmatprep.mubr.f32.mxu0 %v318
        %1809 = vmatmul.mubr.f32.gmra.mrb[0].mxu0 %v317
        %v1810 = vpop.f32.mrb[0].mxu0
        %v1811 = vadd.f32 %v1014, %v1810
        %v1812 = vpop.f32.mrb[0].mxu0
        %v1813 = vadd.f32 %v1018, %v1812
        %1814 = vmatprep.mubr.f32.mxu0 %v324
        %1815 = vmatmul.mubr.f32.gmra.mrb[0].mxu0 %v323
        %v1816 = vpop.f32.mrb[0].mxu0
        %v1817 = vadd.f32 %v1014, %v1816
        %v1818 = vpop.f32.mrb[0].mxu0
        %v1819 = vadd.f32 %v1018, %v1818
        %1820 = vmatprep.mubr.f32.mxu0 %v330
        %1821 = vmatmul.mubr.f32.gmra.mrb[0].mxu0 %v329
        %v1822 = vpop.f32.mrb[0].mxu0
        %v1823 = vadd.f32 %v1014, %v1822
        %v1824 = vpop.f32.mrb[0].mxu0
        %v1825 = vadd.f32 %v1018, %v1824
        %1826 = vmatprep.mubr.f32.mxu0 %v336
        %1827 = vmatmul.mubr.f32.gmra.mrb[0].mxu0 %v335
        %v1828 = vpop.f32.mrb[0].mxu0
        %v1829 = vadd.f32 %v1014, %v1828
        %v1830 = vpop.f32.mrb[0].mxu0
        %v1831 = vadd.f32 %v1018, %v1830
        %1832 = vmatprep.mubr.f32.mxu0 %v342
        %1833 = vmatmul.mubr.f32.gmra.mrb[0].mxu0 %v341
        %v1834 = vpop.f32.mrb[0].mxu0
        %v1835 = vadd.f32 %v1014, %v1834
        %v1836 = vpop.f32.mrb[0].mxu0
        %v1837 = vadd.f32 %v1018, %v1836
        %1838 = vmatprep.mubr.f32.mxu0 %v348
        %1839 = vmatmul.mubr.f32.gmra.mrb[0].mxu0 %v347
        %v1840 = vpop.f32.mrb[0].mxu0
        %v1841 = vadd.f32 %v1014, %v1840
        %v1842 = vpop.f32.mrb[0].mxu0
        %v1843 = vadd.f32 %v1018, %v1842
        %1844 = vmatprep.mubr.f32.mxu0 %v354
        %1845 = vmatmul.mubr.f32.gmra.mrb[0].mxu0 %v353
        %v1846 = vpop.f32.mrb[0].mxu0
        %v1847 = vadd.f32 %v1014, %v1846
        %v1848 = vpop.f32.mrb[0].mxu0
        %v1849 = vadd.f32 %v1018, %v1848
        %1850 = vmatprep.mubr.f32.mxu0 %v360
        %1851 = vmatmul.mubr.f32.gmra.mrb[0].mxu0 %v359
        %v1852 = vpop.f32.mrb[0].mxu0
        %v1853 = vadd.f32 %v1014, %v1852
        %v1854 = vpop.f32.mrb[0].mxu0
        %v1855 = vadd.f32 %v1018, %v1854
        %1856 = vmatprep.mubr.f32.mxu0 %v366
        %1857 = vmatmul.mubr.f32.gmra.mrb[0].mxu0 %v365
        %v1858 = vpop.f32.mrb[0].mxu0
        %v1859 = vadd.f32 %v1014, %v1858
        %v1860 = vpop.f32.mrb[0].mxu0
        %v1861 = vadd.f32 %v1018, %v1860
        %1862 = vmatprep.mubr.f32.mxu0 %v372
        %1863 = vmatmul.mubr.f32.gmra.mrb[0].mxu0 %v371
        %v1864 = vpop.f32.mrb[0].mxu0
        %v1865 = vadd.f32 %v1014, %v1864
        %v1866 = vpop.f32.mrb[0].mxu0
        %v1867 = vadd.f32 %v1018, %v1866
        %1868 = vmatprep.mubr.f32.mxu0 %v378
        %1869 = vmatmul.mubr.f32.gmra.mrb[0].mxu0 %v377
        %v1870 = vpop.f32.mrb[0].mxu0
        %v1871 = vadd.f32 %v1014, %v1870
        %v1872 = vpop.f32.mrb[0].mxu0
        %v1873 = vadd.f32 %v1018, %v1872
        %1874 = vmatprep.mubr.f32.mxu0 %v384
        %1875 = vmatmul.mubr.f32.gmra.mrb[0].mxu0 %v383
        %v1876 = vpop.f32.mrb[0].mxu0
        %v1877 = vadd.f32 %v1014, %v1876
        %v1878 = vpop.f32.mrb[0].mxu0
        %v1879 = vadd.f32 %v1018, %v1878
        %1880 = vmatprep.mubr.f32.mxu0 %v390
        %1881 = vmatmul.mubr.f32.gmra.mrb[0].mxu0 %v389
        %v1882 = vpop.f32.mrb[0].mxu0
        %v1883 = vadd.f32 %v1014, %v1882
        %v1884 = vpop.f32.mrb[0].mxu0
        %v1885 = vadd.f32 %v1018, %v1884
        %1886 = vmatprep.mubr.f32.mxu0 %v396
        %1887 = vmatmul.mubr.f32.gmra.mrb[0].mxu0 %v395
        %v1888 = vpop.f32.mrb[0].mxu0
        %v1889 = vadd.f32 %v1014, %v1888
        %v1890 = vpop.f32.mrb[0].mxu0
        %v1891 = vadd.f32 %v1018, %v1890
        %1892 = vmatprep.mubr.f32.mxu0 %v402
        %1893 = vmatmul.mubr.f32.gmra.mrb[0].mxu0 %v401
        %v1894 = vpop.f32.mrb[0].mxu0
        %v1895 = vadd.f32 %v1014, %v1894
        %v1896 = vpop.f32.mrb[0].mxu0
        %v1897 = vadd.f32 %v1018, %v1896
        %1898 = vmatprep.mubr.f32.mxu0 %v408
        %1899 = vmatmul.mubr.f32.gmra.mrb[0].mxu0 %v407
        %v1900 = vpop.f32.mrb[0].mxu0
        %v1901 = vadd.f32 %v1014, %v1900
        %v1902 = vpop.f32.mrb[0].mxu0
        %v1903 = vadd.f32 %v1018, %v1902
        %1904 = vmatprep.mubr.f32.mxu0 %v414
        %1905 = vmatmul.mubr.f32.gmra.mrb[0].mxu0 %v413
        %v1906 = vpop.f32.mrb[0].mxu0
        %v1907 = vadd.f32 %v1014, %v1906
        %v1908 = vpop.f32.mrb[0].mxu0
        %v1909 = vadd.f32 %v1018, %v1908
        %1910 = vmatprep.mubr.f32.mxu0 %v420
        %1911 = vmatmul.mubr.f32.gmra.mrb[0].mxu0 %v419
        %v1912 = vpop.f32.mrb[0].mxu0
        %v1913 = vadd.f32 %v1014, %v1912
        %v1914 = vpop.f32.mrb[0].mxu0
        %v1915 = vadd.f32 %v1018, %v1914
        %1916 = vdwg.mxu0
        %1917 = vmatprep.subr.mxu0 %v620
        %1918 = vmatpush1.msra.mxu0 %v619
        %1919 = vmatprep.subr.mxu0 %v626
        %1920 = vmatpush1.msra.mxu0 %v625
        %1921 = vmatprep.subr.mxu0 %v632
        %1922 = vmatpush1.msra.mxu0 %v631
        %1923 = vmatprep.subr.mxu0 %v638
        %1924 = vmatpush1.msra.mxu0 %v637
        %1925 = vmatprep.subr.mxu0 %v644
        %1926 = vmatpush1.msra.mxu0 %v643
        %1927 = vmatprep.subr.mxu0 %v650
        %1928 = vmatpush1.msra.mxu0 %v649
        %1929 = vmatprep.subr.mxu0 %v656
        %1930 = vmatpush1.msra.mxu0 %v655
        %1931 = vmatprep.subr.mxu0 %v662
        %1932 = vmatpush1.msra.mxu0 %v661
        %1933 = vmatprep.subr.mxu0 %v668
        %1934 = vmatpush1.msra.mxu0 %v667
        %1935 = vmatprep.subr.mxu0 %v674
        %1936 = vmatpush1.msra.mxu0 %v673
        %1937 = vmatprep.subr.mxu0 %v680
        %1938 = vmatpush1.msra.mxu0 %v679
        %1939 = vmatprep.subr.mxu0 %v686
        %1940 = vmatpush1.msra.mxu0 %v685
        %1941 = vmatprep.subr.mxu0 %v692
        %1942 = vmatpush1.msra.mxu0 %v691
        %1943 = vmatprep.subr.mxu0 %v698
        %1944 = vmatpush1.msra.mxu0 %v697
        %1945 = vmatprep.subr.mxu0 %v704
        %1946 = vmatpush1.msra.mxu0 %v703
        %1947 = vmatprep.subr.mxu0 %v710
        %1948 = vmatpush1.msra.mxu0 %v709
        %1949 = vmatprep.subr.mxu0 %v716
        %1950 = vmatpush1.msra.mxu0 %v715
        %1951 = vmatprep.subr.mxu0 %v722
        %1952 = vmatpush1.msra.mxu0 %v721
        %1953 = vmatprep.subr.mxu0 %v728
        %1954 = vmatpush1.msra.mxu0 %v727
        %1955 = vmatprep.subr.mxu0 %v734
        %1956 = vmatpush1.msra.mxu0 %v733
        %1957 = vmatprep.subr.mxu0 %v740
        %1958 = vmatpush1.msra.mxu0 %v739
        %1959 = vmatprep.subr.mxu0 %v746
        %1960 = vmatpush1.msra.mxu0 %v745
        %1961 = vmatprep.subr.mxu0 %v752
        %1962 = vmatpush1.msra.mxu0 %v751
        %1963 = vmatprep.subr.mxu0 %v758
        %1964 = vmatpush1.msra.mxu0 %v757
        %1965 = vmatprep.subr.mxu0 %v764
        %1966 = vmatpush1.msra.mxu0 %v763
        %1967 = vmatprep.subr.mxu0 %v770
        %1968 = vmatpush1.msra.mxu0 %v769
        %1969 = vmatprep.subr.mxu0 %v776
        %1970 = vmatpush1.msra.mxu0 %v775
        %1971 = vmatprep.subr.mxu0 %v782
        %1972 = vmatpush1.msra.mxu0 %v781
        %1973 = vmatprep.subr.mxu0 %v788
        %1974 = vmatpush1.msra.mxu0 %v787
        %1975 = vmatprep.subr.mxu0 %v794
        %1976 = vmatpush1.msra.mxu0 %v793
        %1977 = vmatprep.subr.mxu0 %v800
        %1978 = vmatpush1.msra.mxu0 %v799
        %1979 = vmatprep.subr.mxu0 %v806
        %1980 = vmatpush1.msra.mxu0 %v805
        %1981 = vmatprep.mubr.f32.mxu0 %v272
        %1982 = vmatmul.mubr.f32.gmra.mrb[0].mxu0 %v271
        %v1983 = vpop.f32.mrb[0].mxu0
        %v1984 = vadd.f32 %v1763, %v1983
        %v1985 = vpop.f32.mrb[0].mxu0
        %v1986 = vadd.f32 %v1765, %v1985
        %1987 = vmatprep.mubr.f32.mxu0 %v278
        %1988 = vmatmul.mubr.f32.gmra.mrb[0].mxu0 %v277
        %v1989 = vpop.f32.mrb[0].mxu0
        %v1990 = vadd.f32 %v1769, %v1989
        %v1991 = vpop.f32.mrb[0].mxu0
        %v1992 = vadd.f32 %v1771, %v1991
        %1993 = vmatprep.mubr.f32.mxu0 %v284
        %1994 = vmatmul.mubr.f32.gmra.mrb[0].mxu0 %v283
        %v1995 = vpop.f32.mrb[0].mxu0
        %v1996 = vadd.f32 %v1775, %v1995
        %v1997 = vpop.f32.mrb[0].mxu0
        %v1998 = vadd.f32 %v1777, %v1997
        %1999 = vmatprep.mubr.f32.mxu0 %v290
        %2000 = vmatmul.mubr.f32.gmra.mrb[0].mxu0 %v289
        %v2001 = vpop.f32.mrb[0].mxu0
        %v2002 = vadd.f32 %v1781, %v2001
        %v2003 = vpop.f32.mrb[0].mxu0
        %v2004 = vadd.f32 %v1783, %v2003
        %2005 = vmatprep.mubr.f32.mxu0 %v296
        %2006 = vmatmul.mubr.f32.gmra.mrb[0].mxu0 %v295
        %v2007 = vpop.f32.mrb[0].mxu0
        %v2008 = vadd.f32 %v1787, %v2007
        %v2009 = vpop.f32.mrb[0].mxu0
        %v2010 = vadd.f32 %v1789, %v2009
        %2011 = vmatprep.mubr.f32.mxu0 %v302
        %2012 = vmatmul.mubr.f32.gmra.mrb[0].mxu0 %v301
        %v2013 = vpop.f32.mrb[0].mxu0
        %v2014 = vadd.f32 %v1793, %v2013
        %v2015 = vpop.f32.mrb[0].mxu0
        %v2016 = vadd.f32 %v1795, %v2015
        %2017 = vmatprep.mubr.f32.mxu0 %v308
        %2018 = vmatmul.mubr.f32.gmra.mrb[0].mxu0 %v307
        %v2019 = vpop.f32.mrb[0].mxu0
        %v2020 = vadd.f32 %v1799, %v2019
        %v2021 = vpop.f32.mrb[0].mxu0
        %v2022 = vadd.f32 %v1801, %v2021
        %2023 = vmatprep.mubr.f32.mxu0 %v314
        %2024 = vmatmul.mubr.f32.gmra.mrb[0].mxu0 %v313
        %v2025 = vpop.f32.mrb[0].mxu0
        %v2026 = vadd.f32 %v1805, %v2025
        %v2027 = vpop.f32.mrb[0].mxu0
        %v2028 = vadd.f32 %v1807, %v2027
        %2029 = vmatprep.mubr.f32.mxu0 %v320
        %2030 = vmatmul.mubr.f32.gmra.mrb[0].mxu0 %v319
        %v2031 = vpop.f32.mrb[0].mxu0
        %v2032 = vadd.f32 %v1811, %v2031
        %v2033 = vpop.f32.mrb[0].mxu0
        %v2034 = vadd.f32 %v1813, %v2033
        %2035 = vmatprep.mubr.f32.mxu0 %v326
        %2036 = vmatmul.mubr.f32.gmra.mrb[0].mxu0 %v325
        %v2037 = vpop.f32.mrb[0].mxu0
        %v2038 = vadd.f32 %v1817, %v2037
        %v2039 = vpop.f32.mrb[0].mxu0
        %v2040 = vadd.f32 %v1819, %v2039
        %2041 = vmatprep.mubr.f32.mxu0 %v332
        %2042 = vmatmul.mubr.f32.gmra.mrb[0].mxu0 %v331
        %v2043 = vpop.f32.mrb[0].mxu0
        %v2044 = vadd.f32 %v1823, %v2043
        %v2045 = vpop.f32.mrb[0].mxu0
        %v2046 = vadd.f32 %v1825, %v2045
        %2047 = vmatprep.mubr.f32.mxu0 %v338
        %2048 = vmatmul.mubr.f32.gmra.mrb[0].mxu0 %v337
        %v2049 = vpop.f32.mrb[0].mxu0
        %v2050 = vadd.f32 %v1829, %v2049
        %v2051 = vpop.f32.mrb[0].mxu0
        %v2052 = vadd.f32 %v1831, %v2051
        %2053 = vmatprep.mubr.f32.mxu0 %v344
        %2054 = vmatmul.mubr.f32.gmra.mrb[0].mxu0 %v343
        %v2055 = vpop.f32.mrb[0].mxu0
        %v2056 = vadd.f32 %v1835, %v2055
        %v2057 = vpop.f32.mrb[0].mxu0
        %v2058 = vadd.f32 %v1837, %v2057
        %2059 = vmatprep.mubr.f32.mxu0 %v350
        %2060 = vmatmul.mubr.f32.gmra.mrb[0].mxu0 %v349
        %v2061 = vpop.f32.mrb[0].mxu0
        %v2062 = vadd.f32 %v1841, %v2061
        %v2063 = vpop.f32.mrb[0].mxu0
        %v2064 = vadd.f32 %v1843, %v2063
        %2065 = vmatprep.mubr.f32.mxu0 %v356
        %2066 = vmatmul.mubr.f32.gmra.mrb[0].mxu0 %v355
        %v2067 = vpop.f32.mrb[0].mxu0
        %v2068 = vadd.f32 %v1847, %v2067
        %v2069 = vpop.f32.mrb[0].mxu0
        %v2070 = vadd.f32 %v1849, %v2069
        %2071 = vmatprep.mubr.f32.mxu0 %v362
        %2072 = vmatmul.mubr.f32.gmra.mrb[0].mxu0 %v361
        %v2073 = vpop.f32.mrb[0].mxu0
        %v2074 = vadd.f32 %v1853, %v2073
        %v2075 = vpop.f32.mrb[0].mxu0
        %v2076 = vadd.f32 %v1855, %v2075
        %2077 = vmatprep.mubr.f32.mxu0 %v368
        %2078 = vmatmul.mubr.f32.gmra.mrb[0].mxu0 %v367
        %v2079 = vpop.f32.mrb[0].mxu0
        %v2080 = vadd.f32 %v1859, %v2079
        %v2081 = vpop.f32.mrb[0].mxu0
        %v2082 = vadd.f32 %v1861, %v2081
        %2083 = vmatprep.mubr.f32.mxu0 %v374
        %2084 = vmatmul.mubr.f32.gmra.mrb[0].mxu0 %v373
        %v2085 = vpop.f32.mrb[0].mxu0
        %v2086 = vadd.f32 %v1865, %v2085
        %v2087 = vpop.f32.mrb[0].mxu0
        %v2088 = vadd.f32 %v1867, %v2087
        %2089 = vmatprep.mubr.f32.mxu0 %v380
        %2090 = vmatmul.mubr.f32.gmra.mrb[0].mxu0 %v379
        %v2091 = vpop.f32.mrb[0].mxu0
        %v2092 = vadd.f32 %v1871, %v2091
        %v2093 = vpop.f32.mrb[0].mxu0
        %v2094 = vadd.f32 %v1873, %v2093
        %2095 = vmatprep.mubr.f32.mxu0 %v386
        %2096 = vmatmul.mubr.f32.gmra.mrb[0].mxu0 %v385
        %v2097 = vpop.f32.mrb[0].mxu0
        %v2098 = vadd.f32 %v1877, %v2097
        %v2099 = vpop.f32.mrb[0].mxu0
        %v2100 = vadd.f32 %v1879, %v2099
        %2101 = vmatprep.mubr.f32.mxu0 %v392
        %2102 = vmatmul.mubr.f32.gmra.mrb[0].mxu0 %v391
        %v2103 = vpop.f32.mrb[0].mxu0
        %v2104 = vadd.f32 %v1883, %v2103
        %v2105 = vpop.f32.mrb[0].mxu0
        %v2106 = vadd.f32 %v1885, %v2105
        %2107 = vmatprep.mubr.f32.mxu0 %v398
        %2108 = vmatmul.mubr.f32.gmra.mrb[0].mxu0 %v397
        %v2109 = vpop.f32.mrb[0].mxu0
        %v2110 = vadd.f32 %v1889, %v2109
        %v2111 = vpop.f32.mrb[0].mxu0
        %v2112 = vadd.f32 %v1891, %v2111
        %2113 = vmatprep.mubr.f32.mxu0 %v404
        %2114 = vmatmul.mubr.f32.gmra.mrb[0].mxu0 %v403
        %v2115 = vpop.f32.mrb[0].mxu0
        %v2116 = vadd.f32 %v1895, %v2115
        %v2117 = vpop.f32.mrb[0].mxu0
        %v2118 = vadd.f32 %v1897, %v2117
        %2119 = vmatprep.mubr.f32.mxu0 %v410
        %2120 = vmatmul.mubr.f32.gmra.mrb[0].mxu0 %v409
        %v2121 = vpop.f32.mrb[0].mxu0
        %v2122 = vadd.f32 %v1901, %v2121
        %v2123 = vpop.f32.mrb[0].mxu0
        %v2124 = vadd.f32 %v1903, %v2123
        %2125 = vmatprep.mubr.f32.mxu0 %v416
        %2126 = vmatmul.mubr.f32.gmra.mrb[0].mxu0 %v415
        %v2127 = vpop.f32.mrb[0].mxu0
        %v2128 = vadd.f32 %v1907, %v2127
        %v2129 = vpop.f32.mrb[0].mxu0
        %v2130 = vadd.f32 %v1909, %v2129
        %2131 = vmatprep.mubr.f32.mxu0 %v422
        %2132 = vmatmul.mubr.f32.gmra.mrb[0].mxu0 %v421
        %v2133 = vpop.f32.mrb[0].mxu0
        %v2134 = vadd.f32 %v1913, %v2133
        %v2135 = vpop.f32.mrb[0].mxu0
        %v2136 = vadd.f32 %v1915, %v2135
        %2137 = vdwg.mxu0
        %2138 = vmatprep.subr.mxu0 %v812
        %2139 = vmatpush1.msra.mxu0 %v811
        %2140 = vmatprep.subr.mxu0 %v818
        %2141 = vmatpush1.msra.mxu0 %v817
        %2142 = vmatprep.subr.mxu0 %v824
        %2143 = vmatpush1.msra.mxu0 %v823
        %2144 = vmatprep.subr.mxu0 %v830
        %2145 = vmatpush1.msra.mxu0 %v829
        %2146 = vmatprep.subr.mxu0 %v836
        %2147 = vmatpush1.msra.mxu0 %v835
        %2148 = vmatprep.subr.mxu0 %v842
        %2149 = vmatpush1.msra.mxu0 %v841
        %2150 = vmatprep.subr.mxu0 %v848
        %2151 = vmatpush1.msra.mxu0 %v847
        %2152 = vmatprep.subr.mxu0 %v854
        %2153 = vmatpush1.msra.mxu0 %v853
        %2154 = vmatprep.subr.mxu0 %v860
        %2155 = vmatpush1.msra.mxu0 %v859
        %2156 = vmatprep.subr.mxu0 %v866
        %2157 = vmatpush1.msra.mxu0 %v865
        %2158 = vmatprep.subr.mxu0 %v872
        %2159 = vmatpush1.msra.mxu0 %v871
        %2160 = vmatprep.subr.mxu0 %v878
        %2161 = vmatpush1.msra.mxu0 %v877
        %2162 = vmatprep.subr.mxu0 %v884
        %2163 = vmatpush1.msra.mxu0 %v883
        %2164 = vmatprep.subr.mxu0 %v890
        %2165 = vmatpush1.msra.mxu0 %v889
        %2166 = vmatprep.subr.mxu0 %v896
        %2167 = vmatpush1.msra.mxu0 %v895
        %2168 = vmatprep.subr.mxu0 %v902
        %2169 = vmatpush1.msra.mxu0 %v901
        %2170 = vmatprep.subr.mxu0 %v908
        %2171 = vmatpush1.msra.mxu0 %v907
        %2172 = vmatprep.subr.mxu0 %v914
        %2173 = vmatpush1.msra.mxu0 %v913
        %2174 = vmatprep.subr.mxu0 %v920
        %2175 = vmatpush1.msra.mxu0 %v919
        %2176 = vmatprep.subr.mxu0 %v926
        %2177 = vmatpush1.msra.mxu0 %v925
        %2178 = vmatprep.subr.mxu0 %v932
        %2179 = vmatpush1.msra.mxu0 %v931
        %2180 = vmatprep.subr.mxu0 %v938
        %2181 = vmatpush1.msra.mxu0 %v937
        %2182 = vmatprep.subr.mxu0 %v944
        %2183 = vmatpush1.msra.mxu0 %v943
        %2184 = vmatprep.subr.mxu0 %v950
        %2185 = vmatpush1.msra.mxu0 %v949
        %2186 = vmatprep.subr.mxu0 %v956
        %2187 = vmatpush1.msra.mxu0 %v955
        %2188 = vmatprep.subr.mxu0 %v962
        %2189 = vmatpush1.msra.mxu0 %v961
        %2190 = vmatprep.subr.mxu0 %v968
        %2191 = vmatpush1.msra.mxu0 %v967
        %2192 = vmatprep.subr.mxu0 %v974
        %2193 = vmatpush1.msra.mxu0 %v973
        %2194 = vmatprep.subr.mxu0 %v980
        %2195 = vmatpush1.msra.mxu0 %v979
        %2196 = vmatprep.subr.mxu0 %v986
        %2197 = vmatpush1.msra.mxu0 %v985
        %2198 = vmatprep.subr.mxu0 %v992
        %2199 = vmatpush1.msra.mxu0 %v991
        %2200 = vmatprep.subr.mxu0 %v998
        %2201 = vmatpush1.msra.mxu0 %v997
        %2202 = vmatprep.mubr.f32.mxu0 %v274
        %2203 = vmatmul.mubr.f32.gmra.mrb[0].mxu0 %v273
        %v2204 = vpop.f32.mrb[0].mxu0
        %v2205 = vadd.f32 %v1984, %v2204
        %v2206 = vpop.f32.mrb[0].mxu0
        %v2207 = vadd.f32 %v1986, %v2206
        %2208 = vmatprep.mubr.f32.mxu0 %v280
        %2209 = vmatmul.mubr.f32.gmra.mrb[0].mxu0 %v279
        %v2210 = vpop.f32.mrb[0].mxu0
        %v2211 = vadd.f32 %v1990, %v2210
        %v2212 = vpop.f32.mrb[0].mxu0
        %v2213 = vadd.f32 %v1992, %v2212
        %2214 = vmatprep.mubr.f32.mxu0 %v286
        %2215 = vmatmul.mubr.f32.gmra.mrb[0].mxu0 %v285
        %v2216 = vpop.f32.mrb[0].mxu0
        %v2217 = vadd.f32 %v1996, %v2216
        %v2218 = vpop.f32.mrb[0].mxu0
        %v2219 = vadd.f32 %v1998, %v2218
        %2220 = vmatprep.mubr.f32.mxu0 %v292
        %2221 = vmatmul.mubr.f32.gmra.mrb[0].mxu0 %v291
        %v2222 = vpop.f32.mrb[0].mxu0
        %v2223 = vadd.f32 %v2002, %v2222
        %v2224 = vpop.f32.mrb[0].mxu0
        %v2225 = vadd.f32 %v2004, %v2224
        %2226 = vmatprep.mubr.f32.mxu0 %v298
        %2227 = vmatmul.mubr.f32.gmra.mrb[0].mxu0 %v297
        %v2228 = vpop.f32.mrb[0].mxu0
        %v2229 = vadd.f32 %v2008, %v2228
        %v2230 = vpop.f32.mrb[0].mxu0
        %v2231 = vadd.f32 %v2010, %v2230
        %2232 = vmatprep.mubr.f32.mxu0 %v304
        %2233 = vmatmul.mubr.f32.gmra.mrb[0].mxu0 %v303
        %v2234 = vpop.f32.mrb[0].mxu0
        %v2235 = vadd.f32 %v2014, %v2234
        %v2236 = vpop.f32.mrb[0].mxu0
        %v2237 = vadd.f32 %v2016, %v2236
        %2238 = vmatprep.mubr.f32.mxu0 %v310
        %2239 = vmatmul.mubr.f32.gmra.mrb[0].mxu0 %v309
        %v2240 = vpop.f32.mrb[0].mxu0
        %v2241 = vadd.f32 %v2020, %v2240
        %v2242 = vpop.f32.mrb[0].mxu0
        %v2243 = vadd.f32 %v2022, %v2242
        %2244 = vmatprep.mubr.f32.mxu0 %v316
        %2245 = vmatmul.mubr.f32.gmra.mrb[0].mxu0 %v315
        %v2246 = vpop.f32.mrb[0].mxu0
        %v2247 = vadd.f32 %v2026, %v2246
        %v2248 = vpop.f32.mrb[0].mxu0
        %v2249 = vadd.f32 %v2028, %v2248
        %2250 = vmatprep.mubr.f32.mxu0 %v322
        %2251 = vmatmul.mubr.f32.gmra.mrb[0].mxu0 %v321
        %v2252 = vpop.f32.mrb[0].mxu0
        %v2253 = vadd.f32 %v2032, %v2252
        %v2254 = vpop.f32.mrb[0].mxu0
        %v2255 = vadd.f32 %v2034, %v2254
        %2256 = vmatprep.mubr.f32.mxu0 %v328
        %2257 = vmatmul.mubr.f32.gmra.mrb[0].mxu0 %v327
        %v2258 = vpop.f32.mrb[0].mxu0
        %v2259 = vadd.f32 %v2038, %v2258
        %v2260 = vpop.f32.mrb[0].mxu0
        %v2261 = vadd.f32 %v2040, %v2260
        %2262 = vmatprep.mubr.f32.mxu0 %v334
        %2263 = vmatmul.mubr.f32.gmra.mrb[0].mxu0 %v333
        %v2264 = vpop.f32.mrb[0].mxu0
        %v2265 = vadd.f32 %v2044, %v2264
        %v2266 = vpop.f32.mrb[0].mxu0
        %v2267 = vadd.f32 %v2046, %v2266
        %2268 = vmatprep.mubr.f32.mxu0 %v340
        %2269 = vmatmul.mubr.f32.gmra.mrb[0].mxu0 %v339
        %v2270 = vpop.f32.mrb[0].mxu0
        %v2271 = vadd.f32 %v2050, %v2270
        %v2272 = vpop.f32.mrb[0].mxu0
        %v2273 = vadd.f32 %v2052, %v2272
        %2274 = vmatprep.mubr.f32.mxu0 %v346
        %2275 = vmatmul.mubr.f32.gmra.mrb[0].mxu0 %v345
        %v2276 = vpop.f32.mrb[0].mxu0
        %v2277 = vadd.f32 %v2056, %v2276
        %v2278 = vpop.f32.mrb[0].mxu0
        %v2279 = vadd.f32 %v2058, %v2278
        %2280 = vmatprep.mubr.f32.mxu0 %v352
        %2281 = vmatmul.mubr.f32.gmra.mrb[0].mxu0 %v351
        %v2282 = vpop.f32.mrb[0].mxu0
        %v2283 = vadd.f32 %v2062, %v2282
        %v2284 = vpop.f32.mrb[0].mxu0
        %v2285 = vadd.f32 %v2064, %v2284
        %2286 = vmatprep.mubr.f32.mxu0 %v358
        %2287 = vmatmul.mubr.f32.gmra.mrb[0].mxu0 %v357
        %v2288 = vpop.f32.mrb[0].mxu0
        %v2289 = vadd.f32 %v2068, %v2288
        %v2290 = vpop.f32.mrb[0].mxu0
        %v2291 = vadd.f32 %v2070, %v2290
        %2292 = vmatprep.mubr.f32.mxu0 %v364
        %2293 = vmatmul.mubr.f32.gmra.mrb[0].mxu0 %v363
        %v2294 = vpop.f32.mrb[0].mxu0
        %v2295 = vadd.f32 %v2074, %v2294
        %v2296 = vpop.f32.mrb[0].mxu0
        %v2297 = vadd.f32 %v2076, %v2296
        %2298 = vmatprep.mubr.f32.mxu0 %v370
        %2299 = vmatmul.mubr.f32.gmra.mrb[0].mxu0 %v369
        %v2300 = vpop.f32.mrb[0].mxu0
        %v2301 = vadd.f32 %v2080, %v2300
        %v2302 = vpop.f32.mrb[0].mxu0
        %v2303 = vadd.f32 %v2082, %v2302
        %2304 = vmatprep.mubr.f32.mxu0 %v376
        %2305 = vmatmul.mubr.f32.gmra.mrb[0].mxu0 %v375
        %v2306 = vpop.f32.mrb[0].mxu0
        %v2307 = vadd.f32 %v2086, %v2306
        %v2308 = vpop.f32.mrb[0].mxu0
        %v2309 = vadd.f32 %v2088, %v2308
        %2310 = vmatprep.mubr.f32.mxu0 %v382
        %2311 = vmatmul.mubr.f32.gmra.mrb[0].mxu0 %v381
        %v2312 = vpop.f32.mrb[0].mxu0
        %v2313 = vadd.f32 %v2092, %v2312
        %v2314 = vpop.f32.mrb[0].mxu0
        %v2315 = vadd.f32 %v2094, %v2314
        %2316 = vmatprep.mubr.f32.mxu0 %v388
        %2317 = vmatmul.mubr.f32.gmra.mrb[0].mxu0 %v387
        %v2318 = vpop.f32.mrb[0].mxu0
        %v2319 = vadd.f32 %v2098, %v2318
        %v2320 = vpop.f32.mrb[0].mxu0
        %v2321 = vadd.f32 %v2100, %v2320
        %2322 = vmatprep.mubr.f32.mxu0 %v394
        %2323 = vmatmul.mubr.f32.gmra.mrb[0].mxu0 %v393
        %v2324 = vpop.f32.mrb[0].mxu0
        %v2325 = vadd.f32 %v2104, %v2324
        %v2326 = vpop.f32.mrb[0].mxu0
        %v2327 = vadd.f32 %v2106, %v2326
        %2328 = vmatprep.mubr.f32.mxu0 %v400
        %2329 = vmatmul.mubr.f32.gmra.mrb[0].mxu0 %v399
        %v2330 = vpop.f32.mrb[0].mxu0
        %v2331 = vadd.f32 %v2110, %v2330
        %v2332 = vpop.f32.mrb[0].mxu0
        %v2333 = vadd.f32 %v2112, %v2332
        %2334 = vmatprep.mubr.f32.mxu0 %v406
        %2335 = vmatmul.mubr.f32.gmra.mrb[0].mxu0 %v405
        %v2336 = vpop.f32.mrb[0].mxu0
        %v2337 = vadd.f32 %v2116, %v2336
        %v2338 = vpop.f32.mrb[0].mxu0
        %v2339 = vadd.f32 %v2118, %v2338
        %2340 = vmatprep.mubr.f32.mxu0 %v412
        %2341 = vmatmul.mubr.f32.gmra.mrb[0].mxu0 %v411
        %v2342 = vpop.f32.mrb[0].mxu0
        %v2343 = vadd.f32 %v2122, %v2342
        %v2344 = vpop.f32.mrb[0].mxu0
        %v2345 = vadd.f32 %v2124, %v2344
        %2346 = vmatprep.mubr.f32.mxu0 %v418
        %2347 = vmatmul.mubr.f32.gmra.mrb[0].mxu0 %v417
        %v2348 = vpop.f32.mrb[0].mxu0
        %v2349 = vadd.f32 %v2128, %v2348
        %v2350 = vpop.f32.mrb[0].mxu0
        %v2351 = vadd.f32 %v2130, %v2350
        %2352 = vmatprep.mubr.f32.mxu0 %v424
        %2353 = vmatmul.mubr.f32.gmra.mrb[0].mxu0 %v423
        %v2354 = vpop.f32.mrb[0].mxu0
        %v2355 = vadd.f32 %v2134, %v2354
        %v2356 = vpop.f32.mrb[0].mxu0
        %v2357 = vadd.f32 %v2136, %v2356
        %2358 = vdwg.mxu0
        %2359 = vmatprep.subr.mxu0 %v430
        %2360 = vmatpush1.msra.mxu0 %v429
        %2361 = vmatprep.subr.mxu0 %v436
        %2362 = vmatpush1.msra.mxu0 %v435
        %2363 = vmatprep.subr.mxu0 %v442
        %2364 = vmatpush1.msra.mxu0 %v441
        %2365 = vmatprep.subr.mxu0 %v448
        %2366 = vmatpush1.msra.mxu0 %v447
        %2367 = vmatprep.subr.mxu0 %v454
        %2368 = vmatpush1.msra.mxu0 %v453
        %2369 = vmatprep.subr.mxu0 %v460
        %2370 = vmatpush1.msra.mxu0 %v459
        %2371 = vmatprep.subr.mxu0 %v466
        %2372 = vmatpush1.msra.mxu0 %v465
        %2373 = vmatprep.subr.mxu0 %v472
        %2374 = vmatpush1.msra.mxu0 %v471
        %2375 = vmatprep.subr.mxu0 %v478
        %2376 = vmatpush1.msra.mxu0 %v477
        %2377 = vmatprep.subr.mxu0 %v484
        %2378 = vmatpush1.msra.mxu0 %v483
        %2379 = vmatprep.subr.mxu0 %v490
        %2380 = vmatpush1.msra.mxu0 %v489
        %2381 = vmatprep.subr.mxu0 %v496
        %2382 = vmatpush1.msra.mxu0 %v495
        %2383 = vmatprep.subr.mxu0 %v502
        %2384 = vmatpush1.msra.mxu0 %v501
        %2385 = vmatprep.subr.mxu0 %v508
        %2386 = vmatpush1.msra.mxu0 %v507
        %2387 = vmatprep.subr.mxu0 %v514
        %2388 = vmatpush1.msra.mxu0 %v513
        %2389 = vmatprep.subr.mxu0 %v520
        %2390 = vmatpush1.msra.mxu0 %v519
        %2391 = vmatprep.subr.mxu0 %v526
        %2392 = vmatpush1.msra.mxu0 %v525
        %2393 = vmatprep.subr.mxu0 %v532
        %2394 = vmatpush1.msra.mxu0 %v531
        %2395 = vmatprep.subr.mxu0 %v538
        %2396 = vmatpush1.msra.mxu0 %v537
        %2397 = vmatprep.subr.mxu0 %v544
        %2398 = vmatpush1.msra.mxu0 %v543
        %2399 = vmatprep.subr.mxu0 %v550
        %2400 = vmatpush1.msra.mxu0 %v549
        %2401 = vmatprep.subr.mxu0 %v556
        %2402 = vmatpush1.msra.mxu0 %v555
        %2403 = vmatprep.subr.mxu0 %v562
        %2404 = vmatpush1.msra.mxu0 %v561
        %2405 = vmatprep.subr.mxu0 %v568
        %2406 = vmatpush1.msra.mxu0 %v567
        %2407 = vmatprep.subr.mxu0 %v574
        %2408 = vmatpush1.msra.mxu0 %v573
        %2409 = vmatprep.subr.mxu0 %v580
        %2410 = vmatpush1.msra.mxu0 %v579
        %2411 = vmatprep.subr.mxu0 %v586
        %2412 = vmatpush1.msra.mxu0 %v585
        %2413 = vmatprep.subr.mxu0 %v592
        %2414 = vmatpush1.msra.mxu0 %v591
        %2415 = vmatprep.subr.mxu0 %v598
        %2416 = vmatpush1.msra.mxu0 %v597
        %2417 = vmatprep.subr.mxu0 %v604
        %2418 = vmatpush1.msra.mxu0 %v603
        %2419 = vmatprep.subr.mxu0 %v610
        %2420 = vmatpush1.msra.mxu0 %v609
        %2421 = vmatprep.subr.mxu0 %v616
        %2422 = vmatpush1.msra.mxu0 %v615
        %2423 = vmatprep.mubr.f32.mxu0 %v270
        %2424 = vmatmul.mubr.f32.gmra.mrb[0].mxu0 %v269
        %v2425 = vpop.f32.mrb[0].mxu0
        %v2426 = vadd.f32 %v1022, %v2425
        %v2427 = vpop.f32.mrb[0].mxu0
        %v2428 = vadd.f32 %v1026, %v2427
        %2429 = vmatprep.mubr.f32.mxu0 %v276
        %2430 = vmatmul.mubr.f32.gmra.mrb[0].mxu0 %v275
        %v2431 = vpop.f32.mrb[0].mxu0
        %v2432 = vadd.f32 %v1022, %v2431
        %v2433 = vpop.f32.mrb[0].mxu0
        %v2434 = vadd.f32 %v1026, %v2433
        %2435 = vmatprep.mubr.f32.mxu0 %v282
        %2436 = vmatmul.mubr.f32.gmra.mrb[0].mxu0 %v281
        %v2437 = vpop.f32.mrb[0].mxu0
        %v2438 = vadd.f32 %v1022, %v2437
        %v2439 = vpop.f32.mrb[0].mxu0
        %v2440 = vadd.f32 %v1026, %v2439
        %2441 = vmatprep.mubr.f32.mxu0 %v288
        %2442 = vmatmul.mubr.f32.gmra.mrb[0].mxu0 %v287
        %v2443 = vpop.f32.mrb[0].mxu0
        %v2444 = vadd.f32 %v1022, %v2443
        %v2445 = vpop.f32.mrb[0].mxu0
        %v2446 = vadd.f32 %v1026, %v2445
        %2447 = vmatprep.mubr.f32.mxu0 %v294
        %2448 = vmatmul.mubr.f32.gmra.mrb[0].mxu0 %v293
        %v2449 = vpop.f32.mrb[0].mxu0
        %v2450 = vadd.f32 %v1022, %v2449
        %v2451 = vpop.f32.mrb[0].mxu0
        %v2452 = vadd.f32 %v1026, %v2451
        %2453 = vmatprep.mubr.f32.mxu0 %v300
        %2454 = vmatmul.mubr.f32.gmra.mrb[0].mxu0 %v299
        %v2455 = vpop.f32.mrb[0].mxu0
        %v2456 = vadd.f32 %v1022, %v2455
        %v2457 = vpop.f32.mrb[0].mxu0
        %v2458 = vadd.f32 %v1026, %v2457
        %2459 = vmatprep.mubr.f32.mxu0 %v306
        %2460 = vmatmul.mubr.f32.gmra.mrb[0].mxu0 %v305
        %v2461 = vpop.f32.mrb[0].mxu0
        %v2462 = vadd.f32 %v1022, %v2461
        %v2463 = vpop.f32.mrb[0].mxu0
        %v2464 = vadd.f32 %v1026, %v2463
        %2465 = vmatprep.mubr.f32.mxu0 %v312
        %2466 = vmatmul.mubr.f32.gmra.mrb[0].mxu0 %v311
        %v2467 = vpop.f32.mrb[0].mxu0
        %v2468 = vadd.f32 %v1022, %v2467
        %v2469 = vpop.f32.mrb[0].mxu0
        %v2470 = vadd.f32 %v1026, %v2469
        %2471 = vmatprep.mubr.f32.mxu0 %v318
        %2472 = vmatmul.mubr.f32.gmra.mrb[0].mxu0 %v317
        %v2473 = vpop.f32.mrb[0].mxu0
        %v2474 = vadd.f32 %v1022, %v2473
        %v2475 = vpop.f32.mrb[0].mxu0
        %v2476 = vadd.f32 %v1026, %v2475
        %2477 = vmatprep.mubr.f32.mxu0 %v324
        %2478 = vmatmul.mubr.f32.gmra.mrb[0].mxu0 %v323
        %v2479 = vpop.f32.mrb[0].mxu0
        %v2480 = vadd.f32 %v1022, %v2479
        %v2481 = vpop.f32.mrb[0].mxu0
        %v2482 = vadd.f32 %v1026, %v2481
        %2483 = vmatprep.mubr.f32.mxu0 %v330
        %2484 = vmatmul.mubr.f32.gmra.mrb[0].mxu0 %v329
        %v2485 = vpop.f32.mrb[0].mxu0
        %v2486 = vadd.f32 %v1022, %v2485
        %v2487 = vpop.f32.mrb[0].mxu0
        %v2488 = vadd.f32 %v1026, %v2487
        %2489 = vmatprep.mubr.f32.mxu0 %v336
        %2490 = vmatmul.mubr.f32.gmra.mrb[0].mxu0 %v335
        %v2491 = vpop.f32.mrb[0].mxu0
        %v2492 = vadd.f32 %v1022, %v2491
        %v2493 = vpop.f32.mrb[0].mxu0
        %v2494 = vadd.f32 %v1026, %v2493
        %2495 = vmatprep.mubr.f32.mxu0 %v342
        %2496 = vmatmul.mubr.f32.gmra.mrb[0].mxu0 %v341
        %v2497 = vpop.f32.mrb[0].mxu0
        %v2498 = vadd.f32 %v1022, %v2497
        %v2499 = vpop.f32.mrb[0].mxu0
        %v2500 = vadd.f32 %v1026, %v2499
        %2501 = vmatprep.mubr.f32.mxu0 %v348
        %2502 = vmatmul.mubr.f32.gmra.mrb[0].mxu0 %v347
        %v2503 = vpop.f32.mrb[0].mxu0
        %v2504 = vadd.f32 %v1022, %v2503
        %v2505 = vpop.f32.mrb[0].mxu0
        %v2506 = vadd.f32 %v1026, %v2505
        %2507 = vmatprep.mubr.f32.mxu0 %v354
        %2508 = vmatmul.mubr.f32.gmra.mrb[0].mxu0 %v353
        %v2509 = vpop.f32.mrb[0].mxu0
        %v2510 = vadd.f32 %v1022, %v2509
        %v2511 = vpop.f32.mrb[0].mxu0
        %v2512 = vadd.f32 %v1026, %v2511
        %2513 = vmatprep.mubr.f32.mxu0 %v360
        %2514 = vmatmul.mubr.f32.gmra.mrb[0].mxu0 %v359
        %v2515 = vpop.f32.mrb[0].mxu0
        %v2516 = vadd.f32 %v1022, %v2515
        %v2517 = vpop.f32.mrb[0].mxu0
        %v2518 = vadd.f32 %v1026, %v2517
        %2519 = vmatprep.mubr.f32.mxu0 %v366
        %2520 = vmatmul.mubr.f32.gmra.mrb[0].mxu0 %v365
        %v2521 = vpop.f32.mrb[0].mxu0
        %v2522 = vadd.f32 %v1022, %v2521
        %v2523 = vpop.f32.mrb[0].mxu0
        %v2524 = vadd.f32 %v1026, %v2523
        %2525 = vmatprep.mubr.f32.mxu0 %v372
        %2526 = vmatmul.mubr.f32.gmra.mrb[0].mxu0 %v371
        %v2527 = vpop.f32.mrb[0].mxu0
        %v2528 = vadd.f32 %v1022, %v2527
        %v2529 = vpop.f32.mrb[0].mxu0
        %v2530 = vadd.f32 %v1026, %v2529
        %2531 = vmatprep.mubr.f32.mxu0 %v378
        %2532 = vmatmul.mubr.f32.gmra.mrb[0].mxu0 %v377
        %v2533 = vpop.f32.mrb[0].mxu0
        %v2534 = vadd.f32 %v1022, %v2533
        %v2535 = vpop.f32.mrb[0].mxu0
        %v2536 = vadd.f32 %v1026, %v2535
        %2537 = vmatprep.mubr.f32.mxu0 %v384
        %2538 = vmatmul.mubr.f32.gmra.mrb[0].mxu0 %v383
        %v2539 = vpop.f32.mrb[0].mxu0
        %v2540 = vadd.f32 %v1022, %v2539
        %v2541 = vpop.f32.mrb[0].mxu0
        %v2542 = vadd.f32 %v1026, %v2541
        %2543 = vmatprep.mubr.f32.mxu0 %v390
        %2544 = vmatmul.mubr.f32.gmra.mrb[0].mxu0 %v389
        %v2545 = vpop.f32.mrb[0].mxu0
        %v2546 = vadd.f32 %v1022, %v2545
        %v2547 = vpop.f32.mrb[0].mxu0
        %v2548 = vadd.f32 %v1026, %v2547
        %2549 = vmatprep.mubr.f32.mxu0 %v396
        %2550 = vmatmul.mubr.f32.gmra.mrb[0].mxu0 %v395
        %v2551 = vpop.f32.mrb[0].mxu0
        %v2552 = vadd.f32 %v1022, %v2551
        %v2553 = vpop.f32.mrb[0].mxu0
        %v2554 = vadd.f32 %v1026, %v2553
        %2555 = vmatprep.mubr.f32.mxu0 %v402
        %2556 = vmatmul.mubr.f32.gmra.mrb[0].mxu0 %v401
        %v2557 = vpop.f32.mrb[0].mxu0
        %v2558 = vadd.f32 %v1022, %v2557
        %v2559 = vpop.f32.mrb[0].mxu0
        %v2560 = vadd.f32 %v1026, %v2559
        %2561 = vmatprep.mubr.f32.mxu0 %v408
        %2562 = vmatmul.mubr.f32.gmra.mrb[0].mxu0 %v407
        %v2563 = vpop.f32.mrb[0].mxu0
        %v2564 = vadd.f32 %v1022, %v2563
        %v2565 = vpop.f32.mrb[0].mxu0
        %v2566 = vadd.f32 %v1026, %v2565
        %2567 = vmatprep.mubr.f32.mxu0 %v414
        %2568 = vmatmul.mubr.f32.gmra.mrb[0].mxu0 %v413
        %v2569 = vpop.f32.mrb[0].mxu0
        %v2570 = vadd.f32 %v1022, %v2569
        %v2571 = vpop.f32.mrb[0].mxu0
        %v2572 = vadd.f32 %v1026, %v2571
        %2573 = vmatprep.mubr.f32.mxu0 %v420
        %2574 = vmatmul.mubr.f32.gmra.mrb[0].mxu0 %v419
        %v2575 = vpop.f32.mrb[0].mxu0
        %v2576 = vadd.f32 %v1022, %v2575
        %v2577 = vpop.f32.mrb[0].mxu0
        %v2578 = vadd.f32 %v1026, %v2577
        %2579 = vdwg.mxu0
        %2580 = vmatprep.subr.mxu0 %v622
        %2581 = vmatpush1.msra.mxu0 %v621
        %2582 = vmatprep.subr.mxu0 %v628
        %2583 = vmatpush1.msra.mxu0 %v627
        %2584 = vmatprep.subr.mxu0 %v634
        %2585 = vmatpush1.msra.mxu0 %v633
        %2586 = vmatprep.subr.mxu0 %v640
        %2587 = vmatpush1.msra.mxu0 %v639
        %2588 = vmatprep.subr.mxu0 %v646
        %2589 = vmatpush1.msra.mxu0 %v645
        %2590 = vmatprep.subr.mxu0 %v652
        %2591 = vmatpush1.msra.mxu0 %v651
        %2592 = vmatprep.subr.mxu0 %v658
        %2593 = vmatpush1.msra.mxu0 %v657
        %2594 = vmatprep.subr.mxu0 %v664
        %2595 = vmatpush1.msra.mxu0 %v663
        %2596 = vmatprep.subr.mxu0 %v670
        %2597 = vmatpush1.msra.mxu0 %v669
        %2598 = vmatprep.subr.mxu0 %v676
        %2599 = vmatpush1.msra.mxu0 %v675
        %2600 = vmatprep.subr.mxu0 %v682
        %2601 = vmatpush1.msra.mxu0 %v681
        %2602 = vmatprep.subr.mxu0 %v688
        %2603 = vmatpush1.msra.mxu0 %v687
        %2604 = vmatprep.subr.mxu0 %v694
        %2605 = vmatpush1.msra.mxu0 %v693
        %2606 = vmatprep.subr.mxu0 %v700
        %2607 = vmatpush1.msra.mxu0 %v699
        %2608 = vmatprep.subr.mxu0 %v706
        %2609 = vmatpush1.msra.mxu0 %v705
        %2610 = vmatprep.subr.mxu0 %v712
        %2611 = vmatpush1.msra.mxu0 %v711
        %2612 = vmatprep.subr.mxu0 %v718
        %2613 = vmatpush1.msra.mxu0 %v717
        %2614 = vmatprep.subr.mxu0 %v724
        %2615 = vmatpush1.msra.mxu0 %v723
        %2616 = vmatprep.subr.mxu0 %v730
        %2617 = vmatpush1.msra.mxu0 %v729
        %2618 = vmatprep.subr.mxu0 %v736
        %2619 = vmatpush1.msra.mxu0 %v735
        %2620 = vmatprep.subr.mxu0 %v742
        %2621 = vmatpush1.msra.mxu0 %v741
        %2622 = vmatprep.subr.mxu0 %v748
        %2623 = vmatpush1.msra.mxu0 %v747
        %2624 = vmatprep.subr.mxu0 %v754
        %2625 = vmatpush1.msra.mxu0 %v753
        %2626 = vmatprep.subr.mxu0 %v760
        %2627 = vmatpush1.msra.mxu0 %v759
        %2628 = vmatprep.subr.mxu0 %v766
        %2629 = vmatpush1.msra.mxu0 %v765
        %2630 = vmatprep.subr.mxu0 %v772
        %2631 = vmatpush1.msra.mxu0 %v771
        %2632 = vmatprep.subr.mxu0 %v778
        %2633 = vmatpush1.msra.mxu0 %v777
        %2634 = vmatprep.subr.mxu0 %v784
        %2635 = vmatpush1.msra.mxu0 %v783
        %2636 = vmatprep.subr.mxu0 %v790
        %2637 = vmatpush1.msra.mxu0 %v789
        %2638 = vmatprep.subr.mxu0 %v796
        %2639 = vmatpush1.msra.mxu0 %v795
        %2640 = vmatprep.subr.mxu0 %v802
        %2641 = vmatpush1.msra.mxu0 %v801
        %2642 = vmatprep.subr.mxu0 %v808
        %2643 = vmatpush1.msra.mxu0 %v807
        %2644 = vmatprep.mubr.f32.mxu0 %v272
        %2645 = vmatmul.mubr.f32.gmra.mrb[0].mxu0 %v271
        %v2646 = vpop.f32.mrb[0].mxu0
        %v2647 = vadd.f32 %v2426, %v2646
        %v2648 = vpop.f32.mrb[0].mxu0
        %v2649 = vadd.f32 %v2428, %v2648
        %2650 = vmatprep.mubr.f32.mxu0 %v278
        %2651 = vmatmul.mubr.f32.gmra.mrb[0].mxu0 %v277
        %v2652 = vpop.f32.mrb[0].mxu0
        %v2653 = vadd.f32 %v2432, %v2652
        %v2654 = vpop.f32.mrb[0].mxu0
        %v2655 = vadd.f32 %v2434, %v2654
        %2656 = vmatprep.mubr.f32.mxu0 %v284
        %2657 = vmatmul.mubr.f32.gmra.mrb[0].mxu0 %v283
        %v2658 = vpop.f32.mrb[0].mxu0
        %v2659 = vadd.f32 %v2438, %v2658
        %v2660 = vpop.f32.mrb[0].mxu0
        %v2661 = vadd.f32 %v2440, %v2660
        %2662 = vmatprep.mubr.f32.mxu0 %v290
        %2663 = vmatmul.mubr.f32.gmra.mrb[0].mxu0 %v289
        %v2664 = vpop.f32.mrb[0].mxu0
        %v2665 = vadd.f32 %v2444, %v2664
        %v2666 = vpop.f32.mrb[0].mxu0
        %v2667 = vadd.f32 %v2446, %v2666
        %2668 = vmatprep.mubr.f32.mxu0 %v296
        %2669 = vmatmul.mubr.f32.gmra.mrb[0].mxu0 %v295
        %v2670 = vpop.f32.mrb[0].mxu0
        %v2671 = vadd.f32 %v2450, %v2670
        %v2672 = vpop.f32.mrb[0].mxu0
        %v2673 = vadd.f32 %v2452, %v2672
        %2674 = vmatprep.mubr.f32.mxu0 %v302
        %2675 = vmatmul.mubr.f32.gmra.mrb[0].mxu0 %v301
        %v2676 = vpop.f32.mrb[0].mxu0
        %v2677 = vadd.f32 %v2456, %v2676
        %v2678 = vpop.f32.mrb[0].mxu0
        %v2679 = vadd.f32 %v2458, %v2678
        %2680 = vmatprep.mubr.f32.mxu0 %v308
        %2681 = vmatmul.mubr.f32.gmra.mrb[0].mxu0 %v307
        %v2682 = vpop.f32.mrb[0].mxu0
        %v2683 = vadd.f32 %v2462, %v2682
        %v2684 = vpop.f32.mrb[0].mxu0
        %v2685 = vadd.f32 %v2464, %v2684
        %2686 = vmatprep.mubr.f32.mxu0 %v314
        %2687 = vmatmul.mubr.f32.gmra.mrb[0].mxu0 %v313
        %v2688 = vpop.f32.mrb[0].mxu0
        %v2689 = vadd.f32 %v2468, %v2688
        %v2690 = vpop.f32.mrb[0].mxu0
        %v2691 = vadd.f32 %v2470, %v2690
        %2692 = vmatprep.mubr.f32.mxu0 %v320
        %2693 = vmatmul.mubr.f32.gmra.mrb[0].mxu0 %v319
        %v2694 = vpop.f32.mrb[0].mxu0
        %v2695 = vadd.f32 %v2474, %v2694
        %v2696 = vpop.f32.mrb[0].mxu0
        %v2697 = vadd.f32 %v2476, %v2696
        %2698 = vmatprep.mubr.f32.mxu0 %v326
        %2699 = vmatmul.mubr.f32.gmra.mrb[0].mxu0 %v325
        %v2700 = vpop.f32.mrb[0].mxu0
        %v2701 = vadd.f32 %v2480, %v2700
        %v2702 = vpop.f32.mrb[0].mxu0
        %v2703 = vadd.f32 %v2482, %v2702
        %2704 = vmatprep.mubr.f32.mxu0 %v332
        %2705 = vmatmul.mubr.f32.gmra.mrb[0].mxu0 %v331
        %v2706 = vpop.f32.mrb[0].mxu0
        %v2707 = vadd.f32 %v2486, %v2706
        %v2708 = vpop.f32.mrb[0].mxu0
        %v2709 = vadd.f32 %v2488, %v2708
        %2710 = vmatprep.mubr.f32.mxu0 %v338
        %2711 = vmatmul.mubr.f32.gmra.mrb[0].mxu0 %v337
        %v2712 = vpop.f32.mrb[0].mxu0
        %v2713 = vadd.f32 %v2492, %v2712
        %v2714 = vpop.f32.mrb[0].mxu0
        %v2715 = vadd.f32 %v2494, %v2714
        %2716 = vmatprep.mubr.f32.mxu0 %v344
        %2717 = vmatmul.mubr.f32.gmra.mrb[0].mxu0 %v343
        %v2718 = vpop.f32.mrb[0].mxu0
        %v2719 = vadd.f32 %v2498, %v2718
        %v2720 = vpop.f32.mrb[0].mxu0
        %v2721 = vadd.f32 %v2500, %v2720
        %2722 = vmatprep.mubr.f32.mxu0 %v350
        %2723 = vmatmul.mubr.f32.gmra.mrb[0].mxu0 %v349
        %v2724 = vpop.f32.mrb[0].mxu0
        %v2725 = vadd.f32 %v2504, %v2724
        %v2726 = vpop.f32.mrb[0].mxu0
        %v2727 = vadd.f32 %v2506, %v2726
        %2728 = vmatprep.mubr.f32.mxu0 %v356
        %2729 = vmatmul.mubr.f32.gmra.mrb[0].mxu0 %v355
        %v2730 = vpop.f32.mrb[0].mxu0
        %v2731 = vadd.f32 %v2510, %v2730
        %v2732 = vpop.f32.mrb[0].mxu0
        %v2733 = vadd.f32 %v2512, %v2732
        %2734 = vmatprep.mubr.f32.mxu0 %v362
        %2735 = vmatmul.mubr.f32.gmra.mrb[0].mxu0 %v361
        %v2736 = vpop.f32.mrb[0].mxu0
        %v2737 = vadd.f32 %v2516, %v2736
        %v2738 = vpop.f32.mrb[0].mxu0
        %v2739 = vadd.f32 %v2518, %v2738
        %2740 = vmatprep.mubr.f32.mxu0 %v368
        %2741 = vmatmul.mubr.f32.gmra.mrb[0].mxu0 %v367
        %v2742 = vpop.f32.mrb[0].mxu0
        %v2743 = vadd.f32 %v2522, %v2742
        %v2744 = vpop.f32.mrb[0].mxu0
        %v2745 = vadd.f32 %v2524, %v2744
        %2746 = vmatprep.mubr.f32.mxu0 %v374
        %2747 = vmatmul.mubr.f32.gmra.mrb[0].mxu0 %v373
        %v2748 = vpop.f32.mrb[0].mxu0
        %v2749 = vadd.f32 %v2528, %v2748
        %v2750 = vpop.f32.mrb[0].mxu0
        %v2751 = vadd.f32 %v2530, %v2750
        %2752 = vmatprep.mubr.f32.mxu0 %v380
        %2753 = vmatmul.mubr.f32.gmra.mrb[0].mxu0 %v379
        %v2754 = vpop.f32.mrb[0].mxu0
        %v2755 = vadd.f32 %v2534, %v2754
        %v2756 = vpop.f32.mrb[0].mxu0
        %v2757 = vadd.f32 %v2536, %v2756
        %2758 = vmatprep.mubr.f32.mxu0 %v386
        %2759 = vmatmul.mubr.f32.gmra.mrb[0].mxu0 %v385
        %v2760 = vpop.f32.mrb[0].mxu0
        %v2761 = vadd.f32 %v2540, %v2760
        %v2762 = vpop.f32.mrb[0].mxu0
        %v2763 = vadd.f32 %v2542, %v2762
        %2764 = vmatprep.mubr.f32.mxu0 %v392
        %2765 = vmatmul.mubr.f32.gmra.mrb[0].mxu0 %v391
        %v2766 = vpop.f32.mrb[0].mxu0
        %v2767 = vadd.f32 %v2546, %v2766
        %v2768 = vpop.f32.mrb[0].mxu0
        %v2769 = vadd.f32 %v2548, %v2768
        %2770 = vmatprep.mubr.f32.mxu0 %v398
        %2771 = vmatmul.mubr.f32.gmra.mrb[0].mxu0 %v397
        %v2772 = vpop.f32.mrb[0].mxu0
        %v2773 = vadd.f32 %v2552, %v2772
        %v2774 = vpop.f32.mrb[0].mxu0
        %v2775 = vadd.f32 %v2554, %v2774
        %2776 = vmatprep.mubr.f32.mxu0 %v404
        %2777 = vmatmul.mubr.f32.gmra.mrb[0].mxu0 %v403
        %v2778 = vpop.f32.mrb[0].mxu0
        %v2779 = vadd.f32 %v2558, %v2778
        %v2780 = vpop.f32.mrb[0].mxu0
        %v2781 = vadd.f32 %v2560, %v2780
        %2782 = vmatprep.mubr.f32.mxu0 %v410
        %2783 = vmatmul.mubr.f32.gmra.mrb[0].mxu0 %v409
        %v2784 = vpop.f32.mrb[0].mxu0
        %v2785 = vadd.f32 %v2564, %v2784
        %v2786 = vpop.f32.mrb[0].mxu0
        %v2787 = vadd.f32 %v2566, %v2786
        %2788 = vmatprep.mubr.f32.mxu0 %v416
        %2789 = vmatmul.mubr.f32.gmra.mrb[0].mxu0 %v415
        %v2790 = vpop.f32.mrb[0].mxu0
        %v2791 = vadd.f32 %v2570, %v2790
        %v2792 = vpop.f32.mrb[0].mxu0
        %v2793 = vadd.f32 %v2572, %v2792
        %2794 = vmatprep.mubr.f32.mxu0 %v422
        %2795 = vmatmul.mubr.f32.gmra.mrb[0].mxu0 %v421
        %v2796 = vpop.f32.mrb[0].mxu0
        %v2797 = vadd.f32 %v2576, %v2796
        %v2798 = vpop.f32.mrb[0].mxu0
        %v2799 = vadd.f32 %v2578, %v2798
        %2800 = vdwg.mxu0
        %2801 = vmatprep.subr.mxu0 %v814
        %2802 = vmatpush1.msra.mxu0 %v813
        %2803 = vmatprep.subr.mxu0 %v820
        %2804 = vmatpush1.msra.mxu0 %v819
        %2805 = vmatprep.subr.mxu0 %v826
        %2806 = vmatpush1.msra.mxu0 %v825
        %2807 = vmatprep.subr.mxu0 %v832
        %2808 = vmatpush1.msra.mxu0 %v831
        %2809 = vmatprep.subr.mxu0 %v838
        %2810 = vmatpush1.msra.mxu0 %v837
        %2811 = vmatprep.subr.mxu0 %v844
        %2812 = vmatpush1.msra.mxu0 %v843
        %2813 = vmatprep.subr.mxu0 %v850
        %2814 = vmatpush1.msra.mxu0 %v849
        %2815 = vmatprep.subr.mxu0 %v856
        %2816 = vmatpush1.msra.mxu0 %v855
        %2817 = vmatprep.subr.mxu0 %v862
        %2818 = vmatpush1.msra.mxu0 %v861
        %2819 = vmatprep.subr.mxu0 %v868
        %2820 = vmatpush1.msra.mxu0 %v867
        %2821 = vmatprep.subr.mxu0 %v874
        %2822 = vmatpush1.msra.mxu0 %v873
        %2823 = vmatprep.subr.mxu0 %v880
        %2824 = vmatpush1.msra.mxu0 %v879
        %2825 = vmatprep.subr.mxu0 %v886
        %2826 = vmatpush1.msra.mxu0 %v885
        %2827 = vmatprep.subr.mxu0 %v892
        %2828 = vmatpush1.msra.mxu0 %v891
        %2829 = vmatprep.subr.mxu0 %v898
        %2830 = vmatpush1.msra.mxu0 %v897
        %2831 = vmatprep.subr.mxu0 %v904
        %2832 = vmatpush1.msra.mxu0 %v903
        %2833 = vmatprep.subr.mxu0 %v910
        %2834 = vmatpush1.msra.mxu0 %v909
        %2835 = vmatprep.subr.mxu0 %v916
        %2836 = vmatpush1.msra.mxu0 %v915
        %2837 = vmatprep.subr.mxu0 %v922
        %2838 = vmatpush1.msra.mxu0 %v921
        %2839 = vmatprep.subr.mxu0 %v928
        %2840 = vmatpush1.msra.mxu0 %v927
        %2841 = vmatprep.subr.mxu0 %v934
        %2842 = vmatpush1.msra.mxu0 %v933
        %2843 = vmatprep.subr.mxu0 %v940
        %2844 = vmatpush1.msra.mxu0 %v939
        %2845 = vmatprep.subr.mxu0 %v946
        %2846 = vmatpush1.msra.mxu0 %v945
        %2847 = vmatprep.subr.mxu0 %v952
        %2848 = vmatpush1.msra.mxu0 %v951
        %2849 = vmatprep.subr.mxu0 %v958
        %2850 = vmatpush1.msra.mxu0 %v957
        %2851 = vmatprep.subr.mxu0 %v964
        %2852 = vmatpush1.msra.mxu0 %v963
        %2853 = vmatprep.subr.mxu0 %v970
        %2854 = vmatpush1.msra.mxu0 %v969
        %2855 = vmatprep.subr.mxu0 %v976
        %2856 = vmatpush1.msra.mxu0 %v975
        %2857 = vmatprep.subr.mxu0 %v982
        %2858 = vmatpush1.msra.mxu0 %v981
        %2859 = vmatprep.subr.mxu0 %v988
        %2860 = vmatpush1.msra.mxu0 %v987
        %2861 = vmatprep.subr.mxu0 %v994
        %2862 = vmatpush1.msra.mxu0 %v993
        %2863 = vmatprep.subr.mxu0 %v1000
        %2864 = vmatpush1.msra.mxu0 %v999
        %2865 = vmatprep.mubr.f32.mxu0 %v274
        %2866 = vmatmul.mubr.f32.gmra.mrb[0].mxu0 %v273
        %v2867 = vpop.f32.mrb[0].mxu0
        %v2868 = vadd.f32 %v2647, %v2867
        %v2869 = vpop.f32.mrb[0].mxu0
        %v2870 = vadd.f32 %v2649, %v2869
        %2871 = vmatprep.mubr.f32.mxu0 %v280
        %2872 = vmatmul.mubr.f32.gmra.mrb[0].mxu0 %v279
        %v2873 = vpop.f32.mrb[0].mxu0
        %v2874 = vadd.f32 %v2653, %v2873
        %v2875 = vpop.f32.mrb[0].mxu0
        %v2876 = vadd.f32 %v2655, %v2875
        %2877 = vmatprep.mubr.f32.mxu0 %v286
        %2878 = vmatmul.mubr.f32.gmra.mrb[0].mxu0 %v285
        %v2879 = vpop.f32.mrb[0].mxu0
        %v2880 = vadd.f32 %v2659, %v2879
        %v2881 = vpop.f32.mrb[0].mxu0
        %v2882 = vadd.f32 %v2661, %v2881
        %2883 = vmatprep.mubr.f32.mxu0 %v292
        %2884 = vmatmul.mubr.f32.gmra.mrb[0].mxu0 %v291
        %v2885 = vpop.f32.mrb[0].mxu0
        %v2886 = vadd.f32 %v2665, %v2885
        %v2887 = vpop.f32.mrb[0].mxu0
        %v2888 = vadd.f32 %v2667, %v2887
        %2889 = vmatprep.mubr.f32.mxu0 %v298
        %2890 = vmatmul.mubr.f32.gmra.mrb[0].mxu0 %v297
        %v2891 = vpop.f32.mrb[0].mxu0
        %v2892 = vadd.f32 %v2671, %v2891
        %v2893 = vpop.f32.mrb[0].mxu0
        %v2894 = vadd.f32 %v2673, %v2893
        %2895 = vmatprep.mubr.f32.mxu0 %v304
        %2896 = vmatmul.mubr.f32.gmra.mrb[0].mxu0 %v303
        %v2897 = vpop.f32.mrb[0].mxu0
        %v2898 = vadd.f32 %v2677, %v2897
        %v2899 = vpop.f32.mrb[0].mxu0
        %v2900 = vadd.f32 %v2679, %v2899
        %2901 = vmatprep.mubr.f32.mxu0 %v310
        %2902 = vmatmul.mubr.f32.gmra.mrb[0].mxu0 %v309
        %v2903 = vpop.f32.mrb[0].mxu0
        %v2904 = vadd.f32 %v2683, %v2903
        %v2905 = vpop.f32.mrb[0].mxu0
        %v2906 = vadd.f32 %v2685, %v2905
        %2907 = vmatprep.mubr.f32.mxu0 %v316
        %2908 = vmatmul.mubr.f32.gmra.mrb[0].mxu0 %v315
        %v2909 = vpop.f32.mrb[0].mxu0
        %v2910 = vadd.f32 %v2689, %v2909
        %v2911 = vpop.f32.mrb[0].mxu0
        %v2912 = vadd.f32 %v2691, %v2911
        %2913 = vmatprep.mubr.f32.mxu0 %v322
        %2914 = vmatmul.mubr.f32.gmra.mrb[0].mxu0 %v321
        %v2915 = vpop.f32.mrb[0].mxu0
        %v2916 = vadd.f32 %v2695, %v2915
        %v2917 = vpop.f32.mrb[0].mxu0
        %v2918 = vadd.f32 %v2697, %v2917
        %2919 = vmatprep.mubr.f32.mxu0 %v328
        %2920 = vmatmul.mubr.f32.gmra.mrb[0].mxu0 %v327
        %v2921 = vpop.f32.mrb[0].mxu0
        %v2922 = vadd.f32 %v2701, %v2921
        %v2923 = vpop.f32.mrb[0].mxu0
        %v2924 = vadd.f32 %v2703, %v2923
        %2925 = vmatprep.mubr.f32.mxu0 %v334
        %2926 = vmatmul.mubr.f32.gmra.mrb[0].mxu0 %v333
        %v2927 = vpop.f32.mrb[0].mxu0
        %v2928 = vadd.f32 %v2707, %v2927
        %v2929 = vpop.f32.mrb[0].mxu0
        %v2930 = vadd.f32 %v2709, %v2929
        %2931 = vmatprep.mubr.f32.mxu0 %v340
        %2932 = vmatmul.mubr.f32.gmra.mrb[0].mxu0 %v339
        %v2933 = vpop.f32.mrb[0].mxu0
        %v2934 = vadd.f32 %v2713, %v2933
        %v2935 = vpop.f32.mrb[0].mxu0
        %v2936 = vadd.f32 %v2715, %v2935
        %2937 = vmatprep.mubr.f32.mxu0 %v346
        %2938 = vmatmul.mubr.f32.gmra.mrb[0].mxu0 %v345
        %v2939 = vpop.f32.mrb[0].mxu0
        %v2940 = vadd.f32 %v2719, %v2939
        %v2941 = vpop.f32.mrb[0].mxu0
        %v2942 = vadd.f32 %v2721, %v2941
        %2943 = vmatprep.mubr.f32.mxu0 %v352
        %2944 = vmatmul.mubr.f32.gmra.mrb[0].mxu0 %v351
        %v2945 = vpop.f32.mrb[0].mxu0
        %v2946 = vadd.f32 %v2725, %v2945
        %v2947 = vpop.f32.mrb[0].mxu0
        %v2948 = vadd.f32 %v2727, %v2947
        %2949 = vmatprep.mubr.f32.mxu0 %v358
        %2950 = vmatmul.mubr.f32.gmra.mrb[0].mxu0 %v357
        %v2951 = vpop.f32.mrb[0].mxu0
        %v2952 = vadd.f32 %v2731, %v2951
        %v2953 = vpop.f32.mrb[0].mxu0
        %v2954 = vadd.f32 %v2733, %v2953
        %2955 = vmatprep.mubr.f32.mxu0 %v364
        %2956 = vmatmul.mubr.f32.gmra.mrb[0].mxu0 %v363
        %v2957 = vpop.f32.mrb[0].mxu0
        %v2958 = vadd.f32 %v2737, %v2957
        %v2959 = vpop.f32.mrb[0].mxu0
        %v2960 = vadd.f32 %v2739, %v2959
        %2961 = vmatprep.mubr.f32.mxu0 %v370
        %2962 = vmatmul.mubr.f32.gmra.mrb[0].mxu0 %v369
        %v2963 = vpop.f32.mrb[0].mxu0
        %v2964 = vadd.f32 %v2743, %v2963
        %v2965 = vpop.f32.mrb[0].mxu0
        %v2966 = vadd.f32 %v2745, %v2965
        %2967 = vmatprep.mubr.f32.mxu0 %v376
        %2968 = vmatmul.mubr.f32.gmra.mrb[0].mxu0 %v375
        %v2969 = vpop.f32.mrb[0].mxu0
        %v2970 = vadd.f32 %v2749, %v2969
        %v2971 = vpop.f32.mrb[0].mxu0
        %v2972 = vadd.f32 %v2751, %v2971
        %2973 = vmatprep.mubr.f32.mxu0 %v382
        %2974 = vmatmul.mubr.f32.gmra.mrb[0].mxu0 %v381
        %v2975 = vpop.f32.mrb[0].mxu0
        %v2976 = vadd.f32 %v2755, %v2975
        %v2977 = vpop.f32.mrb[0].mxu0
        %v2978 = vadd.f32 %v2757, %v2977
        %2979 = vmatprep.mubr.f32.mxu0 %v388
        %2980 = vmatmul.mubr.f32.gmra.mrb[0].mxu0 %v387
        %v2981 = vpop.f32.mrb[0].mxu0
        %v2982 = vadd.f32 %v2761, %v2981
        %v2983 = vpop.f32.mrb[0].mxu0
        %v2984 = vadd.f32 %v2763, %v2983
        %2985 = vmatprep.mubr.f32.mxu0 %v394
        %2986 = vmatmul.mubr.f32.gmra.mrb[0].mxu0 %v393
        %v2987 = vpop.f32.mrb[0].mxu0
        %v2988 = vadd.f32 %v2767, %v2987
        %v2989 = vpop.f32.mrb[0].mxu0
        %v2990 = vadd.f32 %v2769, %v2989
        %2991 = vmatprep.mubr.f32.mxu0 %v400
        %2992 = vmatmul.mubr.f32.gmra.mrb[0].mxu0 %v399
        %v2993 = vpop.f32.mrb[0].mxu0
        %v2994 = vadd.f32 %v2773, %v2993
        %v2995 = vpop.f32.mrb[0].mxu0
        %v2996 = vadd.f32 %v2775, %v2995
        %2997 = vmatprep.mubr.f32.mxu0 %v406
        %2998 = vmatmul.mubr.f32.gmra.mrb[0].mxu0 %v405
        %v2999 = vpop.f32.mrb[0].mxu0
        %v3000 = vadd.f32 %v2779, %v2999
        %v3001 = vpop.f32.mrb[0].mxu0
        %v3002 = vadd.f32 %v2781, %v3001
        %3003 = vmatprep.mubr.f32.mxu0 %v412
        %3004 = vmatmul.mubr.f32.gmra.mrb[0].mxu0 %v411
        %v3005 = vpop.f32.mrb[0].mxu0
        %v3006 = vadd.f32 %v2785, %v3005
        %v3007 = vpop.f32.mrb[0].mxu0
        %v3008 = vadd.f32 %v2787, %v3007
        %3009 = vmatprep.mubr.f32.mxu0 %v418
        %3010 = vmatmul.mubr.f32.gmra.mrb[0].mxu0 %v417
        %v3011 = vpop.f32.mrb[0].mxu0
        %v3012 = vadd.f32 %v2791, %v3011
        %v3013 = vpop.f32.mrb[0].mxu0
        %v3014 = vadd.f32 %v2793, %v3013
        %3015 = vmatprep.mubr.f32.mxu0 %v424
        %3016 = vmatmul.mubr.f32.gmra.mrb[0].mxu0 %v423
        %v3017 = vpop.f32.mrb[0].mxu0
        %v3018 = vadd.f32 %v2797, %v3017
        %v3019 = vpop.f32.mrb[0].mxu0
        %v3020 = vadd.f32 %v2799, %v3019
        %3021 = vdwg.mxu0
        %3022 = vst [vmem:[%s253] sm:$0xff] %v1542
        %3023 = vst [vmem:[%s253 + $0x8] sm:$0xff] %v1544
        %3024 = vst [vmem:[%s253 + $0x10] sm:$0xff] %v2205
        %3025 = vst [vmem:[%s253 + $0x18] sm:$0xff] %v2207
        %3026 = vst [vmem:[%s253 + $0x20] sm:$0xff] %v2868
        %3027 = vst [vmem:[%s253 + $0x28] sm:$0xff] %v2870
        %3028 = vst [vmem:[%s253 + $0x30] sm:$0xff] %v1548
        %3029 = vst [vmem:[%s253 + $0x38] sm:$0xff] %v1550
        %3030 = vst [vmem:[%s253 + $0x40] sm:$0xff] %v2211
        %3031 = vst [vmem:[%s253 + $0x48] sm:$0xff] %v2213
        %3032 = vst [vmem:[%s253 + $0x50] sm:$0xff] %v2874
        %3033 = vst [vmem:[%s253 + $0x58] sm:$0xff] %v2876
        %3034 = vst [vmem:[%s253 + $0x60] sm:$0xff] %v1554
        %3035 = vst [vmem:[%s253 + $0x68] sm:$0xff] %v1556
        %3036 = vst [vmem:[%s253 + $0x70] sm:$0xff] %v2217
        %3037 = vst [vmem:[%s253 + $0x78] sm:$0xff] %v2219
        %3038 = vst [vmem:[%s253 + $0x80] sm:$0xff] %v2880
        %3039 = vst [vmem:[%s253 + $0x88] sm:$0xff] %v2882
        %3040 = vst [vmem:[%s253 + $0x90] sm:$0xff] %v1560
        %3041 = vst [vmem:[%s253 + $0x98] sm:$0xff] %v1562
        %3042 = vst [vmem:[%s253 + $0xa0] sm:$0xff] %v2223
        %3043 = vst [vmem:[%s253 + $0xa8] sm:$0xff] %v2225
        %3044 = vst [vmem:[%s253 + $0xb0] sm:$0xff] %v2886
        %3045 = vst [vmem:[%s253 + $0xb8] sm:$0xff] %v2888
        %3046 = vst [vmem:[%s253 + $0xc0] sm:$0xff] %v1566
        %3047 = vst [vmem:[%s253 + $0xc8] sm:$0xff] %v1568
        %3048 = vst [vmem:[%s253 + $0xd0] sm:$0xff] %v2229
        %3049 = vst [vmem:[%s253 + $0xd8] sm:$0xff] %v2231
        %3050 = vst [vmem:[%s253 + $0xe0] sm:$0xff] %v2892
        %3051 = vst [vmem:[%s253 + $0xe8] sm:$0xff] %v2894
        %3052 = vst [vmem:[%s253 + $0xf0] sm:$0xff] %v1572
        %3053 = vst [vmem:[%s253 + $0xf8] sm:$0xff] %v1574
        %3054 = vst [vmem:[%s253 + $0x100] sm:$0xff] %v2235
        %3055 = vst [vmem:[%s253 + $0x108] sm:$0xff] %v2237
        %3056 = vst [vmem:[%s253 + $0x110] sm:$0xff] %v2898
        %3057 = vst [vmem:[%s253 + $0x118] sm:$0xff] %v2900
        %3058 = vst [vmem:[%s253 + $0x120] sm:$0xff] %v1578
        %3059 = vst [vmem:[%s253 + $0x128] sm:$0xff] %v1580
        %3060 = vst [vmem:[%s253 + $0x130] sm:$0xff] %v2241
        %3061 = vst [vmem:[%s253 + $0x138] sm:$0xff] %v2243
        %3062 = vst [vmem:[%s253 + $0x140] sm:$0xff] %v2904
        %3063 = vst [vmem:[%s253 + $0x148] sm:$0xff] %v2906
        %3064 = vst [vmem:[%s253 + $0x150] sm:$0xff] %v1584
        %3065 = vst [vmem:[%s253 + $0x158] sm:$0xff] %v1586
        %3066 = vst [vmem:[%s253 + $0x160] sm:$0xff] %v2247
        %3067 = vst [vmem:[%s253 + $0x168] sm:$0xff] %v2249
        %3068 = vst [vmem:[%s253 + $0x170] sm:$0xff] %v2910
        %3069 = vst [vmem:[%s253 + $0x178] sm:$0xff] %v2912
        %3070 = vst [vmem:[%s253 + $0x180] sm:$0xff] %v1590
        %3071 = vst [vmem:[%s253 + $0x188] sm:$0xff] %v1592
        %3072 = vst [vmem:[%s253 + $0x190] sm:$0xff] %v2253
        %3073 = vst [vmem:[%s253 + $0x198] sm:$0xff] %v2255
        %3074 = vst [vmem:[%s253 + $0x1a0] sm:$0xff] %v2916
        %3075 = vst [vmem:[%s253 + $0x1a8] sm:$0xff] %v2918
        %3076 = vst [vmem:[%s253 + $0x1b0] sm:$0xff] %v1596
        %3077 = vst [vmem:[%s253 + $0x1b8] sm:$0xff] %v1598
        %3078 = vst [vmem:[%s253 + $0x1c0] sm:$0xff] %v2259
        %3079 = vst [vmem:[%s253 + $0x1c8] sm:$0xff] %v2261
        %3080 = vst [vmem:[%s253 + $0x1d0] sm:$0xff] %v2922
        %3081 = vst [vmem:[%s253 + $0x1d8] sm:$0xff] %v2924
        %3082 = vst [vmem:[%s253 + $0x1e0] sm:$0xff] %v1602
        %3083 = vst [vmem:[%s253 + $0x1e8] sm:$0xff] %v1604
        %3084 = vst [vmem:[%s253 + $0x1f0] sm:$0xff] %v2265
        %3085 = vst [vmem:[%s253 + $0x1f8] sm:$0xff] %v2267
        %3086 = vst [vmem:[%s253 + $0x200] sm:$0xff] %v2928
        %3087 = vst [vmem:[%s253 + $0x208] sm:$0xff] %v2930
        %3088 = vst [vmem:[%s253 + $0x210] sm:$0xff] %v1608
        %3089 = vst [vmem:[%s253 + $0x218] sm:$0xff] %v1610
        %3090 = vst [vmem:[%s253 + $0x220] sm:$0xff] %v2271
        %3091 = vst [vmem:[%s253 + $0x228] sm:$0xff] %v2273
        %3092 = vst [vmem:[%s253 + $0x230] sm:$0xff] %v2934
        %3093 = vst [vmem:[%s253 + $0x238] sm:$0xff] %v2936
        %3094 = vst [vmem:[%s253 + $0x240] sm:$0xff] %v1614
        %3095 = vst [vmem:[%s253 + $0x248] sm:$0xff] %v1616
        %3096 = vst [vmem:[%s253 + $0x250] sm:$0xff] %v2277
        %3097 = vst [vmem:[%s253 + $0x258] sm:$0xff] %v2279
        %3098 = vst [vmem:[%s253 + $0x260] sm:$0xff] %v2940
        %3099 = vst [vmem:[%s253 + $0x268] sm:$0xff] %v2942
        %3100 = vst [vmem:[%s253 + $0x270] sm:$0xff] %v1620
        %3101 = vst [vmem:[%s253 + $0x278] sm:$0xff] %v1622
        %3102 = vst [vmem:[%s253 + $0x280] sm:$0xff] %v2283
        %3103 = vst [vmem:[%s253 + $0x288] sm:$0xff] %v2285
        %3104 = vst [vmem:[%s253 + $0x290] sm:$0xff] %v2946
        %3105 = vst [vmem:[%s253 + $0x298] sm:$0xff] %v2948
        %3106 = vst [vmem:[%s253 + $0x2a0] sm:$0xff] %v1626
        %3107 = vst [vmem:[%s253 + $0x2a8] sm:$0xff] %v1628
        %3108 = vst [vmem:[%s253 + $0x2b0] sm:$0xff] %v2289
        %3109 = vst [vmem:[%s253 + $0x2b8] sm:$0xff] %v2291
        %3110 = vst [vmem:[%s253 + $0x2c0] sm:$0xff] %v2952
        %3111 = vst [vmem:[%s253 + $0x2c8] sm:$0xff] %v2954
        %3112 = vst [vmem:[%s253 + $0x2d0] sm:$0xff] %v1632
        %3113 = vst [vmem:[%s253 + $0x2d8] sm:$0xff] %v1634
        %3114 = vst [vmem:[%s253 + $0x2e0] sm:$0xff] %v2295
        %3115 = vst [vmem:[%s253 + $0x2e8] sm:$0xff] %v2297
        %3116 = vst [vmem:[%s253 + $0x2f0] sm:$0xff] %v2958
        %3117 = vst [vmem:[%s253 + $0x2f8] sm:$0xff] %v2960
        %3118 = vst [vmem:[%s253 + $0x300] sm:$0xff] %v1638
        %3119 = vst [vmem:[%s253 + $0x308] sm:$0xff] %v1640
        %3120 = vst [vmem:[%s253 + $0x310] sm:$0xff] %v2301
        %3121 = vst [vmem:[%s253 + $0x318] sm:$0xff] %v2303
        %3122 = vst [vmem:[%s253 + $0x320] sm:$0xff] %v2964
        %3123 = vst [vmem:[%s253 + $0x328] sm:$0xff] %v2966
        %3124 = vst [vmem:[%s253 + $0x330] sm:$0xff] %v1644
        %3125 = vst [vmem:[%s253 + $0x338] sm:$0xff] %v1646
        %3126 = vst [vmem:[%s253 + $0x340] sm:$0xff] %v2307
        %3127 = vst [vmem:[%s253 + $0x348] sm:$0xff] %v2309
        %3128 = vst [vmem:[%s253 + $0x350] sm:$0xff] %v2970
        %3129 = vst [vmem:[%s253 + $0x358] sm:$0xff] %v2972
        %3130 = vst [vmem:[%s253 + $0x360] sm:$0xff] %v1650
        %3131 = vst [vmem:[%s253 + $0x368] sm:$0xff] %v1652
        %3132 = vst [vmem:[%s253 + $0x370] sm:$0xff] %v2313
        %3133 = vst [vmem:[%s253 + $0x378] sm:$0xff] %v2315
        %3134 = vst [vmem:[%s253 + $0x380] sm:$0xff] %v2976
        %3135 = vst [vmem:[%s253 + $0x388] sm:$0xff] %v2978
        %3136 = vst [vmem:[%s253 + $0x390] sm:$0xff] %v1656
        %3137 = vst [vmem:[%s253 + $0x398] sm:$0xff] %v1658
        %3138 = vst [vmem:[%s253 + $0x3a0] sm:$0xff] %v2319
        %3139 = vst [vmem:[%s253 + $0x3a8] sm:$0xff] %v2321
        %3140 = vst [vmem:[%s253 + $0x3b0] sm:$0xff] %v2982
        %3141 = vst [vmem:[%s253 + $0x3b8] sm:$0xff] %v2984
        %3142 = vst [vmem:[%s253 + $0x3c0] sm:$0xff] %v1662
        %3143 = vst [vmem:[%s253 + $0x3c8] sm:$0xff] %v1664
        %3144 = vst [vmem:[%s253 + $0x3d0] sm:$0xff] %v2325
        %3145 = vst [vmem:[%s253 + $0x3d8] sm:$0xff] %v2327
        %3146 = vst [vmem:[%s253 + $0x3e0] sm:$0xff] %v2988
        %3147 = vst [vmem:[%s253 + $0x3e8] sm:$0xff] %v2990
        %3148 = vst [vmem:[%s253 + $0x3f0] sm:$0xff] %v1668
        %3149 = vst [vmem:[%s253 + $0x3f8] sm:$0xff] %v1670
        %3150 = vst [vmem:[%s253 + $0x400] sm:$0xff] %v2331
        %3151 = vst [vmem:[%s253 + $0x408] sm:$0xff] %v2333
        %3152 = vst [vmem:[%s253 + $0x410] sm:$0xff] %v2994
        %3153 = vst [vmem:[%s253 + $0x418] sm:$0xff] %v2996
        %3154 = vst [vmem:[%s253 + $0x420] sm:$0xff] %v1674
        %3155 = vst [vmem:[%s253 + $0x428] sm:$0xff] %v1676
        %3156 = vst [vmem:[%s253 + $0x430] sm:$0xff] %v2337
        %3157 = vst [vmem:[%s253 + $0x438] sm:$0xff] %v2339
        %3158 = vst [vmem:[%s253 + $0x440] sm:$0xff] %v3000
        %3159 = vst [vmem:[%s253 + $0x448] sm:$0xff] %v3002
        %3160 = vst [vmem:[%s253 + $0x450] sm:$0xff] %v1680
        %3161 = vst [vmem:[%s253 + $0x458] sm:$0xff] %v1682
        %3162 = vst [vmem:[%s253 + $0x460] sm:$0xff] %v2343
        %3163 = vst [vmem:[%s253 + $0x468] sm:$0xff] %v2345
        %3164 = vst [vmem:[%s253 + $0x470] sm:$0xff] %v3006
        %3165 = vst [vmem:[%s253 + $0x478] sm:$0xff] %v3008
        %3166 = vst [vmem:[%s253 + $0x480] sm:$0xff] %v1686
        %3167 = vst [vmem:[%s253 + $0x488] sm:$0xff] %v1688
        %3168 = vst [vmem:[%s253 + $0x490] sm:$0xff] %v2349
        %3169 = vst [vmem:[%s253 + $0x498] sm:$0xff] %v2351
        %3170 = vst [vmem:[%s253 + $0x4a0] sm:$0xff] %v3012
        %3171 = vst [vmem:[%s253 + $0x4a8] sm:$0xff] %v3014
        %3172 = vst [vmem:[%s253 + $0x4b0] sm:$0xff] %v1692
        %3173 = vst [vmem:[%s253 + $0x4b8] sm:$0xff] %v1694
        %3174 = vst [vmem:[%s253 + $0x4c0] sm:$0xff] %v2355
        %3175 = vst [vmem:[%s253 + $0x4c8] sm:$0xff] %v2357
        %3176 = vst [vmem:[%s253 + $0x4d0] sm:$0xff] %v3018
        %3177 = vst [vmem:[%s253 + $0x4d8] sm:$0xff] %v3020
        %s3178 = sand.u32 %s121, 1
        %s3179 = scalar_lea.sflag [#allocation4], %s3178
        %s3180 = sand.u32 %s121, 1
        %s3181 = smul.addr %s3180, 1248
        %s3182 = scalar_lea.vmem [#allocation8], %s3181
        // Predicated region
        $region45: #{tpu_custom_call.1} parent=31 // pred_check
          %p3183 = pneg %p131
        $region46: #{tpu_custom_call.1} parent=31 // pred_check_branch
          %3185 = sbr.rel (%p3183) target = $region48
        $region47: #{tpu_custom_call.1} parent=31 // pred_region
          %s3186 = smul.u32 26, %s25
          %s3187 = smul.u32 6, %s26
          %s3188 = ssub.s32 50, %s3186
          %p3189 = scmp.lt.s32.totalorder %s3188, 26
          %s3190 = scalar_select %p3189, %s3188, 26
          %s3191 = smul.u32 128, %s3190
          %s3192 = smul.u32 %s3191, 6
          %s3194 = ssub.s32 19968, %s3192
          %3195 = vsyncadd %s3179, %s3194
          %p3196 = scmp.ne.s32.totalorder 0, %s3192
          %s3197 = smul.addr %s3186, 6
          %s3198 = sadd.s32 %s3187, %s3197
          %s3199 = smul.addr %s3198, 128
          %s3200 = scalar_lea.hbm %s3, %s3199
          %s3201 = smul.u32 48, %s3190
          %s3202 = sshll.u32 %s3182, 4
          %s3203 = int_to_ptr.vmem [resolvable:$true] %s3202
          %s3204 = sshll.u32 %s3201, 4
          %3208 = dma.vmem_to_hbm [thread:$0]  (%p3196), %s3203, %s3204, %s3200, %s3179, 768, 768, 48
        $region48: #{tpu_custom_call.1} parent=31 // pred_fallthru
          _
      $region32: #{tpu_custom_call.1} parent=5 // pred_fallthru
        _
      %p3209 = scmp.le.s32.totalorder 2, %s16
      // Predicated region
      $region49: #{tpu_custom_call.1} parent=5 // pred_check
        %p3210 = pneg %p3209
      $region50: #{tpu_custom_call.1} parent=5 // pred_check_branch
        %3212 = sbr.rel (%p3210) target = $region52
      $region51: #{tpu_custom_call.1} parent=5 // pred_region
        %s3213 = ssub.s32 %s16, 2
        // Predicated region
        $region53: #{tpu_custom_call.1} parent=51 // pred_check
          %p3214 = pneg %p137
        $region54: #{tpu_custom_call.1} parent=51 // pred_check_branch
          %3216 = sbr.rel (%p3214) target = $region56
        $region55: #{tpu_custom_call.1} parent=51 // pred_region
          %s3217 = sand.u32 %s122, 1
          %s3218 = scalar_lea.sflag [#allocation4], %s3217
          %s3219 = sand.u32 %s122, 1
          %s3220 = smul.addr %s3219, 1248
          %s3221 = scalar_lea.vmem [#allocation8], %s3220
          %3222 = dma.done %s3218, 19968
        $region56: #{tpu_custom_call.1} parent=51 // pred_fallthru
          _
      $region52: #{tpu_custom_call.1} parent=5 // pred_fallthru
        _
    $region6: #{tpu_custom_call.1} parent=1 // loop_footer
      %s20 = sadd.s32 1, %s16
    $region7: #{tpu_custom_call.1} parent=1 // loop_footer_branch
      %15 = sbr.rel target = $region3
    $region8: #{tpu_custom_call.1} parent=1 // loop_exit
      _
    %3223 = vsyncpa [#allocation3], 1
    %s3224 = scalar_lea.sflag [#allocation3], 1
    %3225 = vsyncpa %s3224, 1
    %3226 = vsyncpa [#allocation6], 1
    %3227 = vsyncpa [#allocation4], 1
    %s3228 = scalar_lea.sflag [#allocation4], 1
    %3229 = vsyncpa %s3228, 1

</llo_original>
